<compile_context>
chip_gen: v6e
topology: v6e:2x2x1
jax: 0.10.0
libtpu: 0.0.40
codegen_flags: <defaults>
</compile_context>

<pallas_src>
import functools

import jax
import jax.numpy as jnp
from jax.experimental import pallas as pl
from jax.experimental.pallas import tpu as pltpu

COMPUTE_DTYPE = jnp.bfloat16        # MXU operand dtype (accumulate in f32)
TARGET_TM = 2048                    # target flat-spatial rows per matmul block
NORM_CHUNK_TARGET = 4096
POINTWISE_CHUNK = 1024
VMEM_LIMIT_BYTES = 32 * 1024 * 1024
EPS = 1e-5


# ---------------------------------------------------------------------------
# Small helpers
# ---------------------------------------------------------------------------

def _round8(x):
    return -(-x // 8) * 8


def _channel_tile(c):
    if c % 256 == 0:
        return 256
    if c % 128 == 0:
        return 128
    return c


def _pick_chunk(s, target):
    if s <= target:
        return s
    c = target - (target % 8)
    while c >= 8:
        if s % c == 0:
            return c
        c -= 8
    return s


class _Plan:
    """Tiling plan for the flat (rows*Wp, C) conv layout."""

    def __init__(self, Ho, Wo, win_w, kh, kw):
        self.Ho, self.Wo = Ho, Wo
        self.Wp = max(_round8(win_w), 8)                 # 8-aligned row stride
        self.th = max(1, min(Ho, TARGET_TM // self.Wp))
        self.n_hb = -(-Ho // self.th)
        self.th = -(-Ho // self.n_hb)
        self.wrows = self.th + kh - 1 + (1 if kw > 1 else 0)
        self.TM = self.th * self.Wp
        self.TA = self.wrows * self.Wp
        self.need_h = (self.n_hb - 1) * self.th + self.wrows


def _block_inputs(planes, plan):
    """Stack same-shaped (N,Hin,Win,C) planes into (N, n_hb, G*TA, C) bf16."""
    xg = jnp.stack([p.astype(COMPUTE_DTYPE) for p in planes], axis=1)
    N, G, Hin, Win, C = xg.shape
    pad_h = max(plan.need_h - Hin, 0)
    pad_w = max(plan.Wp - Win, 0)
    if pad_h or pad_w:
        xg = jnp.pad(xg, ((0, 0), (0, 0), (0, pad_h), (0, pad_w), (0, 0)))
    blocks = [xg[:, :, i * plan.th:i * plan.th + plan.wrows]
              for i in range(plan.n_hb)]
    xb = jnp.stack(blocks, axis=1)                        # (N,n_hb,G,wrows,Wp,C)
    return xb.reshape(N, plan.n_hb, G * plan.TA, C)


def _stats_mask(plan):
    """(n_hb, TM, 1) f32 mask of valid (non-junk) output positions."""
    row_ok = (jnp.arange(plan.n_hb * plan.th) < plan.Ho)
    row_ok = row_ok.reshape(plan.n_hb, plan.th, 1)
    col_ok = (jnp.arange(plan.Wp) < plan.Wo).reshape(1, 1, plan.Wp)
    m = jnp.logical_and(row_ok, col_ok).astype(jnp.float32)
    return m.reshape(plan.n_hb, plan.TM, 1)


def _unblock(ob, plan):
    """(N, n_hb, TM, C) blocked conv output -> (N, Ho, Wo, C)."""
    N = ob.shape[0]
    C = ob.shape[-1]
    y = ob.reshape(N, plan.n_hb * plan.th, plan.Wp, C)
    return y[:, :plan.Ho, :plan.Wo, :]


def _interleave_phases(ob, plan):
    """(N, n_hb, 4*TM, C) with phases [ee,eo,oe,oo] -> (N, 2Ho, 2Wo, C)."""
    N = ob.shape[0]
    C = ob.shape[-1]
    y = ob.reshape(N, plan.n_hb, 2, 2, plan.th, plan.Wp, C)
    y = jnp.transpose(y, (0, 1, 4, 2, 5, 3, 6))           # (N,hb,i,a,Wp,b,C)
    y = y.reshape(N, plan.n_hb * plan.th * 2, plan.Wp * 2, C)
    return y[:, :2 * plan.Ho, :2 * plan.Wo, :]


def _finalize_stats(s, q, count):
    s = jnp.sum(s, axis=1)                                # (N,1,C)
    q = jnp.sum(q, axis=1)
    mean = s / count
    var = jnp.maximum(q / count - mean * mean, 0.0)       # biased, like nn.InstanceNorm2d
    rstd = jax.lax.rsqrt(var + EPS)
    return mean, rstd


# ---------------------------------------------------------------------------
# Generalized direct spatial convolution kernel
#   - multiple input groups (polyphase / concat halves) share one accumulator
#   - multiple output phases (ConvTranspose sub-pixel outputs)
#   - f32 accumulation over the Cin grid axis, optional bias / PReLU / stats
# ---------------------------------------------------------------------------

def _spatial_conv_kernel(*refs, phase_taps, tm, has_bias, has_alpha, has_stats):
    it = iter(refs)
    x_ref = next(it)
    w_ref = next(it)
    b_ref = next(it) if has_bias else None
    alpha_ref = next(it) if has_alpha else None
    mask_ref = next(it) if has_stats else None
    o_ref = next(it)
    sum_ref = next(it) if has_stats else None
    ssq_ref = next(it) if has_stats else None
    acc_ref = next(it)

    ci = pl.program_id(3)
    n_ci = pl.num_programs(3)
    n_phases = len(phase_taps)

    @pl.when(ci == 0)
    def _():
        acc_ref[...] = jnp.zeros_like(acc_ref)

    for p, taps in enumerate(phase_taps):
        part = None
        for off, widx in taps:                      # static offsets -> ref views
            a = x_ref[0, 0, off:off + tm, :]
            d = jnp.dot(a, w_ref[widx], preferred_element_type=jnp.float32)
            part = d if part is None else part + d
        acc_ref[p * tm:(p + 1) * tm, :] += part

    @pl.when(ci == n_ci - 1)
    def _():
        s_tot = None
        q_tot = None
        for p in range(n_phases):
            r = acc_ref[p * tm:(p + 1) * tm, :]
            if has_stats:
                msk = mask_ref[0]                   # (tm, 1) f32 valid-position mask
                rm = r * msk
                s_p = jnp.sum(rm, axis=0, keepdims=True)
                q_p = jnp.sum(rm * r, axis=0, keepdims=True)
                s_tot = s_p if s_tot is None else s_tot + s_p
                q_tot = q_p if q_tot is None else q_tot + q_p
            if has_bias:
                r = r + b_ref[...]
            if has_alpha:
                al = alpha_ref[0]
                r = jnp.where(r >= 0, r, al * r)
            o_ref[0, 0, p * tm:(p + 1) * tm, :] = r.astype(o_ref.dtype)
        if has_stats:
            sum_ref[0, 0] = s_tot
            ssq_ref[0, 0] = q_tot


def _spatial_conv(xb, w, plan, phase_taps, *, bias=None, alpha=None,
                  stats=False, out_dtype=COMPUTE_DTYPE):
    N, n_hb, GTA, Cin = xb.shape
    T, _, Cout = w.shape
    n_phases = len(phase_taps)
    tci = _channel_tile(Cin)
    tco = _channel_tile(Cout)
    TM = plan.TM
    PTM = n_phases * TM
    has_bias = bias is not None
    has_alpha = alpha is not None

    kernel = functools.partial(
        _spatial_conv_kernel, phase_taps=phase_taps, tm=TM,
        has_bias=has_bias, has_alpha=has_alpha, has_stats=stats)

    in_specs = [
        pl.BlockSpec((1, 1, GTA, tci), lambda n, m, co, ci: (n, m, 0, ci)),
        pl.BlockSpec((T, tci, tco), lambda n, m, co, ci: (0, ci, co)),
    ]
    args = [xb, w]
    if has_bias:
        in_specs.append(pl.BlockSpec((1, tco), lambda n, m, co, ci: (0, co)))
        args.append(jnp.asarray(bias, jnp.float32).reshape(1, Cout))
    if has_alpha:
        in_specs.append(pl.BlockSpec(memory_space=pltpu.SMEM))
        args.append(jnp.asarray(alpha, jnp.float32).reshape(1))
    if stats:
        in_specs.append(pl.BlockSpec((1, TM, 1), lambda n, m, co, ci: (m, 0, 0)))
        args.append(_stats_mask(plan))

    out_shapes = [jax.ShapeDtypeStruct((N, n_hb, PTM, Cout), out_dtype)]
    out_specs = [pl.BlockSpec((1, 1, PTM, tco), lambda n, m, co, ci: (n, m, 0, co))]
    if stats:
        out_shapes += [jax.ShapeDtypeStruct((N, n_hb, 1, Cout), jnp.float32)] * 2
        out_specs += [pl.BlockSpec((1, 1, 1, tco),
                                   lambda n, m, co, ci: (n, m, 0, co))] * 2

    res = pl.pallas_call(
        kernel,
        out_shape=tuple(out_shapes) if stats else out_shapes[0],
        grid=(N, n_hb, Cout // tco, Cin // tci),
        in_specs=in_specs,
        out_specs=tuple(out_specs) if stats else out_specs[0],
        scratch_shapes=[pltpu.VMEM((PTM, tco), jnp.float32)],
        compiler_params=pltpu.CompilerParams(
            dimension_semantics=("parallel", "parallel", "parallel", "arbitrary"),
            vmem_limit_bytes=VMEM_LIMIT_BYTES),
    )(*args)
    if stats:
        o, s, q = res
        return o, (s, q)
    return res, None


# --- conv wrappers (all take pre-prepared bf16 weights) ---------------------

def conv3x3_same(x, w9, *, bias=None, alpha=None, stats=False):
    N, H, W, _ = x.shape
    xp = jnp.pad(x, ((0, 0), (1, 1), (1, 1), (0, 0)))
    plan = _Plan(H, W, W + 2, 3, 3)
    xb = _block_inputs([xp], plan)
    taps = tuple((di * plan.Wp + dj, di * 3 + dj)
                 for di in range(3) for dj in range(3))
    o, st = _spatial_conv(xb, w9, plan, (taps,), bias=bias, alpha=alpha,
                          stats=stats)
    return o, st, plan


def conv3x3_stride2(x, w9s, bias):
    """Conv2d(k=3, s=2, p=1) via 4 polyphase input groups in ONE pallas_call."""
    N, H, W, _ = x.shape
    Ho, Wo = H // 2, W // 2
    xp = jnp.pad(x, ((0, 0), (1, 1), (1, 1), (0, 0)))
    planes = [xp[:, 0::2, 0::2], xp[:, 0::2, 1::2],
              xp[:, 1::2, 0::2], xp[:, 1::2, 1::2]]
    plan = _Plan(Ho, Wo, Wo + 1, 2, 2)
    xb = _block_inputs(planes, plan)
    Wp, TA = plan.Wp, plan.TA
    taps = ((0 * TA + 0, 0), (0 * TA + 1, 1), (0 * TA + Wp, 2), (0 * TA + Wp + 1, 3),
            (1 * TA + 0, 4), (1 * TA + Wp, 5),
            (2 * TA + 0, 6), (2 * TA + 1, 7),
            (3 * TA + 0, 8))
    o, st = _spatial_conv(xb, w9s, plan, (taps,), bias=bias)
    return o, st, plan


def conv_transpose_s2(x, w9t, *, stats=False):
    """ConvTranspose2d(k=3, s=2, p=1, output_padding=1) as 4 output phases in
    ONE pallas_call (sub-pixel decomposition, no zero multiplies)."""
    N, H, W, _ = x.shape
    xp = jnp.pad(x, ((0, 0), (0, 1), (0, 1), (0, 0)))
    plan = _Plan(H, W, W + 1, 2, 2)
    xb = _block_inputs([xp], plan)
    Wp = plan.Wp
    phase_taps = (
        ((0, 0),),                                  # even row, even col: w[1,1]
        ((0, 1), (1, 2)),                           # even row, odd col
        ((0, 3), (Wp, 4)),                          # odd row, even col
        ((0, 5), (1, 6), (Wp, 7), (Wp + 1, 8)),     # odd row, odd col
    )
    o, st = _spatial_conv(xb, w9t, plan, phase_taps, stats=stats)
    return o, st, plan


def conv3x3_dual(x1, x2, w18, *, stats=False):
    """conv(cat([x1, x2], channel)) without materializing the concat: both
    inputs are groups feeding one accumulator in ONE pallas_call."""
    N, H, W, _ = x1.shape
    xp1 = jnp.pad(x1, ((0, 0), (1, 1), (1, 1), (0, 0)))
    xp2 = jnp.pad(x2, ((0, 0), (1, 1), (1, 1), (0, 0)))
    plan = _Plan(H, W, W + 2, 3, 3)
    xb = _block_inputs([xp1, xp2], plan)
    taps = tuple((g * plan.TA + di * plan.Wp + dj, g * 9 + di * 3 + dj)
                 for g in range(2) for di in range(3) for dj in range(3))
    o, st = _spatial_conv(xb, w18, plan, (taps,), stats=stats)
    return o, st, plan


# ---------------------------------------------------------------------------
# InstanceNorm pass-2 + PReLU (stats come fused from the producing conv)
# ---------------------------------------------------------------------------

def _norm_prelu_kernel(x_ref, mean_ref, rstd_ref, alpha_ref, o_ref):
    x = x_ref[0].astype(jnp.float32)
    xn = (x - mean_ref[0]) * rstd_ref[0]
    a = alpha_ref[0]
    o_ref[0] = jnp.where(xn >= 0, xn, a * xn).astype(o_ref.dtype)


def norm_prelu_nsc(x, mean, rstd, alpha):
    N, S, C = x.shape
    tc = _channel_tile(C)
    chunk = _pick_chunk(S, NORM_CHUNK_TARGET)
    return pl.pallas_call(
        _norm_prelu_kernel,
        out_shape=jax.ShapeDtypeStruct((N, S, C), COMPUTE_DTYPE),
        grid=(N, C // tc, S // chunk),
        in_specs=[
            pl.BlockSpec((1, chunk, tc), lambda n, c, k: (n, k, c)),
            pl.BlockSpec((1, 1, tc), lambda n, c, k: (n, 0, c)),
            pl.BlockSpec((1, 1, tc), lambda n, c, k: (n, 0, c)),
            pl.BlockSpec(memory_space=pltpu.SMEM),
        ],
        out_specs=pl.BlockSpec((1, chunk, tc), lambda n, c, k: (n, k, c)),
        compiler_params=pltpu.CompilerParams(
            dimension_semantics=("parallel", "parallel", "parallel"),
            vmem_limit_bytes=VMEM_LIMIT_BYTES),
    )(x, mean, rstd, jnp.asarray(alpha, jnp.float32).reshape(1))


def norm_prelu_blocked(ob, mean, rstd, alpha):
    N, n_hb, PTM, C = ob.shape
    y = norm_prelu_nsc(ob.reshape(N, n_hb * PTM, C), mean, rstd, alpha)
    return y.reshape(N, n_hb, PTM, C)


# ---------------------------------------------------------------------------
# Pointwise (1x1) conv, optionally fused with IN-pass2 + PReLU + residual add
# ---------------------------------------------------------------------------

def _pointwise_kernel(*refs, has_bias, has_addnorm):
    it = iter(refs)
    x_ref = next(it)
    w_ref = next(it)
    b_ref = next(it) if has_bias else None
    if has_addnorm:
        y_ref = next(it)
        mean_ref = next(it)
        rstd_ref = next(it)
        alpha_ref = next(it)
    o_ref = next(it)

    r = jnp.dot(x_ref[0], w_ref[...], preferred_element_type=jnp.float32)
    if has_bias:
        r = r + b_ref[...]
    if has_addnorm:
        y = y_ref[0].astype(jnp.float32)
        yn = (y - mean_ref[0]) * rstd_ref[0]
        a = alpha_ref[0]
        r = r + jnp.where(yn >= 0, yn, a * yn)
    o_ref[0] = r.astype(o_ref.dtype)


def pointwise_conv(x, w, *, bias=None, addnorm=None, out_dtype=COMPUTE_DTYPE):
    """x: (N,S,Cin), w: (Cin,Cout). addnorm = (y_raw, mean, rstd, alpha) adds
    PReLU(InstanceNorm(y_raw)) to the conv output (residual-tail fusion)."""
    N, S, Cin = x.shape
    Cout = w.shape[-1]
    tco = _channel_tile(Cout)
    chunk = _pick_chunk(S, POINTWISE_CHUNK)
    has_bias = bias is not None
    has_addnorm = addnorm is not None

    in_specs = [
        pl.BlockSpec((1, chunk, Cin), lambda n, k, co: (n, k, 0)),
        pl.BlockSpec((Cin, tco), lambda n, k, co: (0, co)),
    ]
    args = [x.astype(COMPUTE_DTYPE), w]
    if has_bias:
        in_specs.append(pl.BlockSpec((1, tco), lambda n, k, co: (0, co)))
        args.append(jnp.asarray(bias, jnp.float32).reshape(1, Cout))
    if has_addnorm:
        y_raw, mean, rstd, alpha = addnorm
        in_specs += [
            pl.BlockSpec((1, chunk, tco), lambda n, k, co: (n, k, co)),
            pl.BlockSpec((1, 1, tco), lambda n, k, co: (n, 0, co)),
            pl.BlockSpec((1, 1, tco), lambda n, k, co: (n, 0, co)),
            pl.BlockSpec(memory_space=pltpu.SMEM),
        ]
        args += [y_raw.astype(COMPUTE_DTYPE), mean, rstd,
                 jnp.asarray(alpha, jnp.float32).reshape(1)]

    kernel = functools.partial(_pointwise_kernel, has_bias=has_bias,
                               has_addnorm=has_addnorm)
    return pl.pallas_call(
        kernel,
        out_shape=jax.ShapeDtypeStruct((N, S, Cout), out_dtype),
        grid=(N, S // chunk, Cout // tco),
        in_specs=in_specs,
        out_specs=pl.BlockSpec((1, chunk, tco), lambda n, k, co: (n, k, co)),
        compiler_params=pltpu.CompilerParams(
            dimension_semantics=("parallel", "parallel", "parallel"),
            vmem_limit_bytes=VMEM_LIMIT_BYTES),
    )(*args)


# ---------------------------------------------------------------------------
# Parameter init (HWIO, deterministic) and one-time kernel-ready preparation
# ---------------------------------------------------------------------------

class KeyGen:
    def __init__(self, seed=0):
        self.key = jax.random.PRNGKey(seed)

    def __call__(self):
        self.key, sub = jax.random.split(self.key)
        return sub


def init_conv(kg, kh, kw, cin, cout):
    fan_in = kh * kw * cin
    w = jax.random.normal(kg(), (kh, kw, cin, cout), jnp.float32) * (1.0 / fan_in) ** 0.5
    b = jax.random.normal(kg(), (cout,), jnp.float32) * 0.01
    return {"w": w, "b": b}


def prelu_param():
    return jnp.array([0.25], jnp.float32)       # nn.PReLU() default shared alpha


def init_residual(kg, c):
    return {"conv1": init_conv(kg, 3, 3, c, c), "alpha1": prelu_param(),
            "conv2": init_conv(kg, 3, 3, c, c), "alpha2": prelu_param(),
            "conv1x1": init_conv(kg, 1, 1, c, c)}


def init_down(kg, cin, cout, batch_norm):
    return {"conv1": init_conv(kg, 3, 3, cin, cout),
            "res": init_residual(kg, cout),
            "conv3": init_conv(kg, 3, 3, cout, cout),
            "alpha": prelu_param(),
            "batch_norm": batch_norm}


def init_up(kg, cin, cout):
    c_half = cin // 2
    return {"convT": init_conv(kg, 3, 3, c_half, c_half),   # equivalent-conv weight
            "alpha_up": prelu_param(),
            "conv": init_conv(kg, 3, 3, cin, cout),
            "alpha_l": prelu_param(),
            "res": init_residual(kg, cout)}


def init_generator(kg, in_chans, out_chans, chans=256, num_pool_layers=4):
    ch = chans
    down = [init_down(kg, in_chans, ch, batch_norm=False)]
    for i in range(num_pool_layers - 1):
        if i < 3:
            down.append(init_down(kg, ch, ch * 2, batch_norm=True))
            ch *= 2
        else:
            down.append(init_down(kg, ch, ch, batch_norm=True))
    conv_mid = {"conv": init_conv(kg, 3, 3, ch, ch), "alpha": prelu_param()}
    up = []
    for i in range(num_pool_layers - 1):
        up.append(init_up(kg, ch * 2, ch // 2))
        ch //= 2
    up.append(init_up(kg, ch * 2, ch))
    conv2 = {"c1": init_conv(kg, 1, 1, ch, ch // 2),
             "c2": init_conv(kg, 1, 1, ch // 2, out_chans)}
    return {"down": down, "conv": conv_mid, "up": up, "conv2": conv2}


def _prep_w9(w):
    return w.reshape(9, w.shape[2], w.shape[3]).astype(COMPUTE_DTYPE)


def _prep_w9_stride2(w):
    order = [(0, 0), (0, 2), (2, 0), (2, 2), (0, 1), (2, 1), (1, 0), (1, 2), (1, 1)]
    return jnp.stack([w[i, j] for i, j in order], axis=0).astype(COMPUTE_DTYPE)


def _prep_w9_transpose(w):
    order = [(1, 1), (1, 0), (1, 2), (0, 1), (2, 1), (0, 0), (0, 2), (2, 0), (2, 2)]
    return jnp.stack([w[i, j] for i, j in order], axis=0).astype(COMPUTE_DTYPE)


def _prep_w18_dual(w, c_skip):
    cout = w.shape[3]
    wa = w[:, :, :c_skip, :].reshape(9, c_skip, cout)
    wb = w[:, :, c_skip:, :].reshape(9, w.shape[2] - c_skip, cout)
    return jnp.concatenate([wa, wb], axis=0).astype(COMPUTE_DTYPE)


def _prep_w1x1(w):
    return w[0, 0].astype(COMPUTE_DTYPE)


def prepare_residual(p):
    return {"w1": _prep_w9(p["conv1"]["w"]), "a1": p["alpha1"],
            "w2": _prep_w9(p["conv2"]["w"]), "a2": p["alpha2"],
            "w1x1": _prep_w1x1(p["conv1x1"]["w"]), "b1x1": p["conv1x1"]["b"]}


def prepare_generator(params):
    down = []
    for dp in params["down"]:
        d = {"w1": _prep_w9(dp["conv1"]["w"]), "a": dp["alpha"],
             "res": prepare_residual(dp["res"]),
             "w3": _prep_w9_stride2(dp["conv3"]["w"]), "b3": dp["conv3"]["b"]}
        if not dp["batch_norm"]:
            d["b1"] = dp["conv1"]["b"]          # presence of "b1" <=> no InstanceNorm
        down.append(d)
    up = []
    for upp in params["up"]:
        cin = upp["conv"]["w"].shape[2]
        up.append({"wT": _prep_w9_transpose(upp["convT"]["w"]),
                   "a_up": upp["alpha_up"],
                   "w_cat": _prep_w18_dual(upp["conv"]["w"], cin // 2),
                   "a_l": upp["alpha_l"],
                   "res": prepare_residual(upp["res"])})
    # Final two 1x1 convs (no nonlinearity between) fused algebraically.
    w1, b1 = params["conv2"]["c1"]["w"][0, 0], params["conv2"]["c1"]["b"]
    w2, b2 = params["conv2"]["c2"]["w"][0, 0], params["conv2"]["c2"]["b"]
    return {"down": down,
            "mid_w": _prep_w9(params["conv"]["conv"]["w"]),
            "mid_a": params["conv"]["alpha"],
            "up": up,
            "final_w": (w1 @ w2).astype(COMPUTE_DTYPE),
            "final_b": b1 @ w2 + b2}


# ---------------------------------------------------------------------------
# Forward passes
# ---------------------------------------------------------------------------

def residual_forward(p, x):
    N, H, W, C = x.shape
    y1b, (s1, q1), plan1 = conv3x3_same(x, p["w1"], stats=True)
    m1, r1 = _finalize_stats(s1, q1, H * W)
    y1b = norm_prelu_blocked(y1b, m1, r1, p["a1"])
    y1 = _unblock(y1b, plan1)
    y2b, (s2, q2), plan2 = conv3x3_same(y1, p["w2"], stats=True)
    m2, r2 = _finalize_stats(s2, q2, H * W)
    y2 = _unblock(y2b, plan2)                       # raw conv2 output
    # Fused: conv1x1(x) + bias + PReLU(InstanceNorm(conv2_out))
    out = pointwise_conv(x.reshape(N, H * W, C), p["w1x1"], bias=p["b1x1"],
                         addnorm=(y2.reshape(N, H * W, C), m2, r2, p["a2"]))
    return out.reshape(N, H, W, C)


def down_forward(p, x):
    N, H, W, _ = x.shape
    if "b1" in p:      # first block: no InstanceNorm -> bias + PReLU fused in conv
        hb, _, plan = conv3x3_same(x, p["w1"], bias=p["b1"], alpha=p["a"])
    else:
        hb, (s, q), plan = conv3x3_same(x, p["w1"], stats=True)
        mean, rstd = _finalize_stats(s, q, H * W)
        hb = norm_prelu_blocked(hb, mean, rstd, p["a"])
    h = _unblock(hb, plan)
    skip = residual_forward(p["res"], h)
    ob, _, plan2 = conv3x3_stride2(skip, p["w3"], p["b3"])
    return _unblock(ob, plan2), skip


def up_forward(p, x, skip):
    N, H, W, _ = x.shape
    ub, (su, qu), planu = conv_transpose_s2(x, p["wT"], stats=True)
    mu, ru = _finalize_stats(su, qu, 4 * H * W)
    ub = norm_prelu_blocked(ub, mu, ru, p["a_up"])
    u = _interleave_phases(ub, planu)               # (N, 2H, 2W, C)
    hb, (sh, qh), planh = conv3x3_dual(skip, u, p["w_cat"], stats=True)
    Hs, Ws = skip.shape[1], skip.shape[2]
    mh, rh = _finalize_stats(sh, qh, Hs * Ws)
    hb = norm_prelu_blocked(hb, mh, rh, p["a_l"])
    h = _unblock(hb, planh)
    return residual_forward(p["res"], h)


def generator_forward(params, x_nhwc):
    stack = []
    out = x_nhwc.astype(COMPUTE_DTYPE)
    for dp in params["down"]:
        out, skip = down_forward(dp, out)
        stack.append(skip)
    H, W = out.shape[1], out.shape[2]
    ob, (s, q), plan = conv3x3_same(out, params["mid_w"], stats=True)
    m, r = _finalize_stats(s, q, H * W)
    ob = norm_prelu_blocked(ob, m, r, params["mid_a"])
    out = _unblock(ob, plan)
    for up_p in params["up"]:
        out = up_forward(up_p, out, stack.pop())
    N, H, W, C = out.shape
    # TODO(synk): tiny out_chans keeps masked stores; lane-dense repack skipped.
    y = pointwise_conv(out.reshape(N, H * W, C), params["final_w"],
                       bias=params["final_b"], out_dtype=jnp.float32)
    return y.reshape(N, H, W, -1)


# ---------------------------------------------------------------------------
# Self-test of the conv building blocks against lax.conv_general_dilated
# ---------------------------------------------------------------------------

def _check(name, got, want, atol=0.03, rtol=0.03):
    got = jnp.asarray(got, jnp.float32)
    want = jnp.asarray(want, jnp.float32)
    ok = bool(jnp.all(jnp.abs(got - want) <= atol + rtol * jnp.abs(want)))
    if not ok:
        err = float(jnp.max(jnp.abs(got - want)))
        raise AssertionError(f"{name}: max abs err {err:.4f}")


def _ref_conv(x, w, stride=1, padding=((1, 1), (1, 1)), lhs_dilation=None):
    return jax.lax.conv_general_dilated(
        x, w, (stride, stride), padding, lhs_dilation=lhs_dilation,
        dimension_numbers=("NHWC", "HWIO", "NHWC"),
        precision=jax.lax.Precision.HIGHEST)


def _self_test():
    def bf(a):
        return a.astype(COMPUTE_DTYPE).astype(jnp.float32)

    k1, k2, k3, k4, k5, k6 = jax.random.split(jax.random.PRNGKey(42), 6)
    N, H, W, Ci, Co = 2, 16, 16, 8, 16
    x = jax.random.normal(k1, (N, H, W, Ci), jnp.float32).astype(COMPUTE_DTYPE)
    xf = x.astype(jnp.float32)
    wf = bf(jax.random.normal(k2, (3, 3, Ci, Co), jnp.float32) * 0.2)
    b = jax.random.normal(k3, (Co,), jnp.float32) * 0.1

    # 3x3 same conv + fused InstanceNorm stats
    ob, (s, q), plan = conv3x3_same(x, _prep_w9(wf), stats=True)
    ref = _ref_conv(xf, wf)
    _check("conv3x3_same", _unblock(ob, plan), ref)
    mean, rstd = _finalize_stats(s, q, H * W)
    _check("stats_mean", mean, jnp.mean(ref, axis=(1, 2))[:, None, :])
    _check("stats_rstd", rstd,
           jax.lax.rsqrt(jnp.var(ref, axis=(1, 2))[:, None, :] + EPS))

    # stride-2 conv (4 polyphase groups, single pallas_call)
    ob2, _, plan2 = conv3x3_stride2(x, _prep_w9_stride2(wf), b)
    _check("conv3x3_stride2", _unblock(ob2, plan2), _ref_conv(xf, wf, 2) + b)

    # ConvTranspose2d(k=3, s=2, p=1, output_padding=1) equivalent
    wt = bf(jax.random.normal(k4, (3, 3, Ci, Ci), jnp.float32) * 0.2)
    obt, _, plant = conv_transpose_s2(x, _prep_w9_transpose(wt))
    reft = _ref_conv(xf, wt, 1, ((1, 2), (1, 2)), lhs_dilation=(2, 2))
    _check("conv_transpose_s2", _interleave_phases(obt, plant), reft)

    # dual conv == conv on channel concat
    x2 = jax.random.normal(k5, (N, H, W, Ci), jnp.float32).astype(COMPUTE_DTYPE)
    wc = bf(jax.random.normal(k6, (3, 3, 2 * Ci, Co), jnp.float32) * 0.2)
    obd, _, pland = conv3x3_dual(x, x2, _prep_w18_dual(wc, Ci))
    refd = _ref_conv(jnp.concatenate([xf, x2.astype(jnp.float32)], -1), wc)
    _check("conv3x3_dual", _unblock(obd, pland), refd)


# ---------------------------------------------------------------------------
# Demo
# ---------------------------------------------------------------------------

if __name__ == "__main__":
    _self_test()

    # Small shapes: batch=2, in_chans=2, out_chans=2, 32x32 spatial, base width
    # 16 (the reference hard-codes chans=256; architecture is identical).
    B, in_chans, out_chans, H, W = 2, 2, 2, 32, 32
    kg = KeyGen(seed=0)
    raw_params = init_generator(kg, in_chans, out_chans, chans=16, num_pool_layers=4)
    params = prepare_generator(raw_params)   # weights pre-cast/reshaped once

    x_nchw = jax.random.normal(jax.random.PRNGKey(0), (B, in_chans, H, W), jnp.float32)
    x_nhwc = jnp.transpose(x_nchw, (0, 2, 3, 1))

    fwd = jax.jit(generator_forward)
    y_nhwc = fwd(params, x_nhwc)
    jax.block_until_ready(y_nhwc)

    y_nchw = jnp.transpose(y_nhwc, (0, 3, 1, 2))
    assert y_nchw.shape == (B, out_chans, H, W), y_nchw.shape
    assert bool(jnp.all(jnp.isfinite(y_nchw)))
    print("KERNEL_OK")
</pallas_src>

<mosaic_0001>
module attributes {stable_mosaic.version = 11 : i64} {
  func.func @_spatial_conv_kernel(%arg0: i32, %arg1: i32, %arg2: i32, %arg3: i32, %arg4: memref<1x1x456x8xbf16, #tpu.memory_space<vmem>>, %arg5: memref<9x8x16xbf16, #tpu.memory_space<vmem>>, %arg6: memref<1x384x1xf32, #tpu.memory_space<vmem>>, %arg7: memref<1x1x384x16xbf16, #tpu.memory_space<vmem>>, %arg8: memref<1x1x1x16xf32, #tpu.memory_space<vmem>>, %arg9: memref<1x1x1x16xf32, #tpu.memory_space<vmem>>, %arg10: memref<384x16xf32, #tpu.memory_space<vmem>>) attributes {dimension_semantics = [#tpu.dimension_semantics<parallel>, #tpu.dimension_semantics<parallel>, #tpu.dimension_semantics<parallel>, #tpu.dimension_semantics<arbitrary>], iteration_bounds = array<i64: 2, 1, 1, 1>, scalar_prefetch = 0 : i64, scratch_operands = 1 : i64, tpu.core_type = #tpu.core_type<tc>, window_params = [{transform_indices = @transform_0, window_bounds = array<i64: 1, 1, 456, 8>}, {transform_indices = @transform_1, window_bounds = array<i64: 9, 8, 16>}, {transform_indices = @transform_2, window_bounds = array<i64: 1, 384, 1>}, {transform_indices = @transform_3, window_bounds = array<i64: 1, 1, 384, 16>}, {transform_indices = @transform_4, window_bounds = array<i64: 1, 1, 1, 16>}, {transform_indices = @transform_5, window_bounds = array<i64: 1, 1, 1, 16>}]} {
    %c0_i32 = arith.constant 0 : i32
    %0 = arith.cmpi eq, %arg3, %c0_i32 : i32
    %1 = arith.extui %0 : i1 to i32
    %c0_i32_0 = arith.constant 0 : i32
    %2 = arith.cmpi ne, %1, %c0_i32_0 : i32
    scf.if %2 {
      %cst_63 = arith.constant 0.000000e+00 : f32
      %62 = vector.broadcast %cst_63 : f32 to vector<384x16xf32>
      %c0_64 = arith.constant 0 : index
      %c0_65 = arith.constant 0 : index
      %63 = vector.load %arg10[%c0_64, %c0_65] : memref<384x16xf32, #tpu.memory_space<vmem>>, vector<384x16xf32>
      tpu.vector_store %arg10[%c0_64, %c0_65], %62 {strides = array<i32>} : memref<384x16xf32, #tpu.memory_space<vmem>>, vector<384x16xf32>,
    } else {
    }
    %c0 = arith.constant 0 : index
    %c0_1 = arith.constant 0 : index
    %c0_2 = arith.constant 0 : index
    %c0_3 = arith.constant 0 : index
    %3 = vector.load %arg4[%c0, %c0_1, %c0_2, %c0_3] : memref<1x1x456x8xbf16, #tpu.memory_space<vmem>>, vector<1x1x384x8xbf16>
    %4 = vector.shape_cast %3 : vector<1x1x384x8xbf16> to vector<384x8xbf16>
    %c0_4 = arith.constant 0 : index
    %c0_5 = arith.constant 0 : index
    %c0_6 = arith.constant 0 : index
    %5 = vector.load %arg5[%c0_4, %c0_5, %c0_6] : memref<9x8x16xbf16, #tpu.memory_space<vmem>>, vector<1x8x16xbf16>
    %6 = vector.shape_cast %5 : vector<1x8x16xbf16> to vector<8x16xbf16>
    %cst = arith.constant dense<0.000000e+00> : vector<384x16xf32>
    %7 = tpu.matmul %4, %6, %cst {dimension_numbers = #tpu.dot_dimension_numbers<[1], [0], [0], [1], [0, 0, 1, 1], [], []>} : vector<384x8xbf16>, vector<8x16xbf16>, vector<384x16xf32> -> vector<384x16xf32>
    %c0_7 = arith.constant 0 : index
    %c0_8 = arith.constant 0 : index
    %c1 = arith.constant 1 : index
    %c0_9 = arith.constant 0 : index
    %8 = vector.load %arg4[%c0_7, %c0_8, %c1, %c0_9] : memref<1x1x456x8xbf16, #tpu.memory_space<vmem>>, vector<1x1x384x8xbf16>
    %9 = vector.shape_cast %8 : vector<1x1x384x8xbf16> to vector<384x8xbf16>
    %c1_10 = arith.constant 1 : index
    %c0_11 = arith.constant 0 : index
    %c0_12 = arith.constant 0 : index
    %10 = vector.load %arg5[%c1_10, %c0_11, %c0_12] : memref<9x8x16xbf16, #tpu.memory_space<vmem>>, vector<1x8x16xbf16>
    %11 = vector.shape_cast %10 : vector<1x8x16xbf16> to vector<8x16xbf16>
    %cst_13 = arith.constant dense<0.000000e+00> : vector<384x16xf32>
    %12 = tpu.matmul %9, %11, %cst_13 {dimension_numbers = #tpu.dot_dimension_numbers<[1], [0], [0], [1], [0, 0, 1, 1], [], []>} : vector<384x8xbf16>, vector<8x16xbf16>, vector<384x16xf32> -> vector<384x16xf32>
    %13 = arith.addf %7, %12 : vector<384x16xf32>
    %c0_14 = arith.constant 0 : index
    %c0_15 = arith.constant 0 : index
    %c2 = arith.constant 2 : index
    %c0_16 = arith.constant 0 : index
    %14 = vector.load %arg4[%c0_14, %c0_15, %c2, %c0_16] : memref<1x1x456x8xbf16, #tpu.memory_space<vmem>>, vector<1x1x384x8xbf16>
    %15 = vector.shape_cast %14 : vector<1x1x384x8xbf16> to vector<384x8xbf16>
    %c2_17 = arith.constant 2 : index
    %c0_18 = arith.constant 0 : index
    %c0_19 = arith.constant 0 : index
    %16 = vector.load %arg5[%c2_17, %c0_18, %c0_19] : memref<9x8x16xbf16, #tpu.memory_space<vmem>>, vector<1x8x16xbf16>
    %17 = vector.shape_cast %16 : vector<1x8x16xbf16> to vector<8x16xbf16>
    %cst_20 = arith.constant dense<0.000000e+00> : vector<384x16xf32>
    %18 = tpu.matmul %15, %17, %cst_20 {dimension_numbers = #tpu.dot_dimension_numbers<[1], [0], [0], [1], [0, 0, 1, 1], [], []>} : vector<384x8xbf16>, vector<8x16xbf16>, vector<384x16xf32> -> vector<384x16xf32>
    %19 = arith.addf %13, %18 : vector<384x16xf32>
    %c0_21 = arith.constant 0 : index
    %c0_22 = arith.constant 0 : index
    %c24 = arith.constant 24 : index
    %c0_23 = arith.constant 0 : index
    %20 = vector.load %arg4[%c0_21, %c0_22, %c24, %c0_23] : memref<1x1x456x8xbf16, #tpu.memory_space<vmem>>, vector<1x1x384x8xbf16>
    %21 = vector.shape_cast %20 : vector<1x1x384x8xbf16> to vector<384x8xbf16>
    %c3 = arith.constant 3 : index
    %c0_24 = arith.constant 0 : index
    %c0_25 = arith.constant 0 : index
    %22 = vector.load %arg5[%c3, %c0_24, %c0_25] : memref<9x8x16xbf16, #tpu.memory_space<vmem>>, vector<1x8x16xbf16>
    %23 = vector.shape_cast %22 : vector<1x8x16xbf16> to vector<8x16xbf16>
    %cst_26 = arith.constant dense<0.000000e+00> : vector<384x16xf32>
    %24 = tpu.matmul %21, %23, %cst_26 {dimension_numbers = #tpu.dot_dimension_numbers<[1], [0], [0], [1], [0, 0, 1, 1], [], []>} : vector<384x8xbf16>, vector<8x16xbf16>, vector<384x16xf32> -> vector<384x16xf32>
    %25 = arith.addf %19, %24 : vector<384x16xf32>
    %c0_27 = arith.constant 0 : index
    %c0_28 = arith.constant 0 : index
    %c25 = arith.constant 25 : index
    %c0_29 = arith.constant 0 : index
    %26 = vector.load %arg4[%c0_27, %c0_28, %c25, %c0_29] : memref<1x1x456x8xbf16, #tpu.memory_space<vmem>>, vector<1x1x384x8xbf16>
    %27 = vector.shape_cast %26 : vector<1x1x384x8xbf16> to vector<384x8xbf16>
    %c4 = arith.constant 4 : index
    %c0_30 = arith.constant 0 : index
    %c0_31 = arith.constant 0 : index
    %28 = vector.load %arg5[%c4, %c0_30, %c0_31] : memref<9x8x16xbf16, #tpu.memory_space<vmem>>, vector<1x8x16xbf16>
    %29 = vector.shape_cast %28 : vector<1x8x16xbf16> to vector<8x16xbf16>
    %cst_32 = arith.constant dense<0.000000e+00> : vector<384x16xf32>
    %30 = tpu.matmul %27, %29, %cst_32 {dimension_numbers = #tpu.dot_dimension_numbers<[1], [0], [0], [1], [0, 0, 1, 1], [], []>} : vector<384x8xbf16>, vector<8x16xbf16>, vector<384x16xf32> -> vector<384x16xf32>
    %31 = arith.addf %25, %30 : vector<384x16xf32>
    %c0_33 = arith.constant 0 : index
    %c0_34 = arith.constant 0 : index
    %c26 = arith.constant 26 : index
    %c0_35 = arith.constant 0 : index
    %32 = vector.load %arg4[%c0_33, %c0_34, %c26, %c0_35] : memref<1x1x456x8xbf16, #tpu.memory_space<vmem>>, vector<1x1x384x8xbf16>
    %33 = vector.shape_cast %32 : vector<1x1x384x8xbf16> to vector<384x8xbf16>
    %c5 = arith.constant 5 : index
    %c0_36 = arith.constant 0 : index
    %c0_37 = arith.constant 0 : index
    %34 = vector.load %arg5[%c5, %c0_36, %c0_37] : memref<9x8x16xbf16, #tpu.memory_space<vmem>>, vector<1x8x16xbf16>
    %35 = vector.shape_cast %34 : vector<1x8x16xbf16> to vector<8x16xbf16>
    %cst_38 = arith.constant dense<0.000000e+00> : vector<384x16xf32>
    %36 = tpu.matmul %33, %35, %cst_38 {dimension_numbers = #tpu.dot_dimension_numbers<[1], [0], [0], [1], [0, 0, 1, 1], [], []>} : vector<384x8xbf16>, vector<8x16xbf16>, vector<384x16xf32> -> vector<384x16xf32>
    %37 = arith.addf %31, %36 : vector<384x16xf32>
    %c0_39 = arith.constant 0 : index
    %c0_40 = arith.constant 0 : index
    %c48 = arith.constant 48 : index
    %c0_41 = arith.constant 0 : index
    %38 = vector.load %arg4[%c0_39, %c0_40, %c48, %c0_41] : memref<1x1x456x8xbf16, #tpu.memory_space<vmem>>, vector<1x1x384x8xbf16>
    %39 = vector.shape_cast %38 : vector<1x1x384x8xbf16> to vector<384x8xbf16>
    %c6 = arith.constant 6 : index
    %c0_42 = arith.constant 0 : index
    %c0_43 = arith.constant 0 : index
    %40 = vector.load %arg5[%c6, %c0_42, %c0_43] : memref<9x8x16xbf16, #tpu.memory_space<vmem>>, vector<1x8x16xbf16>
    %41 = vector.shape_cast %40 : vector<1x8x16xbf16> to vector<8x16xbf16>
    %cst_44 = arith.constant dense<0.000000e+00> : vector<384x16xf32>
    %42 = tpu.matmul %39, %41, %cst_44 {dimension_numbers = #tpu.dot_dimension_numbers<[1], [0], [0], [1], [0, 0, 1, 1], [], []>} : vector<384x8xbf16>, vector<8x16xbf16>, vector<384x16xf32> -> vector<384x16xf32>
    %43 = arith.addf %37, %42 : vector<384x16xf32>
    %c0_45 = arith.constant 0 : index
    %c0_46 = arith.constant 0 : index
    %c49 = arith.constant 49 : index
    %c0_47 = arith.constant 0 : index
    %44 = vector.load %arg4[%c0_45, %c0_46, %c49, %c0_47] : memref<1x1x456x8xbf16, #tpu.memory_space<vmem>>, vector<1x1x384x8xbf16>
    %45 = vector.shape_cast %44 : vector<1x1x384x8xbf16> to vector<384x8xbf16>
    %c7 = arith.constant 7 : index
    %c0_48 = arith.constant 0 : index
    %c0_49 = arith.constant 0 : index
    %46 = vector.load %arg5[%c7, %c0_48, %c0_49] : memref<9x8x16xbf16, #tpu.memory_space<vmem>>, vector<1x8x16xbf16>
    %47 = vector.shape_cast %46 : vector<1x8x16xbf16> to vector<8x16xbf16>
    %cst_50 = arith.constant dense<0.000000e+00> : vector<384x16xf32>
    %48 = tpu.matmul %45, %47, %cst_50 {dimension_numbers = #tpu.dot_dimension_numbers<[1], [0], [0], [1], [0, 0, 1, 1], [], []>} : vector<384x8xbf16>, vector<8x16xbf16>, vector<384x16xf32> -> vector<384x16xf32>
    %49 = arith.addf %43, %48 : vector<384x16xf32>
    %c0_51 = arith.constant 0 : index
    %c0_52 = arith.constant 0 : index
    %c50 = arith.constant 50 : index
    %c0_53 = arith.constant 0 : index
    %50 = vector.load %arg4[%c0_51, %c0_52, %c50, %c0_53] : memref<1x1x456x8xbf16, #tpu.memory_space<vmem>>, vector<1x1x384x8xbf16>
    %51 = vector.shape_cast %50 : vector<1x1x384x8xbf16> to vector<384x8xbf16>
    %c8 = arith.constant 8 : index
    %c0_54 = arith.constant 0 : index
    %c0_55 = arith.constant 0 : index
    %52 = vector.load %arg5[%c8, %c0_54, %c0_55] : memref<9x8x16xbf16, #tpu.memory_space<vmem>>, vector<1x8x16xbf16>
    %53 = vector.shape_cast %52 : vector<1x8x16xbf16> to vector<8x16xbf16>
    %cst_56 = arith.constant dense<0.000000e+00> : vector<384x16xf32>
    %54 = tpu.matmul %51, %53, %cst_56 {dimension_numbers = #tpu.dot_dimension_numbers<[1], [0], [0], [1], [0, 0, 1, 1], [], []>} : vector<384x8xbf16>, vector<8x16xbf16>, vector<384x16xf32> -> vector<384x16xf32>
    %55 = arith.addf %49, %54 : vector<384x16xf32>
    %c0_57 = arith.constant 0 : index
    %c0_58 = arith.constant 0 : index
    %56 = vector.load %arg10[%c0_57, %c0_58] : memref<384x16xf32, #tpu.memory_space<vmem>>, vector<384x16xf32>
    %57 = arith.addf %56, %55 : vector<384x16xf32>
    %c0_59 = arith.constant 0 : index
    %c0_60 = arith.constant 0 : index
    %58 = vector.load %arg10[%c0_59, %c0_60] : memref<384x16xf32, #tpu.memory_space<vmem>>, vector<384x16xf32>
    tpu.vector_store %arg10[%c0_59, %c0_60], %57 {strides = array<i32>} : memref<384x16xf32, #tpu.memory_space<vmem>>, vector<384x16xf32>,
    %c0_i32_61 = arith.constant 0 : i32
    %59 = arith.cmpi eq, %arg3, %c0_i32_61 : i32
    %60 = arith.extui %59 : i1 to i32
    %c0_i32_62 = arith.constant 0 : i32
    %61 = arith.cmpi ne, %60, %c0_i32_62 : i32
    scf.if %61 {
      %c0_63 = arith.constant 0 : index
      %c0_64 = arith.constant 0 : index
      %62 = vector.load %arg10[%c0_63, %c0_64] : memref<384x16xf32, #tpu.memory_space<vmem>>, vector<384x16xf32>
      %c0_65 = arith.constant 0 : index
      %c0_66 = arith.constant 0 : index
      %c0_67 = arith.constant 0 : index
      %63 = vector.load %arg6[%c0_65, %c0_66, %c0_67] : memref<1x384x1xf32, #tpu.memory_space<vmem>>, vector<1x384x1xf32>
      %64 = vector.shape_cast %63 : vector<1x384x1xf32> to vector<384x1xf32>
      %65 = vector.broadcast %64 : vector<384x1xf32> to vector<384x16xf32>
      %66 = arith.mulf %62, %65 : vector<384x16xf32>
      %cst_68 = arith.constant dense<0.000000e+00> : vector<16xf32>
      %67 = vector.multi_reduction <add>, %66, %cst_68 [0] : vector<384x16xf32> to vector<16xf32>
      %68 = vector.shape_cast %67 : vector<16xf32> to vector<1x16xf32>
      %69 = arith.mulf %66, %62 : vector<384x16xf32>
      %cst_69 = arith.constant dense<0.000000e+00> : vector<16xf32>
      %70 = vector.multi_reduction <add>, %69, %cst_69 [0] : vector<384x16xf32> to vector<16xf32>
      %71 = vector.shape_cast %70 : vector<16xf32> to vector<1x16xf32>
      %72 = arith.truncf %62 : vector<384x16xf32> to vector<384x16xbf16>
      %c0_70 = arith.constant 0 : index
      %c0_71 = arith.constant 0 : index
      %c0_72 = arith.constant 0 : index
      %c0_73 = arith.constant 0 : index
      %73 = vector.load %arg7[%c0_70, %c0_71, %c0_72, %c0_73] : memref<1x1x384x16xbf16, #tpu.memory_space<vmem>>, vector<1x1x384x16xbf16>
      %74 = vector.shape_cast %73 : vector<1x1x384x16xbf16> to vector<384x16xbf16>
      %75 = vector.shape_cast %72 : vector<384x16xbf16> to vector<1x1x384x16xbf16>
      tpu.vector_store %arg7[%c0_70, %c0_71, %c0_72, %c0_73], %75 {strides = array<i32>} : memref<1x1x384x16xbf16, #tpu.memory_space<vmem>>, vector<1x1x384x16xbf16>,
      %c0_74 = arith.constant 0 : index
      %c0_75 = arith.constant 0 : index
      %c0_76 = arith.constant 0 : index
      %c0_77 = arith.constant 0 : index
      %76 = vector.load %arg8[%c0_74, %c0_75, %c0_76, %c0_77] : memref<1x1x1x16xf32, #tpu.memory_space<vmem>>, vector<1x1x1x16xf32>
      %77 = vector.shape_cast %76 : vector<1x1x1x16xf32> to vector<1x16xf32>
      %78 = vector.shape_cast %68 : vector<1x16xf32> to vector<1x1x1x16xf32>
      tpu.vector_store %arg8[%c0_74, %c0_75, %c0_76, %c0_77], %78 {strides = array<i32>} : memref<1x1x1x16xf32, #tpu.memory_space<vmem>>, vector<1x1x1x16xf32>,
      %c0_78 = arith.constant 0 : index
      %c0_79 = arith.constant 0 : index
      %c0_80 = arith.constant 0 : index
      %c0_81 = arith.constant 0 : index
      %79 = vector.load %arg9[%c0_78, %c0_79, %c0_80, %c0_81] : memref<1x1x1x16xf32, #tpu.memory_space<vmem>>, vector<1x1x1x16xf32>
      %80 = vector.shape_cast %79 : vector<1x1x1x16xf32> to vector<1x16xf32>
      %81 = vector.shape_cast %71 : vector<1x16xf32> to vector<1x1x1x16xf32>
      tpu.vector_store %arg9[%c0_78, %c0_79, %c0_80, %c0_81], %81 {strides = array<i32>} : memref<1x1x1x16xf32, #tpu.memory_space<vmem>>, vector<1x1x1x16xf32>,
    } else {
    }
    return
  }
  func.func @transform_0(%arg0: i32, %arg1: i32, %arg2: i32, %arg3: i32) -> (i32, i32, i32, i32) {
    %c0_i32 = arith.constant 0 : i32
    %c0_i32_0 = arith.constant 0 : i32
    return %arg0, %arg1, %c0_i32, %arg3 : i32, i32, i32, i32
  }
  func.func @transform_1(%arg0: i32, %arg1: i32, %arg2: i32, %arg3: i32) -> (i32, i32, i32) {
    %c0_i32 = arith.constant 0 : i32
    %c0_i32_0 = arith.constant 0 : i32
    return %c0_i32, %arg3, %arg2 : i32, i32, i32
  }
  func.func @transform_2(%arg0: i32, %arg1: i32, %arg2: i32, %arg3: i32) -> (i32, i32, i32) {
    %c0_i32 = arith.constant 0 : i32
    %c0_i32_0 = arith.constant 0 : i32
    %c0_i32_1 = arith.constant 0 : i32
    return %arg1, %c0_i32, %c0_i32_0 : i32, i32, i32
  }
  func.func @transform_3(%arg0: i32, %arg1: i32, %arg2: i32, %arg3: i32) -> (i32, i32, i32, i32) {
    %c0_i32 = arith.constant 0 : i32
    %c0_i32_0 = arith.constant 0 : i32
    return %arg0, %arg1, %c0_i32, %arg2 : i32, i32, i32, i32
  }
  func.func @transform_4(%arg0: i32, %arg1: i32, %arg2: i32, %arg3: i32) -> (i32, i32, i32, i32) {
    %c0_i32 = arith.constant 0 : i32
    %c0_i32_0 = arith.constant 0 : i32
    return %arg0, %arg1, %c0_i32, %arg2 : i32, i32, i32, i32
  }
  func.func @transform_5(%arg0: i32, %arg1: i32, %arg2: i32, %arg3: i32) -> (i32, i32, i32, i32) {
    %c0_i32 = arith.constant 0 : i32
    %c0_i32_0 = arith.constant 0 : i32
    return %arg0, %arg1, %c0_i32, %arg2 : i32, i32, i32, i32
  }
}

</mosaic_0001>

<llo_original>
// kernel: tpu_custom_call.1
$region0: #{tpu_custom_call.1}
  #allocation0 [shape = 'u32[]', space=smem, size = 0x4, offset = 0x4, fixed_abs, tag = 'smem constant byte address 0x4 - core index']
  #allocation1 [shape = 'u32[144,128]{1,0:T(1,128)}', space=vmem, size = 0x12000, scoped, tag = 'internal scratch']
  #allocation2 [shape = 'f32[384,16]{1,0:T(8,128)}', space=vmem, size = 0x30000, scoped, tag = 'scratch operand']
  %s0 = inlined_call_operand.vmem [shape: bf16[2,1,456,8], index: 0, kind: input, shape index: {}]
  %s1 = inlined_call_operand.vmem [shape: bf16[9,8,16], index: 1, kind: input, shape index: {}]
  %s2 = inlined_call_operand.vmem [shape: f32[1,384,1], index: 2, kind: input, shape index: {}]
  %s3 = inlined_call_operand.vmem [shape: bf16[2,1,384,16], index: 3, kind: output, shape index: {0}]
  %s4 = inlined_call_operand.hbm [shape: f32[2,1,1,16], index: 4, kind: output, shape index: {1}]
  %s5 = inlined_call_operand.hbm [shape: f32[2,1,1,16], index: 5, kind: output, shape index: {2}]
  %6 = xla_tuple %s3, %s4, %s5
  %s7 = sld [smem:[#allocation0]]
  $region69: #{tpu_custom_call.1} parent=0
    _
  %s9 = ssub.s32 1, %s7
  %s10 = scalar_select 0, %s9, %s7
  $region1: #{tpu_custom_call.1} parent=0
    #allocation3 [shape = 'u8[1024]{0}', space=vmem, size = 0x400, scoped, tag = 'output window, operand 1']
    #allocation4 [shape = 's32[2]{0}', space=sflag, size = 0x8, scoped, tag = 'scoped memory for tpu_custom_call.1']
    #allocation5 [shape = 'u8[1024]{0}', space=vmem, size = 0x400, scoped, tag = 'output window, operand 2']
    #allocation6 [shape = 's32[2]{0}', space=sflag, size = 0x8, scoped, tag = 'scoped memory for tpu_custom_call.1']
    %11 = vsyncpa [#allocation4], 0
    %s12 = scalar_lea.sflag [#allocation4], 1
    %13 = vsyncpa %s12, 0
    %14 = vsyncpa [#allocation6], 0
    %s15 = scalar_lea.sflag [#allocation6], 1
    %16 = vsyncpa %s15, 0
    loop: start=0, step=1, limit=4
    $region2: #{tpu_custom_call.1} parent=1 // loop_pre_header
      _
    $region3: #{tpu_custom_call.1} parent=1 // loop_header
      %s18 = sphi 0, %s22
      %p19 = scmp.ge.s32.totalorder %s18, 4
      %s25 = sphi 0, %s51
      %s26 = sphi 0, %s47
      %s27 = sphi 0, %s43
      %s28 = sphi 0, %s39
      %s29 = sphi 0, %s25
      %s30 = sphi 0, %s26
      %s31 = sphi 0, %s27
      %s32 = sphi 0, %s28
      %s33 = sphi 0, %s29
      %s34 = sphi 0, %s30
      %s35 = sphi 0, %s31
      %s36 = sphi 0, %s32
      %s58 = sphi 0, %s60
      %s61 = sphi 0, %s58
      %s62 = sphi 0, %s61
      %s78 = sphi 0, %s62
      %s86 = sphi 0, %s88
      %s89 = sphi 0, %s86
      %s90 = sphi 0, %s89
      %s106 = sphi 0, %s90
      %s112 = sphi 0, %s114
      %s115 = sphi 0, %s112
      %s116 = sphi 0, %s115
      %s132 = sphi 0, %s116
      %s142 = sphi 0, %s144
      %s145 = sphi 0, %s142
      %s146 = sphi 0, %s145
      %s162 = sphi 0, %s146
      %s172 = sphi 0, %s174
      %s175 = sphi 0, %s172
      %s176 = sphi 0, %s175
      %s192 = sphi 0, %s176
      %s202 = sphi 0, %s204
      %s205 = sphi 0, %s202
      %s206 = sphi 0, %s205
      %s222 = sphi 0, %s206
    $region4: #{tpu_custom_call.1} parent=1 // loop_header_branch
      %21 = sbr.rel (%p19) target = $region8
    $region5: #{tpu_custom_call.1} parent=1 // loop_body
      %s23 = ssub.s32 %s18, 1
      %s24 = ssub.s32 %s18, 2
      %s37 = sadd.s32 1, %s28
      %p38 = scmp.ge.s32.totalorder %s37, 1
      %s39 = scalar_select %p38, 0, %s37
      %s40 = sadd.s32 1, %s27
      %s41 = scalar_select %p38, %s40, %s27
      %p42 = scmp.ge.s32.totalorder %s41, 1
      %s43 = scalar_select %p42, 0, %s41
      %s44 = sadd.s32 1, %s26
      %s45 = scalar_select %p42, %s44, %s26
      %p46 = scmp.ge.s32.totalorder %s45, 1
      %s47 = scalar_select %p46, 0, %s45
      %s48 = sadd.s32 1, %s25
      %s49 = scalar_select %p46, %s48, %s25
      %p50 = scmp.ge.s32.totalorder %s49, 2
      %s51 = scalar_select %p50, 0, %s49
      %s52 = ssub.s32 %s25, %s51
      %s53 = ssub.s32 %s26, %s47
      %s54 = sor.u32 %s52, %s53
      %s55 = ssub.s32 %s28, %s39
      %s56 = sor.u32 %s54, %s55
      %p57 = scmp.eq.s32.totalorder %s56, 0
      %s59 = sadd.s32 %s58, 1
      %s60 = scalar_select %p57, %s58, %s59
      %p63 = pneg %p57
      %p64 = scmp.eq.s32.totalorder %s18, 1
      %p65 = por %p63, %p64
      %p66 = scmp.ne.s32.totalorder %s58, %s61
      %p67 = scmp.eq.s32.totalorder %s18, 0
      %p68 = por %p66, %p67
      %p69 = scmp.ne.s32.totalorder %s58, %s61
      %p70 = scmp.eq.s32.totalorder %s23, 1
      %p71 = por %p69, %p70
      %p72 = scmp.ne.s32.totalorder %s61, %s62
      %p73 = scmp.eq.s32.totalorder %s23, 0
      %p74 = por %p72, %p73
      %p75 = scmp.ne.s32.totalorder %s61, %s62
      %p76 = scmp.eq.s32.totalorder %s24, 1
      %p77 = por %p75, %p76
      %p79 = scmp.ne.s32.totalorder %s62, %s78
      %p80 = scmp.eq.s32.totalorder %s24, 0
      %p81 = por %p79, %p80
      %s82 = ssub.s32 %s28, %s39
      %s83 = ssub.s32 %s27, %s43
      %s84 = sor.u32 %s82, %s83
      %p85 = scmp.eq.s32.totalorder %s84, 0
      %s87 = sadd.s32 %s86, 1
      %s88 = scalar_select %p85, %s86, %s87
      %p91 = pneg %p85
      %p92 = scmp.eq.s32.totalorder %s18, 1
      %p93 = por %p91, %p92
      %p94 = scmp.ne.s32.totalorder %s86, %s89
      %p95 = scmp.eq.s32.totalorder %s18, 0
      %p96 = por %p94, %p95
      %p97 = scmp.ne.s32.totalorder %s86, %s89
      %p98 = scmp.eq.s32.totalorder %s23, 1
      %p99 = por %p97, %p98
      %p100 = scmp.ne.s32.totalorder %s89, %s90
      %p101 = scmp.eq.s32.totalorder %s23, 0
      %p102 = por %p100, %p101
      %p103 = scmp.ne.s32.totalorder %s89, %s90
      %p104 = scmp.eq.s32.totalorder %s24, 1
      %p105 = por %p103, %p104
      %p107 = scmp.ne.s32.totalorder %s90, %s106
      %p108 = scmp.eq.s32.totalorder %s24, 0
      %p109 = por %p107, %p108
      %s110 = ssub.s32 %s26, %s47
      %p111 = scmp.eq.s32.totalorder %s110, 0
      %s113 = sadd.s32 %s112, 1
      %s114 = scalar_select %p111, %s112, %s113
      %p117 = pneg %p111
      %p118 = scmp.eq.s32.totalorder %s18, 1
      %p119 = por %p117, %p118
      %p120 = scmp.ne.s32.totalorder %s112, %s115
      %p121 = scmp.eq.s32.totalorder %s18, 0
      %p122 = por %p120, %p121
      %p123 = scmp.ne.s32.totalorder %s112, %s115
      %p124 = scmp.eq.s32.totalorder %s23, 1
      %p125 = por %p123, %p124
      %p126 = scmp.ne.s32.totalorder %s115, %s116
      %p127 = scmp.eq.s32.totalorder %s23, 0
      %p128 = por %p126, %p127
      %p129 = scmp.ne.s32.totalorder %s115, %s116
      %p130 = scmp.eq.s32.totalorder %s24, 1
      %p131 = por %p129, %p130
      %p133 = scmp.ne.s32.totalorder %s116, %s132
      %p134 = scmp.eq.s32.totalorder %s24, 0
      %p135 = por %p133, %p134
      %s136 = ssub.s32 %s25, %s51
      %s137 = ssub.s32 %s26, %s47
      %s138 = sor.u32 %s136, %s137
      %s139 = ssub.s32 %s27, %s43
      %s140 = sor.u32 %s138, %s139
      %p141 = scmp.eq.s32.totalorder %s140, 0
      %s143 = sadd.s32 %s142, 1
      %s144 = scalar_select %p141, %s142, %s143
      %p147 = pneg %p141
      %p148 = scmp.eq.s32.totalorder %s18, 1
      %p149 = por %p147, %p148
      %p150 = scmp.ne.s32.totalorder %s142, %s145
      %p151 = scmp.eq.s32.totalorder %s18, 0
      %p152 = por %p150, %p151
      %p153 = scmp.ne.s32.totalorder %s142, %s145
      %p154 = scmp.eq.s32.totalorder %s23, 1
      %p155 = por %p153, %p154
      %p156 = scmp.ne.s32.totalorder %s145, %s146
      %p157 = scmp.eq.s32.totalorder %s23, 0
      %p158 = por %p156, %p157
      %p159 = scmp.ne.s32.totalorder %s145, %s146
      %p160 = scmp.eq.s32.totalorder %s24, 1
      %p161 = por %p159, %p160
      %p163 = scmp.ne.s32.totalorder %s146, %s162
      %p164 = scmp.eq.s32.totalorder %s24, 0
      %p165 = por %p163, %p164
      %s166 = ssub.s32 %s25, %s51
      %s167 = ssub.s32 %s26, %s47
      %s168 = sor.u32 %s166, %s167
      %s169 = ssub.s32 %s27, %s43
      %s170 = sor.u32 %s168, %s169
      %p171 = scmp.eq.s32.totalorder %s170, 0
      %s173 = sadd.s32 %s172, 1
      %s174 = scalar_select %p171, %s172, %s173
      %p177 = pneg %p171
      %p178 = scmp.eq.s32.totalorder %s18, 1
      %p179 = por %p177, %p178
      %p180 = scmp.ne.s32.totalorder %s172, %s175
      %p181 = scmp.eq.s32.totalorder %s18, 0
      %p182 = por %p180, %p181
      %p183 = scmp.ne.s32.totalorder %s172, %s175
      %p184 = scmp.eq.s32.totalorder %s23, 1
      %p185 = por %p183, %p184
      %p186 = scmp.ne.s32.totalorder %s175, %s176
      %p187 = scmp.eq.s32.totalorder %s23, 0
      %p188 = por %p186, %p187
      %p189 = scmp.ne.s32.totalorder %s175, %s176
      %p190 = scmp.eq.s32.totalorder %s24, 1
      %p191 = por %p189, %p190
      %p193 = scmp.ne.s32.totalorder %s176, %s192
      %p194 = scmp.eq.s32.totalorder %s24, 0
      %p195 = por %p193, %p194
      %s196 = ssub.s32 %s25, %s51
      %s197 = ssub.s32 %s26, %s47
      %s198 = sor.u32 %s196, %s197
      %s199 = ssub.s32 %s27, %s43
      %s200 = sor.u32 %s198, %s199
      %p201 = scmp.eq.s32.totalorder %s200, 0
      %s203 = sadd.s32 %s202, 1
      %s204 = scalar_select %p201, %s202, %s203
      %p207 = pneg %p201
      %p208 = scmp.eq.s32.totalorder %s18, 1
      %p209 = por %p207, %p208
      %p210 = scmp.ne.s32.totalorder %s202, %s205
      %p211 = scmp.eq.s32.totalorder %s18, 0
      %p212 = por %p210, %p211
      %p213 = scmp.ne.s32.totalorder %s202, %s205
      %p214 = scmp.eq.s32.totalorder %s23, 1
      %p215 = por %p213, %p214
      %p216 = scmp.ne.s32.totalorder %s205, %s206
      %p217 = scmp.eq.s32.totalorder %s23, 0
      %p218 = por %p216, %p217
      %p219 = scmp.ne.s32.totalorder %s205, %s206
      %p220 = scmp.eq.s32.totalorder %s24, 1
      %p221 = por %p219, %p220
      %p223 = scmp.ne.s32.totalorder %s206, %s222
      %p224 = scmp.eq.s32.totalorder %s24, 0
      %p225 = por %p223, %p224
      %p226 = scmp.le.s32.totalorder 1, %s18
      %p227 = scmp.lt.s32.totalorder %s18, 3
      %p228 = pnand %p226, %p227
      %p229 = pneg %p228
      // Predicated region
      $region9: #{tpu_custom_call.1} parent=5 // pred_check
        _
      $region10: #{tpu_custom_call.1} parent=5 // pred_check_branch
        %231 = sbr.rel (%p228) target = $region12
      $region11: #{tpu_custom_call.1} parent=5 // pred_region
        %s232 = ssub.s32 %s18, 1
        // Predicated region
        $region13: #{tpu_custom_call.1} parent=11 // pred_check
          %p233 = pneg %p102
        $region14: #{tpu_custom_call.1} parent=11 // pred_check_branch
          %235 = sbr.rel (%p233) target = $region16
        $region15: #{tpu_custom_call.1} parent=11 // pred_region
          %p236 = scmp.lt.s32.totalorder %s32, 0
          %s237 = scalar_select %p236, %s32, 0
          %p238 = scmp.lt.s32.totalorder %s31, 0
          %s239 = scalar_select %p238, %s31, 0
          %s240 = sadd.s32 %s239, %s237
          %s241 = smul.addr %s240, 4
          %s242 = scalar_lea.vmem %s1, %s241
        $region16: #{tpu_custom_call.1} parent=11 // pred_fallthru
          _
        // Predicated region
        $region17: #{tpu_custom_call.1} parent=11 // pred_check
          %p243 = pneg %p128
        $region18: #{tpu_custom_call.1} parent=11 // pred_check_branch
          %245 = sbr.rel (%p243) target = $region20
        $region19: #{tpu_custom_call.1} parent=11 // pred_region
          %p246 = scmp.lt.s32.totalorder %s30, 0
          %s247 = scalar_select %p246, %s30, 0
          %s248 = smul.addr %s247, 48
          %s249 = smul.addr %s248, 8
          %s250 = scalar_lea.vmem %s2, %s249
        $region20: #{tpu_custom_call.1} parent=11 // pred_fallthru
          _
      $region12: #{tpu_custom_call.1} parent=5 // pred_fallthru
        _
      %p251 = scmp.lt.s32.totalorder %s18, 2
      // Predicated region
      $region21: #{tpu_custom_call.1} parent=5 // pred_check
        %p252 = pneg %p251
      $region22: #{tpu_custom_call.1} parent=5 // pred_check_branch
        %254 = sbr.rel (%p252) target = $region24
      $region23: #{tpu_custom_call.1} parent=5 // pred_region
        // Predicated region
        $region25: #{tpu_custom_call.1} parent=23 // pred_check
          %p255 = pneg %p68
        $region26: #{tpu_custom_call.1} parent=23 // pred_check_branch
          %257 = sbr.rel (%p255) target = $region28
        $region27: #{tpu_custom_call.1} parent=23 // pred_region
          %p258 = scmp.lt.s32.totalorder %s25, 1
          %s259 = scalar_select %p258, %s25, 1
          %p260 = scmp.lt.s32.totalorder %s26, 0
          %s261 = scalar_select %p260, %s26, 0
          %p262 = scmp.lt.s32.totalorder %s28, 0
          %s263 = scalar_select %p262, %s28, 0
          %s264 = smul.addr %s261, 57
          %s265 = sadd.s32 %s263, %s264
          %s266 = smul.addr %s259, 57
          %s267 = sadd.s32 %s265, %s266
          %s268 = smul.addr %s267, 4
          %s269 = scalar_lea.vmem %s0, %s268
        $region28: #{tpu_custom_call.1} parent=23 // pred_fallthru
          _
      $region24: #{tpu_custom_call.1} parent=5 // pred_fallthru
        _
      %p270 = scmp.le.s32.totalorder 1, %s18
      %p271 = scmp.lt.s32.totalorder %s18, 3
      %p272 = pnand %p270, %p271
      %p273 = pneg %p272
      // Predicated region
      $region29: #{tpu_custom_call.1} parent=5 // pred_check
        _
      $region30: #{tpu_custom_call.1} parent=5 // pred_check_branch
        %275 = sbr.rel (%p272) target = $region32
      $region31: #{tpu_custom_call.1} parent=5 // pred_region
        %s276 = ssub.s32 %s18, 1
        %p277 = scmp.lt.s32.totalorder %s29, 1
        %s278 = scalar_select %p277, %s29, 1
        %p279 = scmp.lt.s32.totalorder %s30, 0
        %s280 = scalar_select %p279, %s30, 0
        %p281 = scmp.lt.s32.totalorder %s32, 0
        %s282 = scalar_select %p281, %s32, 0
        %s283 = smul.addr %s280, 57
        %s284 = sadd.s32 %s282, %s283
        %s285 = smul.addr %s278, 57
        %s286 = sadd.s32 %s284, %s285
        %s287 = smul.addr %s286, 4
        %s288 = scalar_lea.vmem %s0, %s287
        %p289 = pneg %p74
        %p290 = pneg %p71
        %p291 = scmp.lt.s32.totalorder %s32, 0
        %s292 = scalar_select %p291, %s32, 0
        %p293 = scmp.lt.s32.totalorder %s31, 0
        %s294 = scalar_select %p293, %s31, 0
        %s295 = sadd.s32 %s294, %s292
        %s296 = smul.addr %s295, 4
        %s297 = scalar_lea.vmem %s1, %s296
        %p298 = pneg %p102
        %p299 = pneg %p99
        %p300 = scmp.lt.s32.totalorder %s30, 0
        %s301 = scalar_select %p300, %s30, 0
        %s302 = smul.addr %s301, 48
        %s303 = smul.addr %s302, 8
        %s304 = scalar_lea.vmem %s2, %s303
        %p305 = pneg %p128
        %p306 = pneg %p125
        %p307 = pneg %p158
        %p308 = pneg %p155
        %p309 = scmp.lt.s32.totalorder %s29, 1
        %s310 = scalar_select %p309, %s29, 1
        %p311 = scmp.lt.s32.totalorder %s30, 0
        %s312 = scalar_select %p311, %s30, 0
        %p313 = scmp.lt.s32.totalorder %s31, 0
        %s314 = scalar_select %p313, %s31, 0
        %s315 = smul.addr %s312, 48
        %s316 = sadd.s32 %s314, %s315
        %s317 = smul.addr %s310, 48
        %s318 = sadd.s32 %s316, %s317
        %s319 = smul.addr %s318, 4
        %s320 = scalar_lea.vmem %s3, %s319
        %p321 = pneg %p188
        %p322 = pneg %p185
        %s323 = sand.u32 %s175, 1
        %s324 = scalar_lea.sflag [#allocation4], %s323
        %s325 = sand.u32 %s175, 1
        %s326 = scalar_lea.vmem [#allocation3], %s325
        %p327 = pneg %p218
        %p328 = pneg %p215
        %s329 = sand.u32 %s205, 1
        %s330 = scalar_lea.sflag [#allocation6], %s329
        %s331 = sand.u32 %s205, 1
        %s332 = scalar_lea.vmem [#allocation5], %s331
        %p333 = scmp.lt.s32.totalorder %s29, 1
        %s334 = scalar_select %p333, %s29, 1
        %p335 = scmp.lt.s32.totalorder %s30, 0
        %s336 = scalar_select %p335, %s30, 0
        %p337 = scmp.lt.s32.totalorder %s32, 0
        %s338 = scalar_select %p337, %s32, 0
        %s339 = smul.addr %s336, 57
        %s340 = sadd.s32 %s338, %s339
        %s341 = smul.addr %s334, 57
        %s342 = sadd.s32 %s340, %s341
        %s343 = smul.addr %s342, 4
        %s344 = scalar_lea.vmem %s0, %s343
        %p345 = scmp.lt.s32.totalorder %s32, 0
        %s346 = scalar_select %p345, %s32, 0
        %p347 = scmp.lt.s32.totalorder %s31, 0
        %s348 = scalar_select %p347, %s31, 0
        %s349 = sadd.s32 %s348, %s346
        %s350 = smul.addr %s349, 4
        %s351 = scalar_lea.vmem %s1, %s350
        %p352 = scmp.lt.s32.totalorder %s30, 0
        %s353 = scalar_select %p352, %s30, 0
        %s354 = smul.addr %s353, 48
        %s355 = smul.addr %s354, 8
        %s356 = scalar_lea.vmem %s2, %s355
        %p357 = scmp.lt.s32.totalorder %s29, 1
        %s358 = scalar_select %p357, %s29, 1
        %p359 = scmp.lt.s32.totalorder %s30, 0
        %s360 = scalar_select %p359, %s30, 0
        %p361 = scmp.lt.s32.totalorder %s31, 0
        %s362 = scalar_select %p361, %s31, 0
        %s363 = smul.addr %s360, 48
        %s364 = sadd.s32 %s362, %s363
        %s365 = smul.addr %s358, 48
        %s366 = sadd.s32 %s364, %s365
        %s367 = smul.addr %s366, 4
        %s368 = scalar_lea.vmem %s3, %s367
        %p370 = scmp.eq.s32.totalorder %s32, 0
        // Predicated region
        $region33: #{tpu_custom_call.1} parent=31 // pred_check
          %p371 = pneg %p370
        $region34: #{tpu_custom_call.1} parent=31 // pred_check_branch
          %373 = sbr.rel (%p371) target = $region36
        $region35: #{tpu_custom_call.1} parent=31 // pred_region
          %vm374 = vcmask 130048
          %375 = vst.msk [vmem:[#allocation2] sm:$0xff] %vm374, 0.0
          %376 = vst.msk [vmem:[#allocation2 + $0x8] sm:$0xff] %vm374, 0.0
          %377 = vst.msk [vmem:[#allocation2 + $0x10] sm:$0xff] %vm374, 0.0
          %378 = vst.msk [vmem:[#allocation2 + $0x18] sm:$0xff] %vm374, 0.0
          %379 = vst.msk [vmem:[#allocation2 + $0x20] sm:$0xff] %vm374, 0.0
          %380 = vst.msk [vmem:[#allocation2 + $0x28] sm:$0xff] %vm374, 0.0
          %381 = vst.msk [vmem:[#allocation2 + $0x30] sm:$0xff] %vm374, 0.0
          %382 = vst.msk [vmem:[#allocation2 + $0x38] sm:$0xff] %vm374, 0.0
          %383 = vst.msk [vmem:[#allocation2 + $0x40] sm:$0xff] %vm374, 0.0
          %384 = vst.msk [vmem:[#allocation2 + $0x48] sm:$0xff] %vm374, 0.0
          %385 = vst.msk [vmem:[#allocation2 + $0x50] sm:$0xff] %vm374, 0.0
          %386 = vst.msk [vmem:[#allocation2 + $0x58] sm:$0xff] %vm374, 0.0
          %387 = vst.msk [vmem:[#allocation2 + $0x60] sm:$0xff] %vm374, 0.0
          %388 = vst.msk [vmem:[#allocation2 + $0x68] sm:$0xff] %vm374, 0.0
          %389 = vst.msk [vmem:[#allocation2 + $0x70] sm:$0xff] %vm374, 0.0
          %390 = vst.msk [vmem:[#allocation2 + $0x78] sm:$0xff] %vm374, 0.0
          %391 = vst.msk [vmem:[#allocation2 + $0x80] sm:$0xff] %vm374, 0.0
          %392 = vst.msk [vmem:[#allocation2 + $0x88] sm:$0xff] %vm374, 0.0
          %393 = vst.msk [vmem:[#allocation2 + $0x90] sm:$0xff] %vm374, 0.0
          %394 = vst.msk [vmem:[#allocation2 + $0x98] sm:$0xff] %vm374, 0.0
          %395 = vst.msk [vmem:[#allocation2 + $0xa0] sm:$0xff] %vm374, 0.0
          %396 = vst.msk [vmem:[#allocation2 + $0xa8] sm:$0xff] %vm374, 0.0
          %397 = vst.msk [vmem:[#allocation2 + $0xb0] sm:$0xff] %vm374, 0.0
          %398 = vst.msk [vmem:[#allocation2 + $0xb8] sm:$0xff] %vm374, 0.0
          %399 = vst.msk [vmem:[#allocation2 + $0xc0] sm:$0xff] %vm374, 0.0
          %400 = vst.msk [vmem:[#allocation2 + $0xc8] sm:$0xff] %vm374, 0.0
          %401 = vst.msk [vmem:[#allocation2 + $0xd0] sm:$0xff] %vm374, 0.0
          %402 = vst.msk [vmem:[#allocation2 + $0xd8] sm:$0xff] %vm374, 0.0
          %403 = vst.msk [vmem:[#allocation2 + $0xe0] sm:$0xff] %vm374, 0.0
          %404 = vst.msk [vmem:[#allocation2 + $0xe8] sm:$0xff] %vm374, 0.0
          %405 = vst.msk [vmem:[#allocation2 + $0xf0] sm:$0xff] %vm374, 0.0
          %406 = vst.msk [vmem:[#allocation2 + $0xf8] sm:$0xff] %vm374, 0.0
          %407 = vst.msk [vmem:[#allocation2 + $0x100] sm:$0xff] %vm374, 0.0
          %408 = vst.msk [vmem:[#allocation2 + $0x108] sm:$0xff] %vm374, 0.0
          %409 = vst.msk [vmem:[#allocation2 + $0x110] sm:$0xff] %vm374, 0.0
          %410 = vst.msk [vmem:[#allocation2 + $0x118] sm:$0xff] %vm374, 0.0
          %411 = vst.msk [vmem:[#allocation2 + $0x120] sm:$0xff] %vm374, 0.0
          %412 = vst.msk [vmem:[#allocation2 + $0x128] sm:$0xff] %vm374, 0.0
          %413 = vst.msk [vmem:[#allocation2 + $0x130] sm:$0xff] %vm374, 0.0
          %414 = vst.msk [vmem:[#allocation2 + $0x138] sm:$0xff] %vm374, 0.0
          %415 = vst.msk [vmem:[#allocation2 + $0x140] sm:$0xff] %vm374, 0.0
          %416 = vst.msk [vmem:[#allocation2 + $0x148] sm:$0xff] %vm374, 0.0
          %417 = vst.msk [vmem:[#allocation2 + $0x150] sm:$0xff] %vm374, 0.0
          %418 = vst.msk [vmem:[#allocation2 + $0x158] sm:$0xff] %vm374, 0.0
          %419 = vst.msk [vmem:[#allocation2 + $0x160] sm:$0xff] %vm374, 0.0
          %420 = vst.msk [vmem:[#allocation2 + $0x168] sm:$0xff] %vm374, 0.0
          %421 = vst.msk [vmem:[#allocation2 + $0x170] sm:$0xff] %vm374, 0.0
          %422 = vst.msk [vmem:[#allocation2 + $0x178] sm:$0xff] %vm374, 0.0
        $region36: #{tpu_custom_call.1} parent=31 // pred_fallthru
          _
        %v423 = vld [vmem:[%s344] sm:$0xf]
        %v424 = vld [vmem:[%s344 + $0x4] sm:$0xf]
        %v425 = vld [vmem:[%s344 + $0x8] sm:$0xf]
        %v426 = vld [vmem:[%s344 + $0xc] sm:$0xf]
        %v427 = vld [vmem:[%s344 + $0x10] sm:$0xf]
        %v428 = vld [vmem:[%s344 + $0x14] sm:$0xf]
        %v429 = vld [vmem:[%s344 + $0x18] sm:$0xf]
        %v430 = vld [vmem:[%s344 + $0x1c] sm:$0xf]
        %v431 = vld [vmem:[%s344 + $0x20] sm:$0xf]
        %v432 = vld [vmem:[%s344 + $0x24] sm:$0xf]
        %v433 = vld [vmem:[%s344 + $0x28] sm:$0xf]
        %v434 = vld [vmem:[%s344 + $0x2c] sm:$0xf]
        %v435 = vld [vmem:[%s344 + $0x30] sm:$0xf]
        %v436 = vld [vmem:[%s344 + $0x34] sm:$0xf]
        %v437 = vld [vmem:[%s344 + $0x38] sm:$0xf]
        %v438 = vld [vmem:[%s344 + $0x3c] sm:$0xf]
        %v439 = vld [vmem:[%s344 + $0x40] sm:$0xf]
        %v440 = vld [vmem:[%s344 + $0x44] sm:$0xf]
        %v441 = vld [vmem:[%s344 + $0x48] sm:$0xf]
        %v442 = vld [vmem:[%s344 + $0x4c] sm:$0xf]
        %v443 = vld [vmem:[%s344 + $0x50] sm:$0xf]
        %v444 = vld [vmem:[%s344 + $0x54] sm:$0xf]
        %v445 = vld [vmem:[%s344 + $0x58] sm:$0xf]
        %v446 = vld [vmem:[%s344 + $0x5c] sm:$0xf]
        %v447 = vld [vmem:[%s344 + $0x60] sm:$0xf]
        %v448 = vld [vmem:[%s344 + $0x64] sm:$0xf]
        %v449 = vld [vmem:[%s344 + $0x68] sm:$0xf]
        %v450 = vld [vmem:[%s344 + $0x6c] sm:$0xf]
        %v451 = vld [vmem:[%s344 + $0x70] sm:$0xf]
        %v452 = vld [vmem:[%s344 + $0x74] sm:$0xf]
        %v453 = vld [vmem:[%s344 + $0x78] sm:$0xf]
        %v454 = vld [vmem:[%s344 + $0x7c] sm:$0xf]
        %v455 = vld [vmem:[%s344 + $0x80] sm:$0xf]
        %v456 = vld [vmem:[%s344 + $0x84] sm:$0xf]
        %v457 = vld [vmem:[%s344 + $0x88] sm:$0xf]
        %v458 = vld [vmem:[%s344 + $0x8c] sm:$0xf]
        %v459 = vld [vmem:[%s344 + $0x90] sm:$0xf]
        %v460 = vld [vmem:[%s344 + $0x94] sm:$0xf]
        %v461 = vld [vmem:[%s344 + $0x98] sm:$0xf]
        %v462 = vld [vmem:[%s344 + $0x9c] sm:$0xf]
        %v463 = vld [vmem:[%s344 + $0xa0] sm:$0xf]
        %v464 = vld [vmem:[%s344 + $0xa4] sm:$0xf]
        %v465 = vld [vmem:[%s344 + $0xa8] sm:$0xf]
        %v466 = vld [vmem:[%s344 + $0xac] sm:$0xf]
        %v467 = vld [vmem:[%s344 + $0xb0] sm:$0xf]
        %v468 = vld [vmem:[%s344 + $0xb4] sm:$0xf]
        %v469 = vld [vmem:[%s344 + $0xb8] sm:$0xf]
        %v470 = vld [vmem:[%s344 + $0xbc] sm:$0xf]
        %v471 = vld [vmem:[%s351] sm:$0xf]
        %v472 = vld [vmem:[%s344 + $0xc0] sm:$0x1]
        %s473 = scalar_lea.vmem %s351, 4
        %v474 = vld [vmem:[%s473] sm:$0xf]
        %v524 = vunpack.c.l.b16 %v423
        %v525 = vunpack.c.l.b16 %v424
        %v526 = vunpack.c.l.b16 %v425
        %v527 = vunpack.c.l.b16 %v426
        %v528 = vunpack.c.l.b16 %v427
        %v529 = vunpack.c.l.b16 %v428
        %v530 = vunpack.c.l.b16 %v429
        %v531 = vunpack.c.l.b16 %v430
        %v532 = vunpack.c.l.b16 %v431
        %v533 = vunpack.c.l.b16 %v432
        %v534 = vunpack.c.l.b16 %v433
        %v535 = vunpack.c.l.b16 %v434
        %v536 = vunpack.c.l.b16 %v435
        %v537 = vunpack.c.l.b16 %v436
        %v538 = vunpack.c.l.b16 %v437
        %v539 = vunpack.c.l.b16 %v438
        %v540 = vunpack.c.l.b16 %v439
        %v541 = vunpack.c.l.b16 %v440
        %v542 = vunpack.c.l.b16 %v441
        %v543 = vunpack.c.l.b16 %v442
        %v544 = vunpack.c.l.b16 %v443
        %v545 = vunpack.c.l.b16 %v444
        %v546 = vunpack.c.l.b16 %v445
        %v547 = vunpack.c.l.b16 %v446
        %v548 = vunpack.c.l.b16 %v447
        %v549 = vunpack.c.l.b16 %v448
        %v550 = vunpack.c.l.b16 %v449
        %v551 = vunpack.c.l.b16 %v450
        %v552 = vunpack.c.l.b16 %v451
        %v553 = vunpack.c.l.b16 %v452
        %v554 = vunpack.c.l.b16 %v453
        %v555 = vunpack.c.l.b16 %v454
        %v556 = vunpack.c.l.b16 %v455
        %v557 = vunpack.c.l.b16 %v456
        %v558 = vunpack.c.l.b16 %v457
        %v559 = vunpack.c.l.b16 %v458
        %v560 = vunpack.c.l.b16 %v459
        %v561 = vunpack.c.l.b16 %v460
        %v562 = vunpack.c.l.b16 %v461
        %v563 = vunpack.c.l.b16 %v462
        %v564 = vunpack.c.l.b16 %v463
        %v565 = vunpack.c.l.b16 %v464
        %v566 = vunpack.c.l.b16 %v465
        %v567 = vunpack.c.l.b16 %v466
        %v568 = vunpack.c.l.b16 %v467
        %v569 = vunpack.c.l.b16 %v468
        %v570 = vunpack.c.l.b16 %v469
        %v571 = vunpack.c.l.b16 %v470
        %v572 = vunpack.c.l.b16 %v472
        %v573 = vpack.c.b16 %v525, %v524
        %v574 = vpack.c.b16 %v527, %v526
        %v575 = vpack.c.b16 %v529, %v528
        %v576 = vpack.c.b16 %v531, %v530
        %v577 = vpack.c.b16 %v533, %v532
        %v578 = vpack.c.b16 %v535, %v534
        %v579 = vpack.c.b16 %v537, %v536
        %v580 = vpack.c.b16 %v539, %v538
        %v581 = vpack.c.b16 %v541, %v540
        %v582 = vpack.c.b16 %v543, %v542
        %v583 = vpack.c.b16 %v545, %v544
        %v584 = vpack.c.b16 %v547, %v546
        %v585 = vpack.c.b16 %v549, %v548
        %v586 = vpack.c.b16 %v551, %v550
        %v587 = vpack.c.b16 %v553, %v552
        %v588 = vpack.c.b16 %v555, %v554
        %v589 = vpack.c.b16 %v557, %v556
        %v590 = vpack.c.b16 %v559, %v558
        %v591 = vpack.c.b16 %v561, %v560
        %v592 = vpack.c.b16 %v563, %v562
        %v593 = vpack.c.b16 %v565, %v564
        %v594 = vpack.c.b16 %v567, %v566
        %v595 = vpack.c.b16 %v569, %v568
        %v596 = vpack.c.b16 %v571, %v570
        %v597 = vpack.c.b16 %v572, %v572
        %vm598 = vsmask.f32 7424
        %v600 = vshrl.u32 %v573, 16
        %v602 = vshll.u32 %v573, 16
        %v604 = vrot.slane %v602, 1
        %v605 = vor.u32 %v600, %v604
        %v607 = vshll.u32 %v574, 16
        %v609 = vrot.slane %v607, 1
        %v610 = vsel %vm598, %v605, %v609
        %v611 = vshrl.u32 %v574, 16
        %v613 = vor.u32 %v611, %v609
        %v615 = vshll.u32 %v575, 16
        %v617 = vrot.slane %v615, 1
        %v618 = vsel %vm598, %v613, %v617
        %v619 = vshrl.u32 %v575, 16
        %v621 = vor.u32 %v619, %v617
        %v623 = vshll.u32 %v576, 16
        %v625 = vrot.slane %v623, 1
        %v626 = vsel %vm598, %v621, %v625
        %v627 = vshrl.u32 %v576, 16
        %v629 = vor.u32 %v627, %v625
        %v631 = vshll.u32 %v577, 16
        %v633 = vrot.slane %v631, 1
        %v634 = vsel %vm598, %v629, %v633
        %v635 = vshrl.u32 %v577, 16
        %v637 = vor.u32 %v635, %v633
        %v639 = vshll.u32 %v578, 16
        %v641 = vrot.slane %v639, 1
        %v642 = vsel %vm598, %v637, %v641
        %v643 = vshrl.u32 %v578, 16
        %v645 = vor.u32 %v643, %v641
        %v647 = vshll.u32 %v579, 16
        %v649 = vrot.slane %v647, 1
        %v650 = vsel %vm598, %v645, %v649
        %v651 = vshrl.u32 %v579, 16
        %v653 = vor.u32 %v651, %v649
        %v655 = vshll.u32 %v580, 16
        %v657 = vrot.slane %v655, 1
        %v658 = vsel %vm598, %v653, %v657
        %v659 = vshrl.u32 %v580, 16
        %v661 = vor.u32 %v659, %v657
        %v663 = vshll.u32 %v581, 16
        %v665 = vrot.slane %v663, 1
        %v666 = vsel %vm598, %v661, %v665
        %v667 = vshrl.u32 %v581, 16
        %v669 = vor.u32 %v667, %v665
        %v671 = vshll.u32 %v582, 16
        %v673 = vrot.slane %v671, 1
        %v674 = vsel %vm598, %v669, %v673
        %v675 = vshrl.u32 %v582, 16
        %v677 = vor.u32 %v675, %v673
        %v679 = vshll.u32 %v583, 16
        %v681 = vrot.slane %v679, 1
        %v682 = vsel %vm598, %v677, %v681
        %v683 = vshrl.u32 %v583, 16
        %v685 = vor.u32 %v683, %v681
        %v687 = vshll.u32 %v584, 16
        %v689 = vrot.slane %v687, 1
        %v690 = vsel %vm598, %v685, %v689
        %v691 = vshrl.u32 %v584, 16
        %v693 = vor.u32 %v691, %v689
        %v695 = vshll.u32 %v585, 16
        %v697 = vrot.slane %v695, 1
        %v698 = vsel %vm598, %v693, %v697
        %v699 = vshrl.u32 %v585, 16
        %v701 = vor.u32 %v699, %v697
        %v703 = vshll.u32 %v586, 16
        %v705 = vrot.slane %v703, 1
        %v706 = vsel %vm598, %v701, %v705
        %v707 = vshrl.u32 %v586, 16
        %v709 = vor.u32 %v707, %v705
        %v711 = vshll.u32 %v587, 16
        %v713 = vrot.slane %v711, 1
        %v714 = vsel %vm598, %v709, %v713
        %v715 = vshrl.u32 %v587, 16
        %v717 = vor.u32 %v715, %v713
        %v719 = vshll.u32 %v588, 16
        %v721 = vrot.slane %v719, 1
        %v722 = vsel %vm598, %v717, %v721
        %v723 = vshrl.u32 %v588, 16
        %v725 = vor.u32 %v723, %v721
        %v727 = vshll.u32 %v589, 16
        %v729 = vrot.slane %v727, 1
        %v730 = vsel %vm598, %v725, %v729
        %v731 = vshrl.u32 %v589, 16
        %v733 = vor.u32 %v731, %v729
        %v735 = vshll.u32 %v590, 16
        %v737 = vrot.slane %v735, 1
        %v738 = vsel %vm598, %v733, %v737
        %v739 = vshrl.u32 %v590, 16
        %v741 = vor.u32 %v739, %v737
        %v743 = vshll.u32 %v591, 16
        %v745 = vrot.slane %v743, 1
        %v746 = vsel %vm598, %v741, %v745
        %v747 = vshrl.u32 %v591, 16
        %v749 = vor.u32 %v747, %v745
        %v751 = vshll.u32 %v592, 16
        %v753 = vrot.slane %v751, 1
        %v754 = vsel %vm598, %v749, %v753
        %v755 = vshrl.u32 %v592, 16
        %v757 = vor.u32 %v755, %v753
        %v759 = vshll.u32 %v593, 16
        %v761 = vrot.slane %v759, 1
        %v762 = vsel %vm598, %v757, %v761
        %v763 = vshrl.u32 %v593, 16
        %v765 = vor.u32 %v763, %v761
        %v767 = vshll.u32 %v594, 16
        %v769 = vrot.slane %v767, 1
        %v770 = vsel %vm598, %v765, %v769
        %v771 = vshrl.u32 %v594, 16
        %v773 = vor.u32 %v771, %v769
        %v775 = vshll.u32 %v595, 16
        %v777 = vrot.slane %v775, 1
        %v778 = vsel %vm598, %v773, %v777
        %v779 = vshrl.u32 %v595, 16
        %v781 = vor.u32 %v779, %v777
        %v783 = vshll.u32 %v596, 16
        %v785 = vrot.slane %v783, 1
        %v786 = vsel %vm598, %v781, %v785
        %v787 = vshrl.u32 %v596, 16
        %v789 = vor.u32 %v787, %v785
        %v791 = vshll.u32 %v597, 16
        %v793 = vrot.slane %v791, 1
        %v794 = vsel %vm598, %v789, %v793
        %vm795 = vcmask 64512
        %v797 = vsel %vm795, %v610, 0
        %v800 = vsel %vm795, %v618, 0
        %v803 = vsel %vm795, %v626, 0
        %v806 = vsel %vm795, %v634, 0
        %v809 = vsel %vm795, %v642, 0
        %v812 = vsel %vm795, %v650, 0
        %v815 = vsel %vm795, %v658, 0
        %v818 = vsel %vm795, %v666, 0
        %v821 = vsel %vm795, %v674, 0
        %v824 = vsel %vm795, %v682, 0
        %v827 = vsel %vm795, %v690, 0
        %v830 = vsel %vm795, %v698, 0
        %v833 = vsel %vm795, %v706, 0
        %v836 = vsel %vm795, %v714, 0
        %v839 = vsel %vm795, %v722, 0
        %v842 = vsel %vm795, %v730, 0
        %v845 = vsel %vm795, %v738, 0
        %v848 = vsel %vm795, %v746, 0
        %v851 = vsel %vm795, %v754, 0
        %v854 = vsel %vm795, %v762, 0
        %v857 = vsel %vm795, %v770, 0
        %v860 = vsel %vm795, %v778, 0
        %v863 = vsel %vm795, %v786, 0
        %v866 = vsel %vm795, %v794, 0
        %vm868 = vcmask 1043456
        %v870 = vsel %vm868, %v474, 0
        %872 = vmatprep.subr.bf16.mxu0 0
        %873 = vmatpush1.bf16.msra.mxu0 0
        %874 = vmatprep.subr.bf16.mxu0 0
        %875 = vmatpush1.bf16.msra.mxu0 0
        %876 = vmatprep.subr.bf16.mxu0 0
        %877 = vmatpush1.bf16.msra.mxu0 0
        %878 = vmatprep.subr.bf16.mxu0 0
        %879 = vmatpush1.bf16.msra.mxu0 0
        %880 = vmatprep.subr.bf16.mxu0 0
        %881 = vmatpush1.bf16.msra.mxu0 0
        %882 = vmatprep.subr.bf16.mxu0 0
        %883 = vmatpush1.bf16.msra.mxu0 0
        %884 = vmatprep.subr.bf16.mxu0 0
        %885 = vmatpush1.bf16.msra.mxu0 0
        %886 = vmatprep.subr.bf16.mxu0 0
        %887 = vmatpush1.bf16.msra.mxu0 %v870
        %888 = vmatprep.subr.bf16.mxu0 0
        %889 = vmatpush2.bf16.msra.mxu0 0
        %890 = vmatprep.subr.bf16.mxu0 0
        %891 = vmatpush2.bf16.msra.mxu0 0
        %892 = vmatprep.subr.bf16.mxu0 0
        %893 = vmatpush2.bf16.msra.mxu0 0
        %894 = vmatprep.subr.bf16.mxu0 0
        %895 = vmatpush2.bf16.msra.mxu0 0
        %896 = vmatprep.subr.bf16.mxu0 0
        %897 = vmatpush2.bf16.msra.mxu0 0
        %898 = vmatprep.subr.bf16.mxu0 0
        %899 = vmatpush2.bf16.msra.mxu0 0
        %900 = vmatprep.subr.bf16.mxu0 0
        %901 = vmatpush2.bf16.msra.mxu0 0
        %902 = vmatprep.subr.bf16.mxu0 0
        %903 = vmatpush2.bf16.msra.mxu0 0
        %904 = vmatprep.mubr.bf16.mxu0 0
        %905 = vmatmul.mubr.bf16.gmra.mxu0 %v797
        %v906 = vpop.f32.mrf.mxu0
        %v907 = vadd.f32 0.0, %v906
        %v908 = vpop.f32.mrf.mxu0
        %v909 = vpop.f32.mrf.mxu0
        %v910 = vadd.f32 0.0, %v909
        %v911 = vpop.f32.mrf.mxu0
        %912 = vmatprep.mubr.bf16.mxu0 0
        %913 = vmatmul.mubr.bf16.gmra.mxu0 %v800
        %v914 = vpop.f32.mrf.mxu0
        %v915 = vadd.f32 0.0, %v914
        %v916 = vpop.f32.mrf.mxu0
        %v917 = vpop.f32.mrf.mxu0
        %v918 = vadd.f32 0.0, %v917
        %v919 = vpop.f32.mrf.mxu0
        %920 = vmatprep.mubr.bf16.mxu0 0
        %921 = vmatmul.mubr.bf16.gmra.mxu0 %v803
        %v922 = vpop.f32.mrf.mxu0
        %v923 = vadd.f32 0.0, %v922
        %v924 = vpop.f32.mrf.mxu0
        %v925 = vpop.f32.mrf.mxu0
        %v926 = vadd.f32 0.0, %v925
        %v927 = vpop.f32.mrf.mxu0
        %928 = vmatprep.mubr.bf16.mxu0 0
        %929 = vmatmul.mubr.bf16.gmra.mxu0 %v806
        %v930 = vpop.f32.mrf.mxu0
        %v931 = vadd.f32 0.0, %v930
        %v932 = vpop.f32.mrf.mxu0
        %v933 = vpop.f32.mrf.mxu0
        %v934 = vadd.f32 0.0, %v933
        %v935 = vpop.f32.mrf.mxu0
        %936 = vmatprep.mubr.bf16.mxu0 0
        %937 = vmatmul.mubr.bf16.gmra.mxu0 %v809
        %v938 = vpop.f32.mrf.mxu0
        %v939 = vadd.f32 0.0, %v938
        %v940 = vpop.f32.mrf.mxu0
        %v941 = vpop.f32.mrf.mxu0
        %v942 = vadd.f32 0.0, %v941
        %v943 = vpop.f32.mrf.mxu0
        %944 = vmatprep.mubr.bf16.mxu0 0
        %945 = vmatmul.mubr.bf16.gmra.mxu0 %v812
        %v946 = vpop.f32.mrf.mxu0
        %v947 = vadd.f32 0.0, %v946
        %v948 = vpop.f32.mrf.mxu0
        %v949 = vpop.f32.mrf.mxu0
        %v950 = vadd.f32 0.0, %v949
        %v951 = vpop.f32.mrf.mxu0
        %952 = vmatprep.mubr.bf16.mxu0 0
        %953 = vmatmul.mubr.bf16.gmra.mxu0 %v815
        %v954 = vpop.f32.mrf.mxu0
        %v955 = vadd.f32 0.0, %v954
        %v956 = vpop.f32.mrf.mxu0
        %v957 = vpop.f32.mrf.mxu0
        %v958 = vadd.f32 0.0, %v957
        %v959 = vpop.f32.mrf.mxu0
        %960 = vmatprep.mubr.bf16.mxu0 0
        %961 = vmatmul.mubr.bf16.gmra.mxu0 %v818
        %v962 = vpop.f32.mrf.mxu0
        %v963 = vadd.f32 0.0, %v962
        %v964 = vpop.f32.mrf.mxu0
        %v965 = vpop.f32.mrf.mxu0
        %v966 = vadd.f32 0.0, %v965
        %v967 = vpop.f32.mrf.mxu0
        %968 = vmatprep.mubr.bf16.mxu0 0
        %969 = vmatmul.mubr.bf16.gmra.mxu0 %v821
        %v970 = vpop.f32.mrf.mxu0
        %v971 = vadd.f32 0.0, %v970
        %v972 = vpop.f32.mrf.mxu0
        %v973 = vpop.f32.mrf.mxu0
        %v974 = vadd.f32 0.0, %v973
        %v975 = vpop.f32.mrf.mxu0
        %976 = vmatprep.mubr.bf16.mxu0 0
        %977 = vmatmul.mubr.bf16.gmra.mxu0 %v824
        %v978 = vpop.f32.mrf.mxu0
        %v979 = vadd.f32 0.0, %v978
        %v980 = vpop.f32.mrf.mxu0
        %v981 = vpop.f32.mrf.mxu0
        %v982 = vadd.f32 0.0, %v981
        %v983 = vpop.f32.mrf.mxu0
        %984 = vmatprep.mubr.bf16.mxu0 0
        %985 = vmatmul.mubr.bf16.gmra.mxu0 %v827
        %v986 = vpop.f32.mrf.mxu0
        %v987 = vadd.f32 0.0, %v986
        %v988 = vpop.f32.mrf.mxu0
        %v989 = vpop.f32.mrf.mxu0
        %v990 = vadd.f32 0.0, %v989
        %v991 = vpop.f32.mrf.mxu0
        %992 = vmatprep.mubr.bf16.mxu0 0
        %993 = vmatmul.mubr.bf16.gmra.mxu0 %v830
        %v994 = vpop.f32.mrf.mxu0
        %v995 = vadd.f32 0.0, %v994
        %v996 = vpop.f32.mrf.mxu0
        %v997 = vpop.f32.mrf.mxu0
        %v998 = vadd.f32 0.0, %v997
        %v999 = vpop.f32.mrf.mxu0
        %1000 = vmatprep.mubr.bf16.mxu0 0
        %1001 = vmatmul.mubr.bf16.gmra.mxu0 %v833
        %v1002 = vpop.f32.mrf.mxu0
        %v1003 = vadd.f32 0.0, %v1002
        %v1004 = vpop.f32.mrf.mxu0
        %v1005 = vpop.f32.mrf.mxu0
        %v1006 = vadd.f32 0.0, %v1005
        %v1007 = vpop.f32.mrf.mxu0
        %1008 = vmatprep.mubr.bf16.mxu0 0
        %1009 = vmatmul.mubr.bf16.gmra.mxu0 %v836
        %v1010 = vpop.f32.mrf.mxu0
        %v1011 = vadd.f32 0.0, %v1010
        %v1012 = vpop.f32.mrf.mxu0
        %v1013 = vpop.f32.mrf.mxu0
        %v1014 = vadd.f32 0.0, %v1013
        %v1015 = vpop.f32.mrf.mxu0
        %1016 = vmatprep.mubr.bf16.mxu0 0
        %1017 = vmatmul.mubr.bf16.gmra.mxu0 %v839
        %v1018 = vpop.f32.mrf.mxu0
        %v1019 = vadd.f32 0.0, %v1018
        %v1020 = vpop.f32.mrf.mxu0
        %v1021 = vpop.f32.mrf.mxu0
        %v1022 = vadd.f32 0.0, %v1021
        %v1023 = vpop.f32.mrf.mxu0
        %1024 = vmatprep.mubr.bf16.mxu0 0
        %1025 = vmatmul.mubr.bf16.gmra.mxu0 %v842
        %v1026 = vpop.f32.mrf.mxu0
        %v1027 = vadd.f32 0.0, %v1026
        %v1028 = vpop.f32.mrf.mxu0
        %v1029 = vpop.f32.mrf.mxu0
        %v1030 = vadd.f32 0.0, %v1029
        %v1031 = vpop.f32.mrf.mxu0
        %1032 = vmatprep.mubr.bf16.mxu0 0
        %1033 = vmatmul.mubr.bf16.gmra.mxu0 %v845
        %v1034 = vpop.f32.mrf.mxu0
        %v1035 = vadd.f32 0.0, %v1034
        %v1036 = vpop.f32.mrf.mxu0
        %v1037 = vpop.f32.mrf.mxu0
        %v1038 = vadd.f32 0.0, %v1037
        %v1039 = vpop.f32.mrf.mxu0
        %1040 = vmatprep.mubr.bf16.mxu0 0
        %1041 = vmatmul.mubr.bf16.gmra.mxu0 %v848
        %v1042 = vpop.f32.mrf.mxu0
        %v1043 = vadd.f32 0.0, %v1042
        %v1044 = vpop.f32.mrf.mxu0
        %v1045 = vpop.f32.mrf.mxu0
        %v1046 = vadd.f32 0.0, %v1045
        %v1047 = vpop.f32.mrf.mxu0
        %1048 = vmatprep.mubr.bf16.mxu0 0
        %1049 = vmatmul.mubr.bf16.gmra.mxu0 %v851
        %v1050 = vpop.f32.mrf.mxu0
        %v1051 = vadd.f32 0.0, %v1050
        %v1052 = vpop.f32.mrf.mxu0
        %v1053 = vpop.f32.mrf.mxu0
        %v1054 = vadd.f32 0.0, %v1053
        %v1055 = vpop.f32.mrf.mxu0
        %1056 = vmatprep.mubr.bf16.mxu0 0
        %1057 = vmatmul.mubr.bf16.gmra.mxu0 %v854
        %v1058 = vpop.f32.mrf.mxu0
        %v1059 = vadd.f32 0.0, %v1058
        %v1060 = vpop.f32.mrf.mxu0
        %v1061 = vpop.f32.mrf.mxu0
        %v1062 = vadd.f32 0.0, %v1061
        %v1063 = vpop.f32.mrf.mxu0
        %1064 = vmatprep.mubr.bf16.mxu0 0
        %1065 = vmatmul.mubr.bf16.gmra.mxu0 %v857
        %v1066 = vpop.f32.mrf.mxu0
        %v1067 = vadd.f32 0.0, %v1066
        %v1068 = vpop.f32.mrf.mxu0
        %v1069 = vpop.f32.mrf.mxu0
        %v1070 = vadd.f32 0.0, %v1069
        %v1071 = vpop.f32.mrf.mxu0
        %1072 = vmatprep.mubr.bf16.mxu0 0
        %1073 = vmatmul.mubr.bf16.gmra.mxu0 %v860
        %v1074 = vpop.f32.mrf.mxu0
        %v1075 = vadd.f32 0.0, %v1074
        %v1076 = vpop.f32.mrf.mxu0
        %v1077 = vpop.f32.mrf.mxu0
        %v1078 = vadd.f32 0.0, %v1077
        %v1079 = vpop.f32.mrf.mxu0
        %1080 = vmatprep.mubr.bf16.mxu0 0
        %1081 = vmatmul.mubr.bf16.gmra.mxu0 %v863
        %v1082 = vpop.f32.mrf.mxu0
        %v1083 = vadd.f32 0.0, %v1082
        %v1084 = vpop.f32.mrf.mxu0
        %v1085 = vpop.f32.mrf.mxu0
        %v1086 = vadd.f32 0.0, %v1085
        %v1087 = vpop.f32.mrf.mxu0
        %1088 = vmatprep.mubr.bf16.mxu0 0
        %1089 = vmatmul.mubr.bf16.gmra.mxu0 %v866
        %v1090 = vpop.f32.mrf.mxu0
        %v1091 = vadd.f32 0.0, %v1090
        %v1092 = vpop.f32.mrf.mxu0
        %v1093 = vpop.f32.mrf.mxu0
        %v1094 = vadd.f32 0.0, %v1093
        %v1095 = vpop.f32.mrf.mxu0
        %1096 = vdwg.mxu0
        %v1097 = vsel %vm795, %v573, 0
        %v1099 = vsel %vm795, %v574, 0
        %v1101 = vsel %vm795, %v575, 0
        %v1103 = vsel %vm795, %v576, 0
        %v1105 = vsel %vm795, %v577, 0
        %v1107 = vsel %vm795, %v578, 0
        %v1109 = vsel %vm795, %v579, 0
        %v1111 = vsel %vm795, %v580, 0
        %v1113 = vsel %vm795, %v581, 0
        %v1115 = vsel %vm795, %v582, 0
        %v1117 = vsel %vm795, %v583, 0
        %v1119 = vsel %vm795, %v584, 0
        %v1121 = vsel %vm795, %v585, 0
        %v1123 = vsel %vm795, %v586, 0
        %v1125 = vsel %vm795, %v587, 0
        %v1127 = vsel %vm795, %v588, 0
        %v1129 = vsel %vm795, %v589, 0
        %v1131 = vsel %vm795, %v590, 0
        %v1133 = vsel %vm795, %v591, 0
        %v1135 = vsel %vm795, %v592, 0
        %v1137 = vsel %vm795, %v593, 0
        %v1139 = vsel %vm795, %v594, 0
        %v1141 = vsel %vm795, %v595, 0
        %v1143 = vsel %vm795, %v596, 0
        %v1146 = vsel %vm868, %v471, 0
        %1148 = vmatprep.subr.bf16.mxu0 0
        %1149 = vmatpush1.bf16.msra.mxu0 0
        %1150 = vmatprep.subr.bf16.mxu0 0
        %1151 = vmatpush1.bf16.msra.mxu0 0
        %1152 = vmatprep.subr.bf16.mxu0 0
        %1153 = vmatpush1.bf16.msra.mxu0 0
        %1154 = vmatprep.subr.bf16.mxu0 0
        %1155 = vmatpush1.bf16.msra.mxu0 0
        %1156 = vmatprep.subr.bf16.mxu0 0
        %1157 = vmatpush1.bf16.msra.mxu0 0
        %1158 = vmatprep.subr.bf16.mxu0 0
        %1159 = vmatpush1.bf16.msra.mxu0 0
        %1160 = vmatprep.subr.bf16.mxu0 0
        %1161 = vmatpush1.bf16.msra.mxu0 0
        %1162 = vmatprep.subr.bf16.mxu0 0
        %1163 = vmatpush1.bf16.msra.mxu0 %v1146
        %1164 = vmatprep.subr.bf16.mxu0 0
        %1165 = vmatpush2.bf16.msra.mxu0 0
        %1166 = vmatprep.subr.bf16.mxu0 0
        %1167 = vmatpush2.bf16.msra.mxu0 0
        %1168 = vmatprep.subr.bf16.mxu0 0
        %1169 = vmatpush2.bf16.msra.mxu0 0
        %1170 = vmatprep.subr.bf16.mxu0 0
        %1171 = vmatpush2.bf16.msra.mxu0 0
        %1172 = vmatprep.subr.bf16.mxu0 0
        %1173 = vmatpush2.bf16.msra.mxu0 0
        %1174 = vmatprep.subr.bf16.mxu0 0
        %1175 = vmatpush2.bf16.msra.mxu0 0
        %1176 = vmatprep.subr.bf16.mxu0 0
        %1177 = vmatpush2.bf16.msra.mxu0 0
        %1178 = vmatprep.subr.bf16.mxu0 0
        %1179 = vmatpush2.bf16.msra.mxu0 0
        %1180 = vmatprep.mubr.bf16.mxu0 0
        %1181 = vmatmul.mubr.bf16.gmra.mxu0 %v1097
        %v1182 = vpop.f32.mrf.mxu0
        %v1183 = vadd.f32 %v907, %v1182
        %v1184 = vpop.f32.mrf.mxu0
        %v1185 = vpop.f32.mrf.mxu0
        %v1186 = vadd.f32 %v910, %v1185
        %v1187 = vpop.f32.mrf.mxu0
        %1188 = vmatprep.mubr.bf16.mxu0 0
        %1189 = vmatmul.mubr.bf16.gmra.mxu0 %v1099
        %v1190 = vpop.f32.mrf.mxu0
        %v1191 = vadd.f32 %v915, %v1190
        %v1192 = vpop.f32.mrf.mxu0
        %v1193 = vpop.f32.mrf.mxu0
        %v1194 = vadd.f32 %v918, %v1193
        %v1195 = vpop.f32.mrf.mxu0
        %1196 = vmatprep.mubr.bf16.mxu0 0
        %1197 = vmatmul.mubr.bf16.gmra.mxu0 %v1101
        %v1198 = vpop.f32.mrf.mxu0
        %v1199 = vadd.f32 %v923, %v1198
        %v1200 = vpop.f32.mrf.mxu0
        %v1201 = vpop.f32.mrf.mxu0
        %v1202 = vadd.f32 %v926, %v1201
        %v1203 = vpop.f32.mrf.mxu0
        %1204 = vmatprep.mubr.bf16.mxu0 0
        %1205 = vmatmul.mubr.bf16.gmra.mxu0 %v1103
        %v1206 = vpop.f32.mrf.mxu0
        %v1207 = vadd.f32 %v931, %v1206
        %v1208 = vpop.f32.mrf.mxu0
        %v1209 = vpop.f32.mrf.mxu0
        %v1210 = vadd.f32 %v934, %v1209
        %v1211 = vpop.f32.mrf.mxu0
        %1212 = vmatprep.mubr.bf16.mxu0 0
        %1213 = vmatmul.mubr.bf16.gmra.mxu0 %v1105
        %v1214 = vpop.f32.mrf.mxu0
        %v1215 = vadd.f32 %v939, %v1214
        %v1216 = vpop.f32.mrf.mxu0
        %v1217 = vpop.f32.mrf.mxu0
        %v1218 = vadd.f32 %v942, %v1217
        %v1219 = vpop.f32.mrf.mxu0
        %1220 = vmatprep.mubr.bf16.mxu0 0
        %1221 = vmatmul.mubr.bf16.gmra.mxu0 %v1107
        %v1222 = vpop.f32.mrf.mxu0
        %v1223 = vadd.f32 %v947, %v1222
        %v1224 = vpop.f32.mrf.mxu0
        %v1225 = vpop.f32.mrf.mxu0
        %v1226 = vadd.f32 %v950, %v1225
        %v1227 = vpop.f32.mrf.mxu0
        %1228 = vmatprep.mubr.bf16.mxu0 0
        %1229 = vmatmul.mubr.bf16.gmra.mxu0 %v1109
        %v1230 = vpop.f32.mrf.mxu0
        %v1231 = vadd.f32 %v955, %v1230
        %v1232 = vpop.f32.mrf.mxu0
        %v1233 = vpop.f32.mrf.mxu0
        %v1234 = vadd.f32 %v958, %v1233
        %v1235 = vpop.f32.mrf.mxu0
        %1236 = vmatprep.mubr.bf16.mxu0 0
        %1237 = vmatmul.mubr.bf16.gmra.mxu0 %v1111
        %v1238 = vpop.f32.mrf.mxu0
        %v1239 = vadd.f32 %v963, %v1238
        %v1240 = vpop.f32.mrf.mxu0
        %v1241 = vpop.f32.mrf.mxu0
        %v1242 = vadd.f32 %v966, %v1241
        %v1243 = vpop.f32.mrf.mxu0
        %1244 = vmatprep.mubr.bf16.mxu0 0
        %1245 = vmatmul.mubr.bf16.gmra.mxu0 %v1113
        %v1246 = vpop.f32.mrf.mxu0
        %v1247 = vadd.f32 %v971, %v1246
        %v1248 = vpop.f32.mrf.mxu0
        %v1249 = vpop.f32.mrf.mxu0
        %v1250 = vadd.f32 %v974, %v1249
        %v1251 = vpop.f32.mrf.mxu0
        %1252 = vmatprep.mubr.bf16.mxu0 0
        %1253 = vmatmul.mubr.bf16.gmra.mxu0 %v1115
        %v1254 = vpop.f32.mrf.mxu0
        %v1255 = vadd.f32 %v979, %v1254
        %v1256 = vpop.f32.mrf.mxu0
        %v1257 = vpop.f32.mrf.mxu0
        %v1258 = vadd.f32 %v982, %v1257
        %v1259 = vpop.f32.mrf.mxu0
        %1260 = vmatprep.mubr.bf16.mxu0 0
        %1261 = vmatmul.mubr.bf16.gmra.mxu0 %v1117
        %v1262 = vpop.f32.mrf.mxu0
        %v1263 = vadd.f32 %v987, %v1262
        %v1264 = vpop.f32.mrf.mxu0
        %v1265 = vpop.f32.mrf.mxu0
        %v1266 = vadd.f32 %v990, %v1265
        %v1267 = vpop.f32.mrf.mxu0
        %1268 = vmatprep.mubr.bf16.mxu0 0
        %1269 = vmatmul.mubr.bf16.gmra.mxu0 %v1119
        %v1270 = vpop.f32.mrf.mxu0
        %v1271 = vadd.f32 %v995, %v1270
        %v1272 = vpop.f32.mrf.mxu0
        %v1273 = vpop.f32.mrf.mxu0
        %v1274 = vadd.f32 %v998, %v1273
        %v1275 = vpop.f32.mrf.mxu0
        %1276 = vmatprep.mubr.bf16.mxu0 0
        %1277 = vmatmul.mubr.bf16.gmra.mxu0 %v1121
        %v1278 = vpop.f32.mrf.mxu0
        %v1279 = vadd.f32 %v1003, %v1278
        %v1280 = vpop.f32.mrf.mxu0
        %v1281 = vpop.f32.mrf.mxu0
        %v1282 = vadd.f32 %v1006, %v1281
        %v1283 = vpop.f32.mrf.mxu0
        %1284 = vmatprep.mubr.bf16.mxu0 0
        %1285 = vmatmul.mubr.bf16.gmra.mxu0 %v1123
        %v1286 = vpop.f32.mrf.mxu0
        %v1287 = vadd.f32 %v1011, %v1286
        %v1288 = vpop.f32.mrf.mxu0
        %v1289 = vpop.f32.mrf.mxu0
        %v1290 = vadd.f32 %v1014, %v1289
        %v1291 = vpop.f32.mrf.mxu0
        %1292 = vmatprep.mubr.bf16.mxu0 0
        %1293 = vmatmul.mubr.bf16.gmra.mxu0 %v1125
        %v1294 = vpop.f32.mrf.mxu0
        %v1295 = vadd.f32 %v1019, %v1294
        %v1296 = vpop.f32.mrf.mxu0
        %v1297 = vpop.f32.mrf.mxu0
        %v1298 = vadd.f32 %v1022, %v1297
        %v1299 = vpop.f32.mrf.mxu0
        %1300 = vmatprep.mubr.bf16.mxu0 0
        %1301 = vmatmul.mubr.bf16.gmra.mxu0 %v1127
        %v1302 = vpop.f32.mrf.mxu0
        %v1303 = vadd.f32 %v1027, %v1302
        %v1304 = vpop.f32.mrf.mxu0
        %v1305 = vpop.f32.mrf.mxu0
        %v1306 = vadd.f32 %v1030, %v1305
        %v1307 = vpop.f32.mrf.mxu0
        %1308 = vmatprep.mubr.bf16.mxu0 0
        %1309 = vmatmul.mubr.bf16.gmra.mxu0 %v1129
        %v1310 = vpop.f32.mrf.mxu0
        %v1311 = vadd.f32 %v1035, %v1310
        %v1312 = vpop.f32.mrf.mxu0
        %v1313 = vpop.f32.mrf.mxu0
        %v1314 = vadd.f32 %v1038, %v1313
        %v1315 = vpop.f32.mrf.mxu0
        %1316 = vmatprep.mubr.bf16.mxu0 0
        %1317 = vmatmul.mubr.bf16.gmra.mxu0 %v1131
        %v1318 = vpop.f32.mrf.mxu0
        %v1319 = vadd.f32 %v1043, %v1318
        %v1320 = vpop.f32.mrf.mxu0
        %v1321 = vpop.f32.mrf.mxu0
        %v1322 = vadd.f32 %v1046, %v1321
        %v1323 = vpop.f32.mrf.mxu0
        %1324 = vmatprep.mubr.bf16.mxu0 0
        %1325 = vmatmul.mubr.bf16.gmra.mxu0 %v1133
        %v1326 = vpop.f32.mrf.mxu0
        %v1327 = vadd.f32 %v1051, %v1326
        %v1328 = vpop.f32.mrf.mxu0
        %v1329 = vpop.f32.mrf.mxu0
        %v1330 = vadd.f32 %v1054, %v1329
        %v1331 = vpop.f32.mrf.mxu0
        %1332 = vmatprep.mubr.bf16.mxu0 0
        %1333 = vmatmul.mubr.bf16.gmra.mxu0 %v1135
        %v1334 = vpop.f32.mrf.mxu0
        %v1335 = vadd.f32 %v1059, %v1334
        %v1336 = vpop.f32.mrf.mxu0
        %v1337 = vpop.f32.mrf.mxu0
        %v1338 = vadd.f32 %v1062, %v1337
        %v1339 = vpop.f32.mrf.mxu0
        %1340 = vmatprep.mubr.bf16.mxu0 0
        %1341 = vmatmul.mubr.bf16.gmra.mxu0 %v1137
        %v1342 = vpop.f32.mrf.mxu0
        %v1343 = vadd.f32 %v1067, %v1342
        %v1344 = vpop.f32.mrf.mxu0
        %v1345 = vpop.f32.mrf.mxu0
        %v1346 = vadd.f32 %v1070, %v1345
        %v1347 = vpop.f32.mrf.mxu0
        %1348 = vmatprep.mubr.bf16.mxu0 0
        %1349 = vmatmul.mubr.bf16.gmra.mxu0 %v1139
        %v1350 = vpop.f32.mrf.mxu0
        %v1351 = vadd.f32 %v1075, %v1350
        %v1352 = vpop.f32.mrf.mxu0
        %v1353 = vpop.f32.mrf.mxu0
        %v1354 = vadd.f32 %v1078, %v1353
        %v1355 = vpop.f32.mrf.mxu0
        %1356 = vmatprep.mubr.bf16.mxu0 0
        %1357 = vmatmul.mubr.bf16.gmra.mxu0 %v1141
        %v1358 = vpop.f32.mrf.mxu0
        %v1359 = vadd.f32 %v1083, %v1358
        %v1360 = vpop.f32.mrf.mxu0
        %v1361 = vpop.f32.mrf.mxu0
        %v1362 = vadd.f32 %v1086, %v1361
        %v1363 = vpop.f32.mrf.mxu0
        %1364 = vmatprep.mubr.bf16.mxu0 0
        %1365 = vmatmul.mubr.bf16.gmra.mxu0 %v1143
        %v1366 = vpop.f32.mrf.mxu0
        %v1367 = vadd.f32 %v1091, %v1366
        %v1368 = vpop.f32.mrf.mxu0
        %v1369 = vpop.f32.mrf.mxu0
        %v1370 = vadd.f32 %v1094, %v1369
        %v1371 = vpop.f32.mrf.mxu0
        %1372 = vdwg.mxu0
        %v1373 = vld [vmem:[%s344] sm:$0xe]
        %s1374 = scalar_lea.vmem %s351, 8
        %v1375 = vld [vmem:[%s1374] sm:$0xf]
        %v1377 = vunpack.c.l.b16 %v1373
        %v1378 = vpack.c.b16 %v525, %v1377
        %vm1379 = vcmask 1046528
        %v1380 = vrot.slane %v1378, 1
        %v1381 = vrot.slane %v574, 1
        %v1382 = vsel %vm1379, %v1380, %v1381
        %v1383 = vrot.slane %v575, 1
        %v1384 = vsel %vm1379, %v1381, %v1383
        %v1385 = vrot.slane %v576, 1
        %v1386 = vsel %vm1379, %v1383, %v1385
        %v1387 = vrot.slane %v577, 1
        %v1388 = vsel %vm1379, %v1385, %v1387
        %v1389 = vrot.slane %v578, 1
        %v1390 = vsel %vm1379, %v1387, %v1389
        %v1391 = vrot.slane %v579, 1
        %v1392 = vsel %vm1379, %v1389, %v1391
        %v1393 = vrot.slane %v580, 1
        %v1394 = vsel %vm1379, %v1391, %v1393
        %v1395 = vrot.slane %v581, 1
        %v1396 = vsel %vm1379, %v1393, %v1395
        %v1397 = vrot.slane %v582, 1
        %v1398 = vsel %vm1379, %v1395, %v1397
        %v1399 = vrot.slane %v583, 1
        %v1400 = vsel %vm1379, %v1397, %v1399
        %v1401 = vrot.slane %v584, 1
        %v1402 = vsel %vm1379, %v1399, %v1401
        %v1403 = vrot.slane %v585, 1
        %v1404 = vsel %vm1379, %v1401, %v1403
        %v1405 = vrot.slane %v586, 1
        %v1406 = vsel %vm1379, %v1403, %v1405
        %v1407 = vrot.slane %v587, 1
        %v1408 = vsel %vm1379, %v1405, %v1407
        %v1409 = vrot.slane %v588, 1
        %v1410 = vsel %vm1379, %v1407, %v1409
        %v1411 = vrot.slane %v589, 1
        %v1412 = vsel %vm1379, %v1409, %v1411
        %v1413 = vrot.slane %v590, 1
        %v1414 = vsel %vm1379, %v1411, %v1413
        %v1415 = vrot.slane %v591, 1
        %v1416 = vsel %vm1379, %v1413, %v1415
        %v1417 = vrot.slane %v592, 1
        %v1418 = vsel %vm1379, %v1415, %v1417
        %v1419 = vrot.slane %v593, 1
        %v1420 = vsel %vm1379, %v1417, %v1419
        %v1421 = vrot.slane %v594, 1
        %v1422 = vsel %vm1379, %v1419, %v1421
        %v1423 = vrot.slane %v595, 1
        %v1424 = vsel %vm1379, %v1421, %v1423
        %v1425 = vrot.slane %v596, 1
        %v1426 = vsel %vm1379, %v1423, %v1425
        %v1427 = vrot.slane %v597, 1
        %v1428 = vsel %vm1379, %v1425, %v1427
        %v1430 = vsel %vm795, %v1382, 0
        %v1433 = vsel %vm795, %v1384, 0
        %v1436 = vsel %vm795, %v1386, 0
        %v1439 = vsel %vm795, %v1388, 0
        %v1442 = vsel %vm795, %v1390, 0
        %v1445 = vsel %vm795, %v1392, 0
        %v1448 = vsel %vm795, %v1394, 0
        %v1451 = vsel %vm795, %v1396, 0
        %v1454 = vsel %vm795, %v1398, 0
        %v1457 = vsel %vm795, %v1400, 0
        %v1460 = vsel %vm795, %v1402, 0
        %v1463 = vsel %vm795, %v1404, 0
        %v1466 = vsel %vm795, %v1406, 0
        %v1469 = vsel %vm795, %v1408, 0
        %v1472 = vsel %vm795, %v1410, 0
        %v1475 = vsel %vm795, %v1412, 0
        %v1478 = vsel %vm795, %v1414, 0
        %v1481 = vsel %vm795, %v1416, 0
        %v1484 = vsel %vm795, %v1418, 0
        %v1487 = vsel %vm795, %v1420, 0
        %v1490 = vsel %vm795, %v1422, 0
        %v1493 = vsel %vm795, %v1424, 0
        %v1496 = vsel %vm795, %v1426, 0
        %v1499 = vsel %vm795, %v1428, 0
        %v1502 = vsel %vm868, %v1375, 0
        %1504 = vmatprep.subr.bf16.mxu0 0
        %1505 = vmatpush1.bf16.msra.mxu0 0
        %1506 = vmatprep.subr.bf16.mxu0 0
        %1507 = vmatpush1.bf16.msra.mxu0 0
        %1508 = vmatprep.subr.bf16.mxu0 0
        %1509 = vmatpush1.bf16.msra.mxu0 0
        %1510 = vmatprep.subr.bf16.mxu0 0
        %1511 = vmatpush1.bf16.msra.mxu0 0
        %1512 = vmatprep.subr.bf16.mxu0 0
        %1513 = vmatpush1.bf16.msra.mxu0 0
        %1514 = vmatprep.subr.bf16.mxu0 0
        %1515 = vmatpush1.bf16.msra.mxu0 0
        %1516 = vmatprep.subr.bf16.mxu0 0
        %1517 = vmatpush1.bf16.msra.mxu0 0
        %1518 = vmatprep.subr.bf16.mxu0 0
        %1519 = vmatpush1.bf16.msra.mxu0 %v1502
        %1520 = vmatprep.subr.bf16.mxu0 0
        %1521 = vmatpush2.bf16.msra.mxu0 0
        %1522 = vmatprep.subr.bf16.mxu0 0
        %1523 = vmatpush2.bf16.msra.mxu0 0
        %1524 = vmatprep.subr.bf16.mxu0 0
        %1525 = vmatpush2.bf16.msra.mxu0 0
        %1526 = vmatprep.subr.bf16.mxu0 0
        %1527 = vmatpush2.bf16.msra.mxu0 0
        %1528 = vmatprep.subr.bf16.mxu0 0
        %1529 = vmatpush2.bf16.msra.mxu0 0
        %1530 = vmatprep.subr.bf16.mxu0 0
        %1531 = vmatpush2.bf16.msra.mxu0 0
        %1532 = vmatprep.subr.bf16.mxu0 0
        %1533 = vmatpush2.bf16.msra.mxu0 0
        %1534 = vmatprep.subr.bf16.mxu0 0
        %1535 = vmatpush2.bf16.msra.mxu0 0
        %1536 = vmatprep.mubr.bf16.mxu0 0
        %1537 = vmatmul.mubr.bf16.gmra.mxu0 %v1430
        %v1538 = vpop.f32.mrf.mxu0
        %v1539 = vadd.f32 0.0, %v1538
        %v1540 = vpop.f32.mrf.mxu0
        %v1541 = vpop.f32.mrf.mxu0
        %v1542 = vadd.f32 0.0, %v1541
        %v1543 = vpop.f32.mrf.mxu0
        %1544 = vmatprep.mubr.bf16.mxu0 0
        %1545 = vmatmul.mubr.bf16.gmra.mxu0 %v1433
        %v1546 = vpop.f32.mrf.mxu0
        %v1547 = vadd.f32 0.0, %v1546
        %v1548 = vpop.f32.mrf.mxu0
        %v1549 = vpop.f32.mrf.mxu0
        %v1550 = vadd.f32 0.0, %v1549
        %v1551 = vpop.f32.mrf.mxu0
        %1552 = vmatprep.mubr.bf16.mxu0 0
        %1553 = vmatmul.mubr.bf16.gmra.mxu0 %v1436
        %v1554 = vpop.f32.mrf.mxu0
        %v1555 = vadd.f32 0.0, %v1554
        %v1556 = vpop.f32.mrf.mxu0
        %v1557 = vpop.f32.mrf.mxu0
        %v1558 = vadd.f32 0.0, %v1557
        %v1559 = vpop.f32.mrf.mxu0
        %1560 = vmatprep.mubr.bf16.mxu0 0
        %1561 = vmatmul.mubr.bf16.gmra.mxu0 %v1439
        %v1562 = vpop.f32.mrf.mxu0
        %v1563 = vadd.f32 0.0, %v1562
        %v1564 = vpop.f32.mrf.mxu0
        %v1565 = vpop.f32.mrf.mxu0
        %v1566 = vadd.f32 0.0, %v1565
        %v1567 = vpop.f32.mrf.mxu0
        %1568 = vmatprep.mubr.bf16.mxu0 0
        %1569 = vmatmul.mubr.bf16.gmra.mxu0 %v1442
        %v1570 = vpop.f32.mrf.mxu0
        %v1571 = vadd.f32 0.0, %v1570
        %v1572 = vpop.f32.mrf.mxu0
        %v1573 = vpop.f32.mrf.mxu0
        %v1574 = vadd.f32 0.0, %v1573
        %v1575 = vpop.f32.mrf.mxu0
        %1576 = vmatprep.mubr.bf16.mxu0 0
        %1577 = vmatmul.mubr.bf16.gmra.mxu0 %v1445
        %v1578 = vpop.f32.mrf.mxu0
        %v1579 = vadd.f32 0.0, %v1578
        %v1580 = vpop.f32.mrf.mxu0
        %v1581 = vpop.f32.mrf.mxu0
        %v1582 = vadd.f32 0.0, %v1581
        %v1583 = vpop.f32.mrf.mxu0
        %1584 = vmatprep.mubr.bf16.mxu0 0
        %1585 = vmatmul.mubr.bf16.gmra.mxu0 %v1448
        %v1586 = vpop.f32.mrf.mxu0
        %v1587 = vadd.f32 0.0, %v1586
        %v1588 = vpop.f32.mrf.mxu0
        %v1589 = vpop.f32.mrf.mxu0
        %v1590 = vadd.f32 0.0, %v1589
        %v1591 = vpop.f32.mrf.mxu0
        %1592 = vmatprep.mubr.bf16.mxu0 0
        %1593 = vmatmul.mubr.bf16.gmra.mxu0 %v1451
        %v1594 = vpop.f32.mrf.mxu0
        %v1595 = vadd.f32 0.0, %v1594
        %v1596 = vpop.f32.mrf.mxu0
        %v1597 = vpop.f32.mrf.mxu0
        %v1598 = vadd.f32 0.0, %v1597
        %v1599 = vpop.f32.mrf.mxu0
        %1600 = vmatprep.mubr.bf16.mxu0 0
        %1601 = vmatmul.mubr.bf16.gmra.mxu0 %v1454
        %v1602 = vpop.f32.mrf.mxu0
        %v1603 = vadd.f32 0.0, %v1602
        %v1604 = vpop.f32.mrf.mxu0
        %v1605 = vpop.f32.mrf.mxu0
        %v1606 = vadd.f32 0.0, %v1605
        %v1607 = vpop.f32.mrf.mxu0
        %1608 = vmatprep.mubr.bf16.mxu0 0
        %1609 = vmatmul.mubr.bf16.gmra.mxu0 %v1457
        %v1610 = vpop.f32.mrf.mxu0
        %v1611 = vadd.f32 0.0, %v1610
        %v1612 = vpop.f32.mrf.mxu0
        %v1613 = vpop.f32.mrf.mxu0
        %v1614 = vadd.f32 0.0, %v1613
        %v1615 = vpop.f32.mrf.mxu0
        %1616 = vmatprep.mubr.bf16.mxu0 0
        %1617 = vmatmul.mubr.bf16.gmra.mxu0 %v1460
        %v1618 = vpop.f32.mrf.mxu0
        %v1619 = vadd.f32 0.0, %v1618
        %v1620 = vpop.f32.mrf.mxu0
        %v1621 = vpop.f32.mrf.mxu0
        %v1622 = vadd.f32 0.0, %v1621
        %v1623 = vpop.f32.mrf.mxu0
        %1624 = vmatprep.mubr.bf16.mxu0 0
        %1625 = vmatmul.mubr.bf16.gmra.mxu0 %v1463
        %v1626 = vpop.f32.mrf.mxu0
        %v1627 = vadd.f32 0.0, %v1626
        %v1628 = vpop.f32.mrf.mxu0
        %v1629 = vpop.f32.mrf.mxu0
        %v1630 = vadd.f32 0.0, %v1629
        %v1631 = vpop.f32.mrf.mxu0
        %1632 = vmatprep.mubr.bf16.mxu0 0
        %1633 = vmatmul.mubr.bf16.gmra.mxu0 %v1466
        %v1634 = vpop.f32.mrf.mxu0
        %v1635 = vadd.f32 0.0, %v1634
        %v1636 = vpop.f32.mrf.mxu0
        %v1637 = vpop.f32.mrf.mxu0
        %v1638 = vadd.f32 0.0, %v1637
        %v1639 = vpop.f32.mrf.mxu0
        %1640 = vmatprep.mubr.bf16.mxu0 0
        %1641 = vmatmul.mubr.bf16.gmra.mxu0 %v1469
        %v1642 = vpop.f32.mrf.mxu0
        %v1643 = vadd.f32 0.0, %v1642
        %v1644 = vpop.f32.mrf.mxu0
        %v1645 = vpop.f32.mrf.mxu0
        %v1646 = vadd.f32 0.0, %v1645
        %v1647 = vpop.f32.mrf.mxu0
        %1648 = vmatprep.mubr.bf16.mxu0 0
        %1649 = vmatmul.mubr.bf16.gmra.mxu0 %v1472
        %v1650 = vpop.f32.mrf.mxu0
        %v1651 = vadd.f32 0.0, %v1650
        %v1652 = vpop.f32.mrf.mxu0
        %v1653 = vpop.f32.mrf.mxu0
        %v1654 = vadd.f32 0.0, %v1653
        %v1655 = vpop.f32.mrf.mxu0
        %1656 = vmatprep.mubr.bf16.mxu0 0
        %1657 = vmatmul.mubr.bf16.gmra.mxu0 %v1475
        %v1658 = vpop.f32.mrf.mxu0
        %v1659 = vadd.f32 0.0, %v1658
        %v1660 = vpop.f32.mrf.mxu0
        %v1661 = vpop.f32.mrf.mxu0
        %v1662 = vadd.f32 0.0, %v1661
        %v1663 = vpop.f32.mrf.mxu0
        %1664 = vmatprep.mubr.bf16.mxu0 0
        %1665 = vmatmul.mubr.bf16.gmra.mxu0 %v1478
        %v1666 = vpop.f32.mrf.mxu0
        %v1667 = vadd.f32 0.0, %v1666
        %v1668 = vpop.f32.mrf.mxu0
        %v1669 = vpop.f32.mrf.mxu0
        %v1670 = vadd.f32 0.0, %v1669
        %v1671 = vpop.f32.mrf.mxu0
        %1672 = vmatprep.mubr.bf16.mxu0 0
        %1673 = vmatmul.mubr.bf16.gmra.mxu0 %v1481
        %v1674 = vpop.f32.mrf.mxu0
        %v1675 = vadd.f32 0.0, %v1674
        %v1676 = vpop.f32.mrf.mxu0
        %v1677 = vpop.f32.mrf.mxu0
        %v1678 = vadd.f32 0.0, %v1677
        %v1679 = vpop.f32.mrf.mxu0
        %1680 = vmatprep.mubr.bf16.mxu0 0
        %1681 = vmatmul.mubr.bf16.gmra.mxu0 %v1484
        %v1682 = vpop.f32.mrf.mxu0
        %v1683 = vadd.f32 0.0, %v1682
        %v1684 = vpop.f32.mrf.mxu0
        %v1685 = vpop.f32.mrf.mxu0
        %v1686 = vadd.f32 0.0, %v1685
        %v1687 = vpop.f32.mrf.mxu0
        %1688 = vmatprep.mubr.bf16.mxu0 0
        %1689 = vmatmul.mubr.bf16.gmra.mxu0 %v1487
        %v1690 = vpop.f32.mrf.mxu0
        %v1691 = vadd.f32 0.0, %v1690
        %v1692 = vpop.f32.mrf.mxu0
        %v1693 = vpop.f32.mrf.mxu0
        %v1694 = vadd.f32 0.0, %v1693
        %v1695 = vpop.f32.mrf.mxu0
        %1696 = vmatprep.mubr.bf16.mxu0 0
        %1697 = vmatmul.mubr.bf16.gmra.mxu0 %v1490
        %v1698 = vpop.f32.mrf.mxu0
        %v1699 = vadd.f32 0.0, %v1698
        %v1700 = vpop.f32.mrf.mxu0
        %v1701 = vpop.f32.mrf.mxu0
        %v1702 = vadd.f32 0.0, %v1701
        %v1703 = vpop.f32.mrf.mxu0
        %1704 = vmatprep.mubr.bf16.mxu0 0
        %1705 = vmatmul.mubr.bf16.gmra.mxu0 %v1493
        %v1706 = vpop.f32.mrf.mxu0
        %v1707 = vadd.f32 0.0, %v1706
        %v1708 = vpop.f32.mrf.mxu0
        %v1709 = vpop.f32.mrf.mxu0
        %v1710 = vadd.f32 0.0, %v1709
        %v1711 = vpop.f32.mrf.mxu0
        %1712 = vmatprep.mubr.bf16.mxu0 0
        %1713 = vmatmul.mubr.bf16.gmra.mxu0 %v1496
        %v1714 = vpop.f32.mrf.mxu0
        %v1715 = vadd.f32 0.0, %v1714
        %v1716 = vpop.f32.mrf.mxu0
        %v1717 = vpop.f32.mrf.mxu0
        %v1718 = vadd.f32 0.0, %v1717
        %v1719 = vpop.f32.mrf.mxu0
        %1720 = vmatprep.mubr.bf16.mxu0 0
        %1721 = vmatmul.mubr.bf16.gmra.mxu0 %v1499
        %v1722 = vpop.f32.mrf.mxu0
        %v1723 = vadd.f32 0.0, %v1722
        %v1724 = vpop.f32.mrf.mxu0
        %v1725 = vpop.f32.mrf.mxu0
        %v1726 = vadd.f32 0.0, %v1725
        %v1727 = vpop.f32.mrf.mxu0
        %1728 = vdwg.mxu0
        %v1729 = vadd.f32 %v1183, %v1539
        %v1730 = vadd.f32 %v1186, %v1542
        %v1731 = vadd.f32 %v1191, %v1547
        %v1732 = vadd.f32 %v1194, %v1550
        %v1733 = vadd.f32 %v1199, %v1555
        %v1734 = vadd.f32 %v1202, %v1558
        %v1735 = vadd.f32 %v1207, %v1563
        %v1736 = vadd.f32 %v1210, %v1566
        %v1737 = vadd.f32 %v1215, %v1571
        %v1738 = vadd.f32 %v1218, %v1574
        %v1739 = vadd.f32 %v1223, %v1579
        %v1740 = vadd.f32 %v1226, %v1582
        %v1741 = vadd.f32 %v1231, %v1587
        %v1742 = vadd.f32 %v1234, %v1590
        %v1743 = vadd.f32 %v1239, %v1595
        %v1744 = vadd.f32 %v1242, %v1598
        %v1745 = vadd.f32 %v1247, %v1603
        %v1746 = vadd.f32 %v1250, %v1606
        %v1747 = vadd.f32 %v1255, %v1611
        %v1748 = vadd.f32 %v1258, %v1614
        %v1749 = vadd.f32 %v1263, %v1619
        %v1750 = vadd.f32 %v1266, %v1622
        %v1751 = vadd.f32 %v1271, %v1627
        %v1752 = vadd.f32 %v1274, %v1630
        %v1753 = vadd.f32 %v1279, %v1635
        %v1754 = vadd.f32 %v1282, %v1638
        %v1755 = vadd.f32 %v1287, %v1643
        %v1756 = vadd.f32 %v1290, %v1646
        %v1757 = vadd.f32 %v1295, %v1651
        %v1758 = vadd.f32 %v1298, %v1654
        %v1759 = vadd.f32 %v1303, %v1659
        %v1760 = vadd.f32 %v1306, %v1662
        %v1761 = vadd.f32 %v1311, %v1667
        %v1762 = vadd.f32 %v1314, %v1670
        %v1763 = vadd.f32 %v1319, %v1675
        %v1764 = vadd.f32 %v1322, %v1678
        %v1765 = vadd.f32 %v1327, %v1683
        %v1766 = vadd.f32 %v1330, %v1686
        %v1767 = vadd.f32 %v1335, %v1691
        %v1768 = vadd.f32 %v1338, %v1694
        %v1769 = vadd.f32 %v1343, %v1699
        %v1770 = vadd.f32 %v1346, %v1702
        %v1771 = vadd.f32 %v1351, %v1707
        %v1772 = vadd.f32 %v1354, %v1710
        %v1773 = vadd.f32 %v1359, %v1715
        %v1774 = vadd.f32 %v1362, %v1718
        %v1775 = vadd.f32 %v1367, %v1723
        %v1776 = vadd.f32 %v1370, %v1726
        %v1777 = vld [vmem:[%s344 + $0xc] sm:$0xf]
        %v1778 = vld [vmem:[%s344 + $0x10] sm:$0xf]
        %v1779 = vld [vmem:[%s344 + $0x14] sm:$0xf]
        %v1780 = vld [vmem:[%s344 + $0x18] sm:$0xf]
        %v1781 = vld [vmem:[%s344 + $0x1c] sm:$0xf]
        %v1782 = vld [vmem:[%s344 + $0x20] sm:$0xf]
        %v1783 = vld [vmem:[%s344 + $0x24] sm:$0xf]
        %v1784 = vld [vmem:[%s344 + $0x28] sm:$0xf]
        %v1785 = vld [vmem:[%s344 + $0x2c] sm:$0xf]
        %v1786 = vld [vmem:[%s344 + $0x30] sm:$0xf]
        %v1787 = vld [vmem:[%s344 + $0x34] sm:$0xf]
        %v1788 = vld [vmem:[%s344 + $0x38] sm:$0xf]
        %v1789 = vld [vmem:[%s344 + $0x3c] sm:$0xf]
        %v1790 = vld [vmem:[%s344 + $0x40] sm:$0xf]
        %v1791 = vld [vmem:[%s344 + $0x44] sm:$0xf]
        %v1792 = vld [vmem:[%s344 + $0x48] sm:$0xf]
        %v1793 = vld [vmem:[%s344 + $0x4c] sm:$0xf]
        %v1794 = vld [vmem:[%s344 + $0x50] sm:$0xf]
        %v1795 = vld [vmem:[%s344 + $0x54] sm:$0xf]
        %v1796 = vld [vmem:[%s344 + $0x58] sm:$0xf]
        %v1797 = vld [vmem:[%s344 + $0x5c] sm:$0xf]
        %v1798 = vld [vmem:[%s344 + $0x60] sm:$0xf]
        %v1799 = vld [vmem:[%s344 + $0x64] sm:$0xf]
        %v1800 = vld [vmem:[%s344 + $0x68] sm:$0xf]
        %v1801 = vld [vmem:[%s344 + $0x6c] sm:$0xf]
        %v1802 = vld [vmem:[%s344 + $0x70] sm:$0xf]
        %v1803 = vld [vmem:[%s344 + $0x74] sm:$0xf]
        %v1804 = vld [vmem:[%s344 + $0x78] sm:$0xf]
        %v1805 = vld [vmem:[%s344 + $0x7c] sm:$0xf]
        %v1806 = vld [vmem:[%s344 + $0x80] sm:$0xf]
        %v1807 = vld [vmem:[%s344 + $0x84] sm:$0xf]
        %v1808 = vld [vmem:[%s344 + $0x88] sm:$0xf]
        %v1809 = vld [vmem:[%s344 + $0x8c] sm:$0xf]
        %v1810 = vld [vmem:[%s344 + $0x90] sm:$0xf]
        %v1811 = vld [vmem:[%s344 + $0x94] sm:$0xf]
        %v1812 = vld [vmem:[%s344 + $0x98] sm:$0xf]
        %v1813 = vld [vmem:[%s344 + $0x9c] sm:$0xf]
        %v1814 = vld [vmem:[%s344 + $0xa0] sm:$0xf]
        %v1815 = vld [vmem:[%s344 + $0xa4] sm:$0xf]
        %v1816 = vld [vmem:[%s344 + $0xa8] sm:$0xf]
        %v1817 = vld [vmem:[%s344 + $0xac] sm:$0xf]
        %v1818 = vld [vmem:[%s344 + $0xb0] sm:$0xf]
        %v1819 = vld [vmem:[%s344 + $0xb4] sm:$0xf]
        %v1820 = vld [vmem:[%s344 + $0xb8] sm:$0xf]
        %v1821 = vld [vmem:[%s344 + $0xbc] sm:$0xf]
        %v1822 = vld [vmem:[%s344 + $0xc0] sm:$0xf]
        %v1823 = vld [vmem:[%s344 + $0xc4] sm:$0xf]
        %v1824 = vld [vmem:[%s344 + $0xc8] sm:$0xf]
        %s1825 = scalar_lea.vmem %s351, 12
        %v1826 = vld [vmem:[%s1825] sm:$0xf]
        %v1875 = vunpack.c.l.b16 %v1777
        %v1876 = vunpack.c.l.b16 %v1778
        %v1877 = vunpack.c.l.b16 %v1779
        %v1878 = vunpack.c.l.b16 %v1780
        %v1879 = vunpack.c.l.b16 %v1781
        %v1880 = vunpack.c.l.b16 %v1782
        %v1881 = vunpack.c.l.b16 %v1783
        %v1882 = vunpack.c.l.b16 %v1784
        %v1883 = vunpack.c.l.b16 %v1785
        %v1884 = vunpack.c.l.b16 %v1786
        %v1885 = vunpack.c.l.b16 %v1787
        %v1886 = vunpack.c.l.b16 %v1788
        %v1887 = vunpack.c.l.b16 %v1789
        %v1888 = vunpack.c.l.b16 %v1790
        %v1889 = vunpack.c.l.b16 %v1791
        %v1890 = vunpack.c.l.b16 %v1792
        %v1891 = vunpack.c.l.b16 %v1793
        %v1892 = vunpack.c.l.b16 %v1794
        %v1893 = vunpack.c.l.b16 %v1795
        %v1894 = vunpack.c.l.b16 %v1796
        %v1895 = vunpack.c.l.b16 %v1797
        %v1896 = vunpack.c.l.b16 %v1798
        %v1897 = vunpack.c.l.b16 %v1799
        %v1898 = vunpack.c.l.b16 %v1800
        %v1899 = vunpack.c.l.b16 %v1801
        %v1900 = vunpack.c.l.b16 %v1802
        %v1901 = vunpack.c.l.b16 %v1803
        %v1902 = vunpack.c.l.b16 %v1804
        %v1903 = vunpack.c.l.b16 %v1805
        %v1904 = vunpack.c.l.b16 %v1806
        %v1905 = vunpack.c.l.b16 %v1807
        %v1906 = vunpack.c.l.b16 %v1808
        %v1907 = vunpack.c.l.b16 %v1809
        %v1908 = vunpack.c.l.b16 %v1810
        %v1909 = vunpack.c.l.b16 %v1811
        %v1910 = vunpack.c.l.b16 %v1812
        %v1911 = vunpack.c.l.b16 %v1813
        %v1912 = vunpack.c.l.b16 %v1814
        %v1913 = vunpack.c.l.b16 %v1815
        %v1914 = vunpack.c.l.b16 %v1816
        %v1915 = vunpack.c.l.b16 %v1817
        %v1916 = vunpack.c.l.b16 %v1818
        %v1917 = vunpack.c.l.b16 %v1819
        %v1918 = vunpack.c.l.b16 %v1820
        %v1919 = vunpack.c.l.b16 %v1821
        %v1920 = vunpack.c.l.b16 %v1822
        %v1921 = vunpack.c.l.b16 %v1823
        %v1922 = vunpack.c.l.b16 %v1824
        %v1923 = vpack.c.b16 %v1876, %v1875
        %v1924 = vpack.c.b16 %v1878, %v1877
        %v1925 = vpack.c.b16 %v1880, %v1879
        %v1926 = vpack.c.b16 %v1882, %v1881
        %v1927 = vpack.c.b16 %v1884, %v1883
        %v1928 = vpack.c.b16 %v1886, %v1885
        %v1929 = vpack.c.b16 %v1888, %v1887
        %v1930 = vpack.c.b16 %v1890, %v1889
        %v1931 = vpack.c.b16 %v1892, %v1891
        %v1932 = vpack.c.b16 %v1894, %v1893
        %v1933 = vpack.c.b16 %v1896, %v1895
        %v1934 = vpack.c.b16 %v1898, %v1897
        %v1935 = vpack.c.b16 %v1900, %v1899
        %v1936 = vpack.c.b16 %v1902, %v1901
        %v1937 = vpack.c.b16 %v1904, %v1903
        %v1938 = vpack.c.b16 %v1906, %v1905
        %v1939 = vpack.c.b16 %v1908, %v1907
        %v1940 = vpack.c.b16 %v1910, %v1909
        %v1941 = vpack.c.b16 %v1912, %v1911
        %v1942 = vpack.c.b16 %v1914, %v1913
        %v1943 = vpack.c.b16 %v1916, %v1915
        %v1944 = vpack.c.b16 %v1918, %v1917
        %v1945 = vpack.c.b16 %v1920, %v1919
        %v1946 = vpack.c.b16 %v1922, %v1921
        %v1948 = vsel %vm795, %v1923, 0
        %v1951 = vsel %vm795, %v1924, 0
        %v1954 = vsel %vm795, %v1925, 0
        %v1957 = vsel %vm795, %v1926, 0
        %v1960 = vsel %vm795, %v1927, 0
        %v1963 = vsel %vm795, %v1928, 0
        %v1966 = vsel %vm795, %v1929, 0
        %v1969 = vsel %vm795, %v1930, 0
        %v1972 = vsel %vm795, %v1931, 0
        %v1975 = vsel %vm795, %v1932, 0
        %v1978 = vsel %vm795, %v1933, 0
        %v1981 = vsel %vm795, %v1934, 0
        %v1984 = vsel %vm795, %v1935, 0
        %v1987 = vsel %vm795, %v1936, 0
        %v1990 = vsel %vm795, %v1937, 0
        %v1993 = vsel %vm795, %v1938, 0
        %v1996 = vsel %vm795, %v1939, 0
        %v1999 = vsel %vm795, %v1940, 0
        %v2002 = vsel %vm795, %v1941, 0
        %v2005 = vsel %vm795, %v1942, 0
        %v2008 = vsel %vm795, %v1943, 0
        %v2011 = vsel %vm795, %v1944, 0
        %v2014 = vsel %vm795, %v1945, 0
        %v2017 = vsel %vm795, %v1946, 0
        %v2020 = vsel %vm868, %v1826, 0
        %2022 = vmatprep.subr.bf16.mxu0 0
        %2023 = vmatpush1.bf16.msra.mxu0 0
        %2024 = vmatprep.subr.bf16.mxu0 0
        %2025 = vmatpush1.bf16.msra.mxu0 0
        %2026 = vmatprep.subr.bf16.mxu0 0
        %2027 = vmatpush1.bf16.msra.mxu0 0
        %2028 = vmatprep.subr.bf16.mxu0 0
        %2029 = vmatpush1.bf16.msra.mxu0 0
        %2030 = vmatprep.subr.bf16.mxu0 0
        %2031 = vmatpush1.bf16.msra.mxu0 0
        %2032 = vmatprep.subr.bf16.mxu0 0
        %2033 = vmatpush1.bf16.msra.mxu0 0
        %2034 = vmatprep.subr.bf16.mxu0 0
        %2035 = vmatpush1.bf16.msra.mxu0 0
        %2036 = vmatprep.subr.bf16.mxu0 0
        %2037 = vmatpush1.bf16.msra.mxu0 %v2020
        %2038 = vmatprep.subr.bf16.mxu0 0
        %2039 = vmatpush2.bf16.msra.mxu0 0
        %2040 = vmatprep.subr.bf16.mxu0 0
        %2041 = vmatpush2.bf16.msra.mxu0 0
        %2042 = vmatprep.subr.bf16.mxu0 0
        %2043 = vmatpush2.bf16.msra.mxu0 0
        %2044 = vmatprep.subr.bf16.mxu0 0
        %2045 = vmatpush2.bf16.msra.mxu0 0
        %2046 = vmatprep.subr.bf16.mxu0 0
        %2047 = vmatpush2.bf16.msra.mxu0 0
        %2048 = vmatprep.subr.bf16.mxu0 0
        %2049 = vmatpush2.bf16.msra.mxu0 0
        %2050 = vmatprep.subr.bf16.mxu0 0
        %2051 = vmatpush2.bf16.msra.mxu0 0
        %2052 = vmatprep.subr.bf16.mxu0 0
        %2053 = vmatpush2.bf16.msra.mxu0 0
        %2054 = vmatprep.mubr.bf16.mxu0 0
        %2055 = vmatmul.mubr.bf16.gmra.mxu0 %v1948
        %v2056 = vpop.f32.mrf.mxu0
        %v2057 = vadd.f32 0.0, %v2056
        %v2058 = vpop.f32.mrf.mxu0
        %v2059 = vpop.f32.mrf.mxu0
        %v2060 = vadd.f32 0.0, %v2059
        %v2061 = vpop.f32.mrf.mxu0
        %2062 = vmatprep.mubr.bf16.mxu0 0
        %2063 = vmatmul.mubr.bf16.gmra.mxu0 %v1951
        %v2064 = vpop.f32.mrf.mxu0
        %v2065 = vadd.f32 0.0, %v2064
        %v2066 = vpop.f32.mrf.mxu0
        %v2067 = vpop.f32.mrf.mxu0
        %v2068 = vadd.f32 0.0, %v2067
        %v2069 = vpop.f32.mrf.mxu0
        %2070 = vmatprep.mubr.bf16.mxu0 0
        %2071 = vmatmul.mubr.bf16.gmra.mxu0 %v1954
        %v2072 = vpop.f32.mrf.mxu0
        %v2073 = vadd.f32 0.0, %v2072
        %v2074 = vpop.f32.mrf.mxu0
        %v2075 = vpop.f32.mrf.mxu0
        %v2076 = vadd.f32 0.0, %v2075
        %v2077 = vpop.f32.mrf.mxu0
        %2078 = vmatprep.mubr.bf16.mxu0 0
        %2079 = vmatmul.mubr.bf16.gmra.mxu0 %v1957
        %v2080 = vpop.f32.mrf.mxu0
        %v2081 = vadd.f32 0.0, %v2080
        %v2082 = vpop.f32.mrf.mxu0
        %v2083 = vpop.f32.mrf.mxu0
        %v2084 = vadd.f32 0.0, %v2083
        %v2085 = vpop.f32.mrf.mxu0
        %2086 = vmatprep.mubr.bf16.mxu0 0
        %2087 = vmatmul.mubr.bf16.gmra.mxu0 %v1960
        %v2088 = vpop.f32.mrf.mxu0
        %v2089 = vadd.f32 0.0, %v2088
        %v2090 = vpop.f32.mrf.mxu0
        %v2091 = vpop.f32.mrf.mxu0
        %v2092 = vadd.f32 0.0, %v2091
        %v2093 = vpop.f32.mrf.mxu0
        %2094 = vmatprep.mubr.bf16.mxu0 0
        %2095 = vmatmul.mubr.bf16.gmra.mxu0 %v1963
        %v2096 = vpop.f32.mrf.mxu0
        %v2097 = vadd.f32 0.0, %v2096
        %v2098 = vpop.f32.mrf.mxu0
        %v2099 = vpop.f32.mrf.mxu0
        %v2100 = vadd.f32 0.0, %v2099
        %v2101 = vpop.f32.mrf.mxu0
        %2102 = vmatprep.mubr.bf16.mxu0 0
        %2103 = vmatmul.mubr.bf16.gmra.mxu0 %v1966
        %v2104 = vpop.f32.mrf.mxu0
        %v2105 = vadd.f32 0.0, %v2104
        %v2106 = vpop.f32.mrf.mxu0
        %v2107 = vpop.f32.mrf.mxu0
        %v2108 = vadd.f32 0.0, %v2107
        %v2109 = vpop.f32.mrf.mxu0
        %2110 = vmatprep.mubr.bf16.mxu0 0
        %2111 = vmatmul.mubr.bf16.gmra.mxu0 %v1969
        %v2112 = vpop.f32.mrf.mxu0
        %v2113 = vadd.f32 0.0, %v2112
        %v2114 = vpop.f32.mrf.mxu0
        %v2115 = vpop.f32.mrf.mxu0
        %v2116 = vadd.f32 0.0, %v2115
        %v2117 = vpop.f32.mrf.mxu0
        %2118 = vmatprep.mubr.bf16.mxu0 0
        %2119 = vmatmul.mubr.bf16.gmra.mxu0 %v1972
        %v2120 = vpop.f32.mrf.mxu0
        %v2121 = vadd.f32 0.0, %v2120
        %v2122 = vpop.f32.mrf.mxu0
        %v2123 = vpop.f32.mrf.mxu0
        %v2124 = vadd.f32 0.0, %v2123
        %v2125 = vpop.f32.mrf.mxu0
        %2126 = vmatprep.mubr.bf16.mxu0 0
        %2127 = vmatmul.mubr.bf16.gmra.mxu0 %v1975
        %v2128 = vpop.f32.mrf.mxu0
        %v2129 = vadd.f32 0.0, %v2128
        %v2130 = vpop.f32.mrf.mxu0
        %v2131 = vpop.f32.mrf.mxu0
        %v2132 = vadd.f32 0.0, %v2131
        %v2133 = vpop.f32.mrf.mxu0
        %2134 = vmatprep.mubr.bf16.mxu0 0
        %2135 = vmatmul.mubr.bf16.gmra.mxu0 %v1978
        %v2136 = vpop.f32.mrf.mxu0
        %v2137 = vadd.f32 0.0, %v2136
        %v2138 = vpop.f32.mrf.mxu0
        %v2139 = vpop.f32.mrf.mxu0
        %v2140 = vadd.f32 0.0, %v2139
        %v2141 = vpop.f32.mrf.mxu0
        %2142 = vmatprep.mubr.bf16.mxu0 0
        %2143 = vmatmul.mubr.bf16.gmra.mxu0 %v1981
        %v2144 = vpop.f32.mrf.mxu0
        %v2145 = vadd.f32 0.0, %v2144
        %v2146 = vpop.f32.mrf.mxu0
        %v2147 = vpop.f32.mrf.mxu0
        %v2148 = vadd.f32 0.0, %v2147
        %v2149 = vpop.f32.mrf.mxu0
        %2150 = vmatprep.mubr.bf16.mxu0 0
        %2151 = vmatmul.mubr.bf16.gmra.mxu0 %v1984
        %v2152 = vpop.f32.mrf.mxu0
        %v2153 = vadd.f32 0.0, %v2152
        %v2154 = vpop.f32.mrf.mxu0
        %v2155 = vpop.f32.mrf.mxu0
        %v2156 = vadd.f32 0.0, %v2155
        %v2157 = vpop.f32.mrf.mxu0
        %2158 = vmatprep.mubr.bf16.mxu0 0
        %2159 = vmatmul.mubr.bf16.gmra.mxu0 %v1987
        %v2160 = vpop.f32.mrf.mxu0
        %v2161 = vadd.f32 0.0, %v2160
        %v2162 = vpop.f32.mrf.mxu0
        %v2163 = vpop.f32.mrf.mxu0
        %v2164 = vadd.f32 0.0, %v2163
        %v2165 = vpop.f32.mrf.mxu0
        %2166 = vmatprep.mubr.bf16.mxu0 0
        %2167 = vmatmul.mubr.bf16.gmra.mxu0 %v1990
        %v2168 = vpop.f32.mrf.mxu0
        %v2169 = vadd.f32 0.0, %v2168
        %v2170 = vpop.f32.mrf.mxu0
        %v2171 = vpop.f32.mrf.mxu0
        %v2172 = vadd.f32 0.0, %v2171
        %v2173 = vpop.f32.mrf.mxu0
        %2174 = vmatprep.mubr.bf16.mxu0 0
        %2175 = vmatmul.mubr.bf16.gmra.mxu0 %v1993
        %v2176 = vpop.f32.mrf.mxu0
        %v2177 = vadd.f32 0.0, %v2176
        %v2178 = vpop.f32.mrf.mxu0
        %v2179 = vpop.f32.mrf.mxu0
        %v2180 = vadd.f32 0.0, %v2179
        %v2181 = vpop.f32.mrf.mxu0
        %2182 = vmatprep.mubr.bf16.mxu0 0
        %2183 = vmatmul.mubr.bf16.gmra.mxu0 %v1996
        %v2184 = vpop.f32.mrf.mxu0
        %v2185 = vadd.f32 0.0, %v2184
        %v2186 = vpop.f32.mrf.mxu0
        %v2187 = vpop.f32.mrf.mxu0
        %v2188 = vadd.f32 0.0, %v2187
        %v2189 = vpop.f32.mrf.mxu0
        %2190 = vmatprep.mubr.bf16.mxu0 0
        %2191 = vmatmul.mubr.bf16.gmra.mxu0 %v1999
        %v2192 = vpop.f32.mrf.mxu0
        %v2193 = vadd.f32 0.0, %v2192
        %v2194 = vpop.f32.mrf.mxu0
        %v2195 = vpop.f32.mrf.mxu0
        %v2196 = vadd.f32 0.0, %v2195
        %v2197 = vpop.f32.mrf.mxu0
        %2198 = vmatprep.mubr.bf16.mxu0 0
        %2199 = vmatmul.mubr.bf16.gmra.mxu0 %v2002
        %v2200 = vpop.f32.mrf.mxu0
        %v2201 = vadd.f32 0.0, %v2200
        %v2202 = vpop.f32.mrf.mxu0
        %v2203 = vpop.f32.mrf.mxu0
        %v2204 = vadd.f32 0.0, %v2203
        %v2205 = vpop.f32.mrf.mxu0
        %2206 = vmatprep.mubr.bf16.mxu0 0
        %2207 = vmatmul.mubr.bf16.gmra.mxu0 %v2005
        %v2208 = vpop.f32.mrf.mxu0
        %v2209 = vadd.f32 0.0, %v2208
        %v2210 = vpop.f32.mrf.mxu0
        %v2211 = vpop.f32.mrf.mxu0
        %v2212 = vadd.f32 0.0, %v2211
        %v2213 = vpop.f32.mrf.mxu0
        %2214 = vmatprep.mubr.bf16.mxu0 0
        %2215 = vmatmul.mubr.bf16.gmra.mxu0 %v2008
        %v2216 = vpop.f32.mrf.mxu0
        %v2217 = vadd.f32 0.0, %v2216
        %v2218 = vpop.f32.mrf.mxu0
        %v2219 = vpop.f32.mrf.mxu0
        %v2220 = vadd.f32 0.0, %v2219
        %v2221 = vpop.f32.mrf.mxu0
        %2222 = vmatprep.mubr.bf16.mxu0 0
        %2223 = vmatmul.mubr.bf16.gmra.mxu0 %v2011
        %v2224 = vpop.f32.mrf.mxu0
        %v2225 = vadd.f32 0.0, %v2224
        %v2226 = vpop.f32.mrf.mxu0
        %v2227 = vpop.f32.mrf.mxu0
        %v2228 = vadd.f32 0.0, %v2227
        %v2229 = vpop.f32.mrf.mxu0
        %2230 = vmatprep.mubr.bf16.mxu0 0
        %2231 = vmatmul.mubr.bf16.gmra.mxu0 %v2014
        %v2232 = vpop.f32.mrf.mxu0
        %v2233 = vadd.f32 0.0, %v2232
        %v2234 = vpop.f32.mrf.mxu0
        %v2235 = vpop.f32.mrf.mxu0
        %v2236 = vadd.f32 0.0, %v2235
        %v2237 = vpop.f32.mrf.mxu0
        %2238 = vmatprep.mubr.bf16.mxu0 0
        %2239 = vmatmul.mubr.bf16.gmra.mxu0 %v2017
        %v2240 = vpop.f32.mrf.mxu0
        %v2241 = vadd.f32 0.0, %v2240
        %v2242 = vpop.f32.mrf.mxu0
        %v2243 = vpop.f32.mrf.mxu0
        %v2244 = vadd.f32 0.0, %v2243
        %v2245 = vpop.f32.mrf.mxu0
        %2246 = vdwg.mxu0
        %v2247 = vadd.f32 %v1729, %v2057
        %v2248 = vadd.f32 %v1730, %v2060
        %v2249 = vadd.f32 %v1731, %v2065
        %v2250 = vadd.f32 %v1732, %v2068
        %v2251 = vadd.f32 %v1733, %v2073
        %v2252 = vadd.f32 %v1734, %v2076
        %v2253 = vadd.f32 %v1735, %v2081
        %v2254 = vadd.f32 %v1736, %v2084
        %v2255 = vadd.f32 %v1737, %v2089
        %v2256 = vadd.f32 %v1738, %v2092
        %v2257 = vadd.f32 %v1739, %v2097
        %v2258 = vadd.f32 %v1740, %v2100
        %v2259 = vadd.f32 %v1741, %v2105
        %v2260 = vadd.f32 %v1742, %v2108
        %v2261 = vadd.f32 %v1743, %v2113
        %v2262 = vadd.f32 %v1744, %v2116
        %v2263 = vadd.f32 %v1745, %v2121
        %v2264 = vadd.f32 %v1746, %v2124
        %v2265 = vadd.f32 %v1747, %v2129
        %v2266 = vadd.f32 %v1748, %v2132
        %v2267 = vadd.f32 %v1749, %v2137
        %v2268 = vadd.f32 %v1750, %v2140
        %v2269 = vadd.f32 %v1751, %v2145
        %v2270 = vadd.f32 %v1752, %v2148
        %v2271 = vadd.f32 %v1753, %v2153
        %v2272 = vadd.f32 %v1754, %v2156
        %v2273 = vadd.f32 %v1755, %v2161
        %v2274 = vadd.f32 %v1756, %v2164
        %v2275 = vadd.f32 %v1757, %v2169
        %v2276 = vadd.f32 %v1758, %v2172
        %v2277 = vadd.f32 %v1759, %v2177
        %v2278 = vadd.f32 %v1760, %v2180
        %v2279 = vadd.f32 %v1761, %v2185
        %v2280 = vadd.f32 %v1762, %v2188
        %v2281 = vadd.f32 %v1763, %v2193
        %v2282 = vadd.f32 %v1764, %v2196
        %v2283 = vadd.f32 %v1765, %v2201
        %v2284 = vadd.f32 %v1766, %v2204
        %v2285 = vadd.f32 %v1767, %v2209
        %v2286 = vadd.f32 %v1768, %v2212
        %v2287 = vadd.f32 %v1769, %v2217
        %v2288 = vadd.f32 %v1770, %v2220
        %v2289 = vadd.f32 %v1771, %v2225
        %v2290 = vadd.f32 %v1772, %v2228
        %v2291 = vadd.f32 %v1773, %v2233
        %v2292 = vadd.f32 %v1774, %v2236
        %v2293 = vadd.f32 %v1775, %v2241
        %v2294 = vadd.f32 %v1776, %v2244
        %v2295 = vld [vmem:[%s344 + $0xc] sm:$0xf]
        %v2296 = vld [vmem:[%s344 + $0x10] sm:$0xf]
        %v2297 = vld [vmem:[%s344 + $0x14] sm:$0xf]
        %v2298 = vld [vmem:[%s344 + $0x18] sm:$0xf]
        %v2299 = vld [vmem:[%s344 + $0x1c] sm:$0xf]
        %v2300 = vld [vmem:[%s344 + $0x20] sm:$0xf]
        %v2301 = vld [vmem:[%s344 + $0x24] sm:$0xf]
        %v2302 = vld [vmem:[%s344 + $0x28] sm:$0xf]
        %v2303 = vld [vmem:[%s344 + $0x2c] sm:$0xf]
        %v2304 = vld [vmem:[%s344 + $0x30] sm:$0xf]
        %v2305 = vld [vmem:[%s344 + $0x34] sm:$0xf]
        %v2306 = vld [vmem:[%s344 + $0x38] sm:$0xf]
        %v2307 = vld [vmem:[%s344 + $0x3c] sm:$0xf]
        %v2308 = vld [vmem:[%s344 + $0x40] sm:$0xf]
        %v2309 = vld [vmem:[%s344 + $0x44] sm:$0xf]
        %v2310 = vld [vmem:[%s344 + $0x48] sm:$0xf]
        %v2311 = vld [vmem:[%s344 + $0x4c] sm:$0xf]
        %v2312 = vld [vmem:[%s344 + $0x50] sm:$0xf]
        %v2313 = vld [vmem:[%s344 + $0x54] sm:$0xf]
        %v2314 = vld [vmem:[%s344 + $0x58] sm:$0xf]
        %v2315 = vld [vmem:[%s344 + $0x5c] sm:$0xf]
        %v2316 = vld [vmem:[%s344 + $0x60] sm:$0xf]
        %v2317 = vld [vmem:[%s344 + $0x64] sm:$0xf]
        %v2318 = vld [vmem:[%s344 + $0x68] sm:$0xf]
        %v2319 = vld [vmem:[%s344 + $0x6c] sm:$0xf]
        %v2320 = vld [vmem:[%s344 + $0x70] sm:$0xf]
        %v2321 = vld [vmem:[%s344 + $0x74] sm:$0xf]
        %v2322 = vld [vmem:[%s344 + $0x78] sm:$0xf]
        %v2323 = vld [vmem:[%s344 + $0x7c] sm:$0xf]
        %v2324 = vld [vmem:[%s344 + $0x80] sm:$0xf]
        %v2325 = vld [vmem:[%s344 + $0x84] sm:$0xf]
        %v2326 = vld [vmem:[%s344 + $0x88] sm:$0xf]
        %v2327 = vld [vmem:[%s344 + $0x8c] sm:$0xf]
        %v2328 = vld [vmem:[%s344 + $0x90] sm:$0xf]
        %v2329 = vld [vmem:[%s344 + $0x94] sm:$0xf]
        %v2330 = vld [vmem:[%s344 + $0x98] sm:$0xf]
        %v2331 = vld [vmem:[%s344 + $0x9c] sm:$0xf]
        %v2332 = vld [vmem:[%s344 + $0xa0] sm:$0xf]
        %v2333 = vld [vmem:[%s344 + $0xa4] sm:$0xf]
        %v2334 = vld [vmem:[%s344 + $0xa8] sm:$0xf]
        %v2335 = vld [vmem:[%s344 + $0xac] sm:$0xf]
        %v2336 = vld [vmem:[%s344 + $0xb0] sm:$0xf]
        %v2337 = vld [vmem:[%s344 + $0xb4] sm:$0xf]
        %v2338 = vld [vmem:[%s344 + $0xb8] sm:$0xf]
        %v2339 = vld [vmem:[%s344 + $0xbc] sm:$0xf]
        %v2340 = vld [vmem:[%s344 + $0xc0] sm:$0xf]
        %v2341 = vld [vmem:[%s344 + $0xc4] sm:$0xf]
        %v2342 = vld [vmem:[%s344 + $0xc8] sm:$0xf]
        %v2343 = vld [vmem:[%s344 + $0xcc] sm:$0x1]
        %s2344 = scalar_lea.vmem %s351, 16
        %v2345 = vld [vmem:[%s2344] sm:$0xf]
        %v2395 = vunpack.c.l.b16 %v2295
        %v2396 = vunpack.c.l.b16 %v2296
        %v2397 = vunpack.c.l.b16 %v2297
        %v2398 = vunpack.c.l.b16 %v2298
        %v2399 = vunpack.c.l.b16 %v2299
        %v2400 = vunpack.c.l.b16 %v2300
        %v2401 = vunpack.c.l.b16 %v2301
        %v2402 = vunpack.c.l.b16 %v2302
        %v2403 = vunpack.c.l.b16 %v2303
        %v2404 = vunpack.c.l.b16 %v2304
        %v2405 = vunpack.c.l.b16 %v2305
        %v2406 = vunpack.c.l.b16 %v2306
        %v2407 = vunpack.c.l.b16 %v2307
        %v2408 = vunpack.c.l.b16 %v2308
        %v2409 = vunpack.c.l.b16 %v2309
        %v2410 = vunpack.c.l.b16 %v2310
        %v2411 = vunpack.c.l.b16 %v2311
        %v2412 = vunpack.c.l.b16 %v2312
        %v2413 = vunpack.c.l.b16 %v2313
        %v2414 = vunpack.c.l.b16 %v2314
        %v2415 = vunpack.c.l.b16 %v2315
        %v2416 = vunpack.c.l.b16 %v2316
        %v2417 = vunpack.c.l.b16 %v2317
        %v2418 = vunpack.c.l.b16 %v2318
        %v2419 = vunpack.c.l.b16 %v2319
        %v2420 = vunpack.c.l.b16 %v2320
        %v2421 = vunpack.c.l.b16 %v2321
        %v2422 = vunpack.c.l.b16 %v2322
        %v2423 = vunpack.c.l.b16 %v2323
        %v2424 = vunpack.c.l.b16 %v2324
        %v2425 = vunpack.c.l.b16 %v2325
        %v2426 = vunpack.c.l.b16 %v2326
        %v2427 = vunpack.c.l.b16 %v2327
        %v2428 = vunpack.c.l.b16 %v2328
        %v2429 = vunpack.c.l.b16 %v2329
        %v2430 = vunpack.c.l.b16 %v2330
        %v2431 = vunpack.c.l.b16 %v2331
        %v2432 = vunpack.c.l.b16 %v2332
        %v2433 = vunpack.c.l.b16 %v2333
        %v2434 = vunpack.c.l.b16 %v2334
        %v2435 = vunpack.c.l.b16 %v2335
        %v2436 = vunpack.c.l.b16 %v2336
        %v2437 = vunpack.c.l.b16 %v2337
        %v2438 = vunpack.c.l.b16 %v2338
        %v2439 = vunpack.c.l.b16 %v2339
        %v2440 = vunpack.c.l.b16 %v2340
        %v2441 = vunpack.c.l.b16 %v2341
        %v2442 = vunpack.c.l.b16 %v2342
        %v2443 = vunpack.c.l.b16 %v2343
        %v2444 = vpack.c.b16 %v2396, %v2395
        %v2445 = vpack.c.b16 %v2398, %v2397
        %v2446 = vpack.c.b16 %v2400, %v2399
        %v2447 = vpack.c.b16 %v2402, %v2401
        %v2448 = vpack.c.b16 %v2404, %v2403
        %v2449 = vpack.c.b16 %v2406, %v2405
        %v2450 = vpack.c.b16 %v2408, %v2407
        %v2451 = vpack.c.b16 %v2410, %v2409
        %v2452 = vpack.c.b16 %v2412, %v2411
        %v2453 = vpack.c.b16 %v2414, %v2413
        %v2454 = vpack.c.b16 %v2416, %v2415
        %v2455 = vpack.c.b16 %v2418, %v2417
        %v2456 = vpack.c.b16 %v2420, %v2419
        %v2457 = vpack.c.b16 %v2422, %v2421
        %v2458 = vpack.c.b16 %v2424, %v2423
        %v2459 = vpack.c.b16 %v2426, %v2425
        %v2460 = vpack.c.b16 %v2428, %v2427
        %v2461 = vpack.c.b16 %v2430, %v2429
        %v2462 = vpack.c.b16 %v2432, %v2431
        %v2463 = vpack.c.b16 %v2434, %v2433
        %v2464 = vpack.c.b16 %v2436, %v2435
        %v2465 = vpack.c.b16 %v2438, %v2437
        %v2466 = vpack.c.b16 %v2440, %v2439
        %v2467 = vpack.c.b16 %v2442, %v2441
        %v2468 = vpack.c.b16 %v2443, %v2443
        %v2470 = vshrl.u32 %v2444, 16
        %v2472 = vshll.u32 %v2444, 16
        %v2474 = vrot.slane %v2472, 1
        %v2475 = vor.u32 %v2470, %v2474
        %v2477 = vshll.u32 %v2445, 16
        %v2479 = vrot.slane %v2477, 1
        %v2480 = vsel %vm598, %v2475, %v2479
        %v2481 = vshrl.u32 %v2445, 16
        %v2483 = vor.u32 %v2481, %v2479
        %v2485 = vshll.u32 %v2446, 16
        %v2487 = vrot.slane %v2485, 1
        %v2488 = vsel %vm598, %v2483, %v2487
        %v2489 = vshrl.u32 %v2446, 16
        %v2491 = vor.u32 %v2489, %v2487
        %v2493 = vshll.u32 %v2447, 16
        %v2495 = vrot.slane %v2493, 1
        %v2496 = vsel %vm598, %v2491, %v2495
        %v2497 = vshrl.u32 %v2447, 16
        %v2499 = vor.u32 %v2497, %v2495
        %v2501 = vshll.u32 %v2448, 16
        %v2503 = vrot.slane %v2501, 1
        %v2504 = vsel %vm598, %v2499, %v2503
        %v2505 = vshrl.u32 %v2448, 16
        %v2507 = vor.u32 %v2505, %v2503
        %v2509 = vshll.u32 %v2449, 16
        %v2511 = vrot.slane %v2509, 1
        %v2512 = vsel %vm598, %v2507, %v2511
        %v2513 = vshrl.u32 %v2449, 16
        %v2515 = vor.u32 %v2513, %v2511
        %v2517 = vshll.u32 %v2450, 16
        %v2519 = vrot.slane %v2517, 1
        %v2520 = vsel %vm598, %v2515, %v2519
        %v2521 = vshrl.u32 %v2450, 16
        %v2523 = vor.u32 %v2521, %v2519
        %v2525 = vshll.u32 %v2451, 16
        %v2527 = vrot.slane %v2525, 1
        %v2528 = vsel %vm598, %v2523, %v2527
        %v2529 = vshrl.u32 %v2451, 16
        %v2531 = vor.u32 %v2529, %v2527
        %v2533 = vshll.u32 %v2452, 16
        %v2535 = vrot.slane %v2533, 1
        %v2536 = vsel %vm598, %v2531, %v2535
        %v2537 = vshrl.u32 %v2452, 16
        %v2539 = vor.u32 %v2537, %v2535
        %v2541 = vshll.u32 %v2453, 16
        %v2543 = vrot.slane %v2541, 1
        %v2544 = vsel %vm598, %v2539, %v2543
        %v2545 = vshrl.u32 %v2453, 16
        %v2547 = vor.u32 %v2545, %v2543
        %v2549 = vshll.u32 %v2454, 16
        %v2551 = vrot.slane %v2549, 1
        %v2552 = vsel %vm598, %v2547, %v2551
        %v2553 = vshrl.u32 %v2454, 16
        %v2555 = vor.u32 %v2553, %v2551
        %v2557 = vshll.u32 %v2455, 16
        %v2559 = vrot.slane %v2557, 1
        %v2560 = vsel %vm598, %v2555, %v2559
        %v2561 = vshrl.u32 %v2455, 16
        %v2563 = vor.u32 %v2561, %v2559
        %v2565 = vshll.u32 %v2456, 16
        %v2567 = vrot.slane %v2565, 1
        %v2568 = vsel %vm598, %v2563, %v2567
        %v2569 = vshrl.u32 %v2456, 16
        %v2571 = vor.u32 %v2569, %v2567
        %v2573 = vshll.u32 %v2457, 16
        %v2575 = vrot.slane %v2573, 1
        %v2576 = vsel %vm598, %v2571, %v2575
        %v2577 = vshrl.u32 %v2457, 16
        %v2579 = vor.u32 %v2577, %v2575
        %v2581 = vshll.u32 %v2458, 16
        %v2583 = vrot.slane %v2581, 1
        %v2584 = vsel %vm598, %v2579, %v2583
        %v2585 = vshrl.u32 %v2458, 16
        %v2587 = vor.u32 %v2585, %v2583
        %v2589 = vshll.u32 %v2459, 16
        %v2591 = vrot.slane %v2589, 1
        %v2592 = vsel %vm598, %v2587, %v2591
        %v2593 = vshrl.u32 %v2459, 16
        %v2595 = vor.u32 %v2593, %v2591
        %v2597 = vshll.u32 %v2460, 16
        %v2599 = vrot.slane %v2597, 1
        %v2600 = vsel %vm598, %v2595, %v2599
        %v2601 = vshrl.u32 %v2460, 16
        %v2603 = vor.u32 %v2601, %v2599
        %v2605 = vshll.u32 %v2461, 16
        %v2607 = vrot.slane %v2605, 1
        %v2608 = vsel %vm598, %v2603, %v2607
        %v2609 = vshrl.u32 %v2461, 16
        %v2611 = vor.u32 %v2609, %v2607
        %v2613 = vshll.u32 %v2462, 16
        %v2615 = vrot.slane %v2613, 1
        %v2616 = vsel %vm598, %v2611, %v2615
        %v2617 = vshrl.u32 %v2462, 16
        %v2619 = vor.u32 %v2617, %v2615
        %v2621 = vshll.u32 %v2463, 16
        %v2623 = vrot.slane %v2621, 1
        %v2624 = vsel %vm598, %v2619, %v2623
        %v2625 = vshrl.u32 %v2463, 16
        %v2627 = vor.u32 %v2625, %v2623
        %v2629 = vshll.u32 %v2464, 16
        %v2631 = vrot.slane %v2629, 1
        %v2632 = vsel %vm598, %v2627, %v2631
        %v2633 = vshrl.u32 %v2464, 16
        %v2635 = vor.u32 %v2633, %v2631
        %v2637 = vshll.u32 %v2465, 16
        %v2639 = vrot.slane %v2637, 1
        %v2640 = vsel %vm598, %v2635, %v2639
        %v2641 = vshrl.u32 %v2465, 16
        %v2643 = vor.u32 %v2641, %v2639
        %v2645 = vshll.u32 %v2466, 16
        %v2647 = vrot.slane %v2645, 1
        %v2648 = vsel %vm598, %v2643, %v2647
        %v2649 = vshrl.u32 %v2466, 16
        %v2651 = vor.u32 %v2649, %v2647
        %v2653 = vshll.u32 %v2467, 16
        %v2655 = vrot.slane %v2653, 1
        %v2656 = vsel %vm598, %v2651, %v2655
        %v2657 = vshrl.u32 %v2467, 16
        %v2659 = vor.u32 %v2657, %v2655
        %v2661 = vshll.u32 %v2468, 16
        %v2663 = vrot.slane %v2661, 1
        %v2664 = vsel %vm598, %v2659, %v2663
        %v2666 = vsel %vm795, %v2480, 0
        %v2669 = vsel %vm795, %v2488, 0
        %v2672 = vsel %vm795, %v2496, 0
        %v2675 = vsel %vm795, %v2504, 0
        %v2678 = vsel %vm795, %v2512, 0
        %v2681 = vsel %vm795, %v2520, 0
        %v2684 = vsel %vm795, %v2528, 0
        %v2687 = vsel %vm795, %v2536, 0
        %v2690 = vsel %vm795, %v2544, 0
        %v2693 = vsel %vm795, %v2552, 0
        %v2696 = vsel %vm795, %v2560, 0
        %v2699 = vsel %vm795, %v2568, 0
        %v2702 = vsel %vm795, %v2576, 0
        %v2705 = vsel %vm795, %v2584, 0
        %v2708 = vsel %vm795, %v2592, 0
        %v2711 = vsel %vm795, %v2600, 0
        %v2714 = vsel %vm795, %v2608, 0
        %v2717 = vsel %vm795, %v2616, 0
        %v2720 = vsel %vm795, %v2624, 0
        %v2723 = vsel %vm795, %v2632, 0
        %v2726 = vsel %vm795, %v2640, 0
        %v2729 = vsel %vm795, %v2648, 0
        %v2732 = vsel %vm795, %v2656, 0
        %v2735 = vsel %vm795, %v2664, 0
        %v2738 = vsel %vm868, %v2345, 0
        %2740 = vmatprep.subr.bf16.mxu0 0
        %2741 = vmatpush1.bf16.msra.mxu0 0
        %2742 = vmatprep.subr.bf16.mxu0 0
        %2743 = vmatpush1.bf16.msra.mxu0 0
        %2744 = vmatprep.subr.bf16.mxu0 0
        %2745 = vmatpush1.bf16.msra.mxu0 0
        %2746 = vmatprep.subr.bf16.mxu0 0
        %2747 = vmatpush1.bf16.msra.mxu0 0
        %2748 = vmatprep.subr.bf16.mxu0 0
        %2749 = vmatpush1.bf16.msra.mxu0 0
        %2750 = vmatprep.subr.bf16.mxu0 0
        %2751 = vmatpush1.bf16.msra.mxu0 0
        %2752 = vmatprep.subr.bf16.mxu0 0
        %2753 = vmatpush1.bf16.msra.mxu0 0
        %2754 = vmatprep.subr.bf16.mxu0 0
        %2755 = vmatpush1.bf16.msra.mxu0 %v2738
        %2756 = vmatprep.subr.bf16.mxu0 0
        %2757 = vmatpush2.bf16.msra.mxu0 0
        %2758 = vmatprep.subr.bf16.mxu0 0
        %2759 = vmatpush2.bf16.msra.mxu0 0
        %2760 = vmatprep.subr.bf16.mxu0 0
        %2761 = vmatpush2.bf16.msra.mxu0 0
        %2762 = vmatprep.subr.bf16.mxu0 0
        %2763 = vmatpush2.bf16.msra.mxu0 0
        %2764 = vmatprep.subr.bf16.mxu0 0
        %2765 = vmatpush2.bf16.msra.mxu0 0
        %2766 = vmatprep.subr.bf16.mxu0 0
        %2767 = vmatpush2.bf16.msra.mxu0 0
        %2768 = vmatprep.subr.bf16.mxu0 0
        %2769 = vmatpush2.bf16.msra.mxu0 0
        %2770 = vmatprep.subr.bf16.mxu0 0
        %2771 = vmatpush2.bf16.msra.mxu0 0
        %2772 = vmatprep.mubr.bf16.mxu0 0
        %2773 = vmatmul.mubr.bf16.gmra.mxu0 %v2666
        %v2774 = vpop.f32.mrf.mxu0
        %v2775 = vadd.f32 0.0, %v2774
        %v2776 = vpop.f32.mrf.mxu0
        %v2777 = vpop.f32.mrf.mxu0
        %v2778 = vadd.f32 0.0, %v2777
        %v2779 = vpop.f32.mrf.mxu0
        %2780 = vmatprep.mubr.bf16.mxu0 0
        %2781 = vmatmul.mubr.bf16.gmra.mxu0 %v2669
        %v2782 = vpop.f32.mrf.mxu0
        %v2783 = vadd.f32 0.0, %v2782
        %v2784 = vpop.f32.mrf.mxu0
        %v2785 = vpop.f32.mrf.mxu0
        %v2786 = vadd.f32 0.0, %v2785
        %v2787 = vpop.f32.mrf.mxu0
        %2788 = vmatprep.mubr.bf16.mxu0 0
        %2789 = vmatmul.mubr.bf16.gmra.mxu0 %v2672
        %v2790 = vpop.f32.mrf.mxu0
        %v2791 = vadd.f32 0.0, %v2790
        %v2792 = vpop.f32.mrf.mxu0
        %v2793 = vpop.f32.mrf.mxu0
        %v2794 = vadd.f32 0.0, %v2793
        %v2795 = vpop.f32.mrf.mxu0
        %2796 = vmatprep.mubr.bf16.mxu0 0
        %2797 = vmatmul.mubr.bf16.gmra.mxu0 %v2675
        %v2798 = vpop.f32.mrf.mxu0
        %v2799 = vadd.f32 0.0, %v2798
        %v2800 = vpop.f32.mrf.mxu0
        %v2801 = vpop.f32.mrf.mxu0
        %v2802 = vadd.f32 0.0, %v2801
        %v2803 = vpop.f32.mrf.mxu0
        %2804 = vmatprep.mubr.bf16.mxu0 0
        %2805 = vmatmul.mubr.bf16.gmra.mxu0 %v2678
        %v2806 = vpop.f32.mrf.mxu0
        %v2807 = vadd.f32 0.0, %v2806
        %v2808 = vpop.f32.mrf.mxu0
        %v2809 = vpop.f32.mrf.mxu0
        %v2810 = vadd.f32 0.0, %v2809
        %v2811 = vpop.f32.mrf.mxu0
        %2812 = vmatprep.mubr.bf16.mxu0 0
        %2813 = vmatmul.mubr.bf16.gmra.mxu0 %v2681
        %v2814 = vpop.f32.mrf.mxu0
        %v2815 = vadd.f32 0.0, %v2814
        %v2816 = vpop.f32.mrf.mxu0
        %v2817 = vpop.f32.mrf.mxu0
        %v2818 = vadd.f32 0.0, %v2817
        %v2819 = vpop.f32.mrf.mxu0
        %2820 = vmatprep.mubr.bf16.mxu0 0
        %2821 = vmatmul.mubr.bf16.gmra.mxu0 %v2684
        %v2822 = vpop.f32.mrf.mxu0
        %v2823 = vadd.f32 0.0, %v2822
        %v2824 = vpop.f32.mrf.mxu0
        %v2825 = vpop.f32.mrf.mxu0
        %v2826 = vadd.f32 0.0, %v2825
        %v2827 = vpop.f32.mrf.mxu0
        %2828 = vmatprep.mubr.bf16.mxu0 0
        %2829 = vmatmul.mubr.bf16.gmra.mxu0 %v2687
        %v2830 = vpop.f32.mrf.mxu0
        %v2831 = vadd.f32 0.0, %v2830
        %v2832 = vpop.f32.mrf.mxu0
        %v2833 = vpop.f32.mrf.mxu0
        %v2834 = vadd.f32 0.0, %v2833
        %v2835 = vpop.f32.mrf.mxu0
        %2836 = vmatprep.mubr.bf16.mxu0 0
        %2837 = vmatmul.mubr.bf16.gmra.mxu0 %v2690
        %v2838 = vpop.f32.mrf.mxu0
        %v2839 = vadd.f32 0.0, %v2838
        %v2840 = vpop.f32.mrf.mxu0
        %v2841 = vpop.f32.mrf.mxu0
        %v2842 = vadd.f32 0.0, %v2841
        %v2843 = vpop.f32.mrf.mxu0
        %2844 = vmatprep.mubr.bf16.mxu0 0
        %2845 = vmatmul.mubr.bf16.gmra.mxu0 %v2693
        %v2846 = vpop.f32.mrf.mxu0
        %v2847 = vadd.f32 0.0, %v2846
        %v2848 = vpop.f32.mrf.mxu0
        %v2849 = vpop.f32.mrf.mxu0
        %v2850 = vadd.f32 0.0, %v2849
        %v2851 = vpop.f32.mrf.mxu0
        %2852 = vmatprep.mubr.bf16.mxu0 0
        %2853 = vmatmul.mubr.bf16.gmra.mxu0 %v2696
        %v2854 = vpop.f32.mrf.mxu0
        %v2855 = vadd.f32 0.0, %v2854
        %v2856 = vpop.f32.mrf.mxu0
        %v2857 = vpop.f32.mrf.mxu0
        %v2858 = vadd.f32 0.0, %v2857
        %v2859 = vpop.f32.mrf.mxu0
        %2860 = vmatprep.mubr.bf16.mxu0 0
        %2861 = vmatmul.mubr.bf16.gmra.mxu0 %v2699
        %v2862 = vpop.f32.mrf.mxu0
        %v2863 = vadd.f32 0.0, %v2862
        %v2864 = vpop.f32.mrf.mxu0
        %v2865 = vpop.f32.mrf.mxu0
        %v2866 = vadd.f32 0.0, %v2865
        %v2867 = vpop.f32.mrf.mxu0
        %2868 = vmatprep.mubr.bf16.mxu0 0
        %2869 = vmatmul.mubr.bf16.gmra.mxu0 %v2702
        %v2870 = vpop.f32.mrf.mxu0
        %v2871 = vadd.f32 0.0, %v2870
        %v2872 = vpop.f32.mrf.mxu0
        %v2873 = vpop.f32.mrf.mxu0
        %v2874 = vadd.f32 0.0, %v2873
        %v2875 = vpop.f32.mrf.mxu0
        %2876 = vmatprep.mubr.bf16.mxu0 0
        %2877 = vmatmul.mubr.bf16.gmra.mxu0 %v2705
        %v2878 = vpop.f32.mrf.mxu0
        %v2879 = vadd.f32 0.0, %v2878
        %v2880 = vpop.f32.mrf.mxu0
        %v2881 = vpop.f32.mrf.mxu0
        %v2882 = vadd.f32 0.0, %v2881
        %v2883 = vpop.f32.mrf.mxu0
        %2884 = vmatprep.mubr.bf16.mxu0 0
        %2885 = vmatmul.mubr.bf16.gmra.mxu0 %v2708
        %v2886 = vpop.f32.mrf.mxu0
        %v2887 = vadd.f32 0.0, %v2886
        %v2888 = vpop.f32.mrf.mxu0
        %v2889 = vpop.f32.mrf.mxu0
        %v2890 = vadd.f32 0.0, %v2889
        %v2891 = vpop.f32.mrf.mxu0
        %2892 = vmatprep.mubr.bf16.mxu0 0
        %2893 = vmatmul.mubr.bf16.gmra.mxu0 %v2711
        %v2894 = vpop.f32.mrf.mxu0
        %v2895 = vadd.f32 0.0, %v2894
        %v2896 = vpop.f32.mrf.mxu0
        %v2897 = vpop.f32.mrf.mxu0
        %v2898 = vadd.f32 0.0, %v2897
        %v2899 = vpop.f32.mrf.mxu0
        %2900 = vmatprep.mubr.bf16.mxu0 0
        %2901 = vmatmul.mubr.bf16.gmra.mxu0 %v2714
        %v2902 = vpop.f32.mrf.mxu0
        %v2903 = vadd.f32 0.0, %v2902
        %v2904 = vpop.f32.mrf.mxu0
        %v2905 = vpop.f32.mrf.mxu0
        %v2906 = vadd.f32 0.0, %v2905
        %v2907 = vpop.f32.mrf.mxu0
        %2908 = vmatprep.mubr.bf16.mxu0 0
        %2909 = vmatmul.mubr.bf16.gmra.mxu0 %v2717
        %v2910 = vpop.f32.mrf.mxu0
        %v2911 = vadd.f32 0.0, %v2910
        %v2912 = vpop.f32.mrf.mxu0
        %v2913 = vpop.f32.mrf.mxu0
        %v2914 = vadd.f32 0.0, %v2913
        %v2915 = vpop.f32.mrf.mxu0
        %2916 = vmatprep.mubr.bf16.mxu0 0
        %2917 = vmatmul.mubr.bf16.gmra.mxu0 %v2720
        %v2918 = vpop.f32.mrf.mxu0
        %v2919 = vadd.f32 0.0, %v2918
        %v2920 = vpop.f32.mrf.mxu0
        %v2921 = vpop.f32.mrf.mxu0
        %v2922 = vadd.f32 0.0, %v2921
        %v2923 = vpop.f32.mrf.mxu0
        %2924 = vmatprep.mubr.bf16.mxu0 0
        %2925 = vmatmul.mubr.bf16.gmra.mxu0 %v2723
        %v2926 = vpop.f32.mrf.mxu0
        %v2927 = vadd.f32 0.0, %v2926
        %v2928 = vpop.f32.mrf.mxu0
        %v2929 = vpop.f32.mrf.mxu0
        %v2930 = vadd.f32 0.0, %v2929
        %v2931 = vpop.f32.mrf.mxu0
        %2932 = vmatprep.mubr.bf16.mxu0 0
        %2933 = vmatmul.mubr.bf16.gmra.mxu0 %v2726
        %v2934 = vpop.f32.mrf.mxu0
        %v2935 = vadd.f32 0.0, %v2934
        %v2936 = vpop.f32.mrf.mxu0
        %v2937 = vpop.f32.mrf.mxu0
        %v2938 = vadd.f32 0.0, %v2937
        %v2939 = vpop.f32.mrf.mxu0
        %2940 = vmatprep.mubr.bf16.mxu0 0
        %2941 = vmatmul.mubr.bf16.gmra.mxu0 %v2729
        %v2942 = vpop.f32.mrf.mxu0
        %v2943 = vadd.f32 0.0, %v2942
        %v2944 = vpop.f32.mrf.mxu0
        %v2945 = vpop.f32.mrf.mxu0
        %v2946 = vadd.f32 0.0, %v2945
        %v2947 = vpop.f32.mrf.mxu0
        %2948 = vmatprep.mubr.bf16.mxu0 0
        %2949 = vmatmul.mubr.bf16.gmra.mxu0 %v2732
        %v2950 = vpop.f32.mrf.mxu0
        %v2951 = vadd.f32 0.0, %v2950
        %v2952 = vpop.f32.mrf.mxu0
        %v2953 = vpop.f32.mrf.mxu0
        %v2954 = vadd.f32 0.0, %v2953
        %v2955 = vpop.f32.mrf.mxu0
        %2956 = vmatprep.mubr.bf16.mxu0 0
        %2957 = vmatmul.mubr.bf16.gmra.mxu0 %v2735
        %v2958 = vpop.f32.mrf.mxu0
        %v2959 = vadd.f32 0.0, %v2958
        %v2960 = vpop.f32.mrf.mxu0
        %v2961 = vpop.f32.mrf.mxu0
        %v2962 = vadd.f32 0.0, %v2961
        %v2963 = vpop.f32.mrf.mxu0
        %2964 = vdwg.mxu0
        %v2965 = vadd.f32 %v2247, %v2775
        %v2966 = vadd.f32 %v2248, %v2778
        %v2967 = vadd.f32 %v2249, %v2783
        %v2968 = vadd.f32 %v2250, %v2786
        %v2969 = vadd.f32 %v2251, %v2791
        %v2970 = vadd.f32 %v2252, %v2794
        %v2971 = vadd.f32 %v2253, %v2799
        %v2972 = vadd.f32 %v2254, %v2802
        %v2973 = vadd.f32 %v2255, %v2807
        %v2974 = vadd.f32 %v2256, %v2810
        %v2975 = vadd.f32 %v2257, %v2815
        %v2976 = vadd.f32 %v2258, %v2818
        %v2977 = vadd.f32 %v2259, %v2823
        %v2978 = vadd.f32 %v2260, %v2826
        %v2979 = vadd.f32 %v2261, %v2831
        %v2980 = vadd.f32 %v2262, %v2834
        %v2981 = vadd.f32 %v2263, %v2839
        %v2982 = vadd.f32 %v2264, %v2842
        %v2983 = vadd.f32 %v2265, %v2847
        %v2984 = vadd.f32 %v2266, %v2850
        %v2985 = vadd.f32 %v2267, %v2855
        %v2986 = vadd.f32 %v2268, %v2858
        %v2987 = vadd.f32 %v2269, %v2863
        %v2988 = vadd.f32 %v2270, %v2866
        %v2989 = vadd.f32 %v2271, %v2871
        %v2990 = vadd.f32 %v2272, %v2874
        %v2991 = vadd.f32 %v2273, %v2879
        %v2992 = vadd.f32 %v2274, %v2882
        %v2993 = vadd.f32 %v2275, %v2887
        %v2994 = vadd.f32 %v2276, %v2890
        %v2995 = vadd.f32 %v2277, %v2895
        %v2996 = vadd.f32 %v2278, %v2898
        %v2997 = vadd.f32 %v2279, %v2903
        %v2998 = vadd.f32 %v2280, %v2906
        %v2999 = vadd.f32 %v2281, %v2911
        %v3000 = vadd.f32 %v2282, %v2914
        %v3001 = vadd.f32 %v2283, %v2919
        %v3002 = vadd.f32 %v2284, %v2922
        %v3003 = vadd.f32 %v2285, %v2927
        %v3004 = vadd.f32 %v2286, %v2930
        %v3005 = vadd.f32 %v2287, %v2935
        %v3006 = vadd.f32 %v2288, %v2938
        %v3007 = vadd.f32 %v2289, %v2943
        %v3008 = vadd.f32 %v2290, %v2946
        %v3009 = vadd.f32 %v2291, %v2951
        %v3010 = vadd.f32 %v2292, %v2954
        %v3011 = vadd.f32 %v2293, %v2959
        %v3012 = vadd.f32 %v2294, %v2962
        %v3013 = vld [vmem:[%s344 + $0xc] sm:$0xe]
        %s3014 = scalar_lea.vmem %s351, 20
        %v3015 = vld [vmem:[%s3014] sm:$0xf]
        %v3017 = vunpack.c.l.b16 %v3013
        %v3018 = vpack.c.b16 %v2396, %v3017
        %v3019 = vrot.slane %v3018, 1
        %v3020 = vrot.slane %v2445, 1
        %v3021 = vsel %vm1379, %v3019, %v3020
        %v3022 = vrot.slane %v2446, 1
        %v3023 = vsel %vm1379, %v3020, %v3022
        %v3024 = vrot.slane %v2447, 1
        %v3025 = vsel %vm1379, %v3022, %v3024
        %v3026 = vrot.slane %v2448, 1
        %v3027 = vsel %vm1379, %v3024, %v3026
        %v3028 = vrot.slane %v2449, 1
        %v3029 = vsel %vm1379, %v3026, %v3028
        %v3030 = vrot.slane %v2450, 1
        %v3031 = vsel %vm1379, %v3028, %v3030
        %v3032 = vrot.slane %v2451, 1
        %v3033 = vsel %vm1379, %v3030, %v3032
        %v3034 = vrot.slane %v2452, 1
        %v3035 = vsel %vm1379, %v3032, %v3034
        %v3036 = vrot.slane %v2453, 1
        %v3037 = vsel %vm1379, %v3034, %v3036
        %v3038 = vrot.slane %v2454, 1
        %v3039 = vsel %vm1379, %v3036, %v3038
        %v3040 = vrot.slane %v2455, 1
        %v3041 = vsel %vm1379, %v3038, %v3040
        %v3042 = vrot.slane %v2456, 1
        %v3043 = vsel %vm1379, %v3040, %v3042
        %v3044 = vrot.slane %v2457, 1
        %v3045 = vsel %vm1379, %v3042, %v3044
        %v3046 = vrot.slane %v2458, 1
        %v3047 = vsel %vm1379, %v3044, %v3046
        %v3048 = vrot.slane %v2459, 1
        %v3049 = vsel %vm1379, %v3046, %v3048
        %v3050 = vrot.slane %v2460, 1
        %v3051 = vsel %vm1379, %v3048, %v3050
        %v3052 = vrot.slane %v2461, 1
        %v3053 = vsel %vm1379, %v3050, %v3052
        %v3054 = vrot.slane %v2462, 1
        %v3055 = vsel %vm1379, %v3052, %v3054
        %v3056 = vrot.slane %v2463, 1
        %v3057 = vsel %vm1379, %v3054, %v3056
        %v3058 = vrot.slane %v2464, 1
        %v3059 = vsel %vm1379, %v3056, %v3058
        %v3060 = vrot.slane %v2465, 1
        %v3061 = vsel %vm1379, %v3058, %v3060
        %v3062 = vrot.slane %v2466, 1
        %v3063 = vsel %vm1379, %v3060, %v3062
        %v3064 = vrot.slane %v2467, 1
        %v3065 = vsel %vm1379, %v3062, %v3064
        %v3066 = vrot.slane %v2468, 1
        %v3067 = vsel %vm1379, %v3064, %v3066
        %v3069 = vsel %vm795, %v3021, 0
        %v3072 = vsel %vm795, %v3023, 0
        %v3075 = vsel %vm795, %v3025, 0
        %v3078 = vsel %vm795, %v3027, 0
        %v3081 = vsel %vm795, %v3029, 0
        %v3084 = vsel %vm795, %v3031, 0
        %v3087 = vsel %vm795, %v3033, 0
        %v3090 = vsel %vm795, %v3035, 0
        %v3093 = vsel %vm795, %v3037, 0
        %v3096 = vsel %vm795, %v3039, 0
        %v3099 = vsel %vm795, %v3041, 0
        %v3102 = vsel %vm795, %v3043, 0
        %v3105 = vsel %vm795, %v3045, 0
        %v3108 = vsel %vm795, %v3047, 0
        %v3111 = vsel %vm795, %v3049, 0
        %v3114 = vsel %vm795, %v3051, 0
        %v3117 = vsel %vm795, %v3053, 0
        %v3120 = vsel %vm795, %v3055, 0
        %v3123 = vsel %vm795, %v3057, 0
        %v3126 = vsel %vm795, %v3059, 0
        %v3129 = vsel %vm795, %v3061, 0
        %v3132 = vsel %vm795, %v3063, 0
        %v3135 = vsel %vm795, %v3065, 0
        %v3138 = vsel %vm795, %v3067, 0
        %v3141 = vsel %vm868, %v3015, 0
        %3143 = vmatprep.subr.bf16.mxu0 0
        %3144 = vmatpush1.bf16.msra.mxu0 0
        %3145 = vmatprep.subr.bf16.mxu0 0
        %3146 = vmatpush1.bf16.msra.mxu0 0
        %3147 = vmatprep.subr.bf16.mxu0 0
        %3148 = vmatpush1.bf16.msra.mxu0 0
        %3149 = vmatprep.subr.bf16.mxu0 0
        %3150 = vmatpush1.bf16.msra.mxu0 0
        %3151 = vmatprep.subr.bf16.mxu0 0
        %3152 = vmatpush1.bf16.msra.mxu0 0
        %3153 = vmatprep.subr.bf16.mxu0 0
        %3154 = vmatpush1.bf16.msra.mxu0 0
        %3155 = vmatprep.subr.bf16.mxu0 0
        %3156 = vmatpush1.bf16.msra.mxu0 0
        %3157 = vmatprep.subr.bf16.mxu0 0
        %3158 = vmatpush1.bf16.msra.mxu0 %v3141
        %3159 = vmatprep.subr.bf16.mxu0 0
        %3160 = vmatpush2.bf16.msra.mxu0 0
        %3161 = vmatprep.subr.bf16.mxu0 0
        %3162 = vmatpush2.bf16.msra.mxu0 0
        %3163 = vmatprep.subr.bf16.mxu0 0
        %3164 = vmatpush2.bf16.msra.mxu0 0
        %3165 = vmatprep.subr.bf16.mxu0 0
        %3166 = vmatpush2.bf16.msra.mxu0 0
        %3167 = vmatprep.subr.bf16.mxu0 0
        %3168 = vmatpush2.bf16.msra.mxu0 0
        %3169 = vmatprep.subr.bf16.mxu0 0
        %3170 = vmatpush2.bf16.msra.mxu0 0
        %3171 = vmatprep.subr.bf16.mxu0 0
        %3172 = vmatpush2.bf16.msra.mxu0 0
        %3173 = vmatprep.subr.bf16.mxu0 0
        %3174 = vmatpush2.bf16.msra.mxu0 0
        %3175 = vmatprep.mubr.bf16.mxu0 0
        %3176 = vmatmul.mubr.bf16.gmra.mxu0 %v3069
        %v3177 = vpop.f32.mrf.mxu0
        %v3178 = vadd.f32 0.0, %v3177
        %v3179 = vpop.f32.mrf.mxu0
        %v3180 = vpop.f32.mrf.mxu0
        %v3181 = vadd.f32 0.0, %v3180
        %v3182 = vpop.f32.mrf.mxu0
        %3183 = vmatprep.mubr.bf16.mxu0 0
        %3184 = vmatmul.mubr.bf16.gmra.mxu0 %v3072
        %v3185 = vpop.f32.mrf.mxu0
        %v3186 = vadd.f32 0.0, %v3185
        %v3187 = vpop.f32.mrf.mxu0
        %v3188 = vpop.f32.mrf.mxu0
        %v3189 = vadd.f32 0.0, %v3188
        %v3190 = vpop.f32.mrf.mxu0
        %3191 = vmatprep.mubr.bf16.mxu0 0
        %3192 = vmatmul.mubr.bf16.gmra.mxu0 %v3075
        %v3193 = vpop.f32.mrf.mxu0
        %v3194 = vadd.f32 0.0, %v3193
        %v3195 = vpop.f32.mrf.mxu0
        %v3196 = vpop.f32.mrf.mxu0
        %v3197 = vadd.f32 0.0, %v3196
        %v3198 = vpop.f32.mrf.mxu0
        %3199 = vmatprep.mubr.bf16.mxu0 0
        %3200 = vmatmul.mubr.bf16.gmra.mxu0 %v3078
        %v3201 = vpop.f32.mrf.mxu0
        %v3202 = vadd.f32 0.0, %v3201
        %v3203 = vpop.f32.mrf.mxu0
        %v3204 = vpop.f32.mrf.mxu0
        %v3205 = vadd.f32 0.0, %v3204
        %v3206 = vpop.f32.mrf.mxu0
        %3207 = vmatprep.mubr.bf16.mxu0 0
        %3208 = vmatmul.mubr.bf16.gmra.mxu0 %v3081
        %v3209 = vpop.f32.mrf.mxu0
        %v3210 = vadd.f32 0.0, %v3209
        %v3211 = vpop.f32.mrf.mxu0
        %v3212 = vpop.f32.mrf.mxu0
        %v3213 = vadd.f32 0.0, %v3212
        %v3214 = vpop.f32.mrf.mxu0
        %3215 = vmatprep.mubr.bf16.mxu0 0
        %3216 = vmatmul.mubr.bf16.gmra.mxu0 %v3084
        %v3217 = vpop.f32.mrf.mxu0
        %v3218 = vadd.f32 0.0, %v3217
        %v3219 = vpop.f32.mrf.mxu0
        %v3220 = vpop.f32.mrf.mxu0
        %v3221 = vadd.f32 0.0, %v3220
        %v3222 = vpop.f32.mrf.mxu0
        %3223 = vmatprep.mubr.bf16.mxu0 0
        %3224 = vmatmul.mubr.bf16.gmra.mxu0 %v3087
        %v3225 = vpop.f32.mrf.mxu0
        %v3226 = vadd.f32 0.0, %v3225
        %v3227 = vpop.f32.mrf.mxu0
        %v3228 = vpop.f32.mrf.mxu0
        %v3229 = vadd.f32 0.0, %v3228
        %v3230 = vpop.f32.mrf.mxu0
        %3231 = vmatprep.mubr.bf16.mxu0 0
        %3232 = vmatmul.mubr.bf16.gmra.mxu0 %v3090
        %v3233 = vpop.f32.mrf.mxu0
        %v3234 = vadd.f32 0.0, %v3233
        %v3235 = vpop.f32.mrf.mxu0
        %v3236 = vpop.f32.mrf.mxu0
        %v3237 = vadd.f32 0.0, %v3236
        %v3238 = vpop.f32.mrf.mxu0
        %3239 = vmatprep.mubr.bf16.mxu0 0
        %3240 = vmatmul.mubr.bf16.gmra.mxu0 %v3093
        %v3241 = vpop.f32.mrf.mxu0
        %v3242 = vadd.f32 0.0, %v3241
        %v3243 = vpop.f32.mrf.mxu0
        %v3244 = vpop.f32.mrf.mxu0
        %v3245 = vadd.f32 0.0, %v3244
        %v3246 = vpop.f32.mrf.mxu0
        %3247 = vmatprep.mubr.bf16.mxu0 0
        %3248 = vmatmul.mubr.bf16.gmra.mxu0 %v3096
        %v3249 = vpop.f32.mrf.mxu0
        %v3250 = vadd.f32 0.0, %v3249
        %v3251 = vpop.f32.mrf.mxu0
        %v3252 = vpop.f32.mrf.mxu0
        %v3253 = vadd.f32 0.0, %v3252
        %v3254 = vpop.f32.mrf.mxu0
        %3255 = vmatprep.mubr.bf16.mxu0 0
        %3256 = vmatmul.mubr.bf16.gmra.mxu0 %v3099
        %v3257 = vpop.f32.mrf.mxu0
        %v3258 = vadd.f32 0.0, %v3257
        %v3259 = vpop.f32.mrf.mxu0
        %v3260 = vpop.f32.mrf.mxu0
        %v3261 = vadd.f32 0.0, %v3260
        %v3262 = vpop.f32.mrf.mxu0
        %3263 = vmatprep.mubr.bf16.mxu0 0
        %3264 = vmatmul.mubr.bf16.gmra.mxu0 %v3102
        %v3265 = vpop.f32.mrf.mxu0
        %v3266 = vadd.f32 0.0, %v3265
        %v3267 = vpop.f32.mrf.mxu0
        %v3268 = vpop.f32.mrf.mxu0
        %v3269 = vadd.f32 0.0, %v3268
        %v3270 = vpop.f32.mrf.mxu0
        %3271 = vmatprep.mubr.bf16.mxu0 0
        %3272 = vmatmul.mubr.bf16.gmra.mxu0 %v3105
        %v3273 = vpop.f32.mrf.mxu0
        %v3274 = vadd.f32 0.0, %v3273
        %v3275 = vpop.f32.mrf.mxu0
        %v3276 = vpop.f32.mrf.mxu0
        %v3277 = vadd.f32 0.0, %v3276
        %v3278 = vpop.f32.mrf.mxu0
        %3279 = vmatprep.mubr.bf16.mxu0 0
        %3280 = vmatmul.mubr.bf16.gmra.mxu0 %v3108
        %v3281 = vpop.f32.mrf.mxu0
        %v3282 = vadd.f32 0.0, %v3281
        %v3283 = vpop.f32.mrf.mxu0
        %v3284 = vpop.f32.mrf.mxu0
        %v3285 = vadd.f32 0.0, %v3284
        %v3286 = vpop.f32.mrf.mxu0
        %3287 = vmatprep.mubr.bf16.mxu0 0
        %3288 = vmatmul.mubr.bf16.gmra.mxu0 %v3111
        %v3289 = vpop.f32.mrf.mxu0
        %v3290 = vadd.f32 0.0, %v3289
        %v3291 = vpop.f32.mrf.mxu0
        %v3292 = vpop.f32.mrf.mxu0
        %v3293 = vadd.f32 0.0, %v3292
        %v3294 = vpop.f32.mrf.mxu0
        %3295 = vmatprep.mubr.bf16.mxu0 0
        %3296 = vmatmul.mubr.bf16.gmra.mxu0 %v3114
        %v3297 = vpop.f32.mrf.mxu0
        %v3298 = vadd.f32 0.0, %v3297
        %v3299 = vpop.f32.mrf.mxu0
        %v3300 = vpop.f32.mrf.mxu0
        %v3301 = vadd.f32 0.0, %v3300
        %v3302 = vpop.f32.mrf.mxu0
        %3303 = vmatprep.mubr.bf16.mxu0 0
        %3304 = vmatmul.mubr.bf16.gmra.mxu0 %v3117
        %v3305 = vpop.f32.mrf.mxu0
        %v3306 = vadd.f32 0.0, %v3305
        %v3307 = vpop.f32.mrf.mxu0
        %v3308 = vpop.f32.mrf.mxu0
        %v3309 = vadd.f32 0.0, %v3308
        %v3310 = vpop.f32.mrf.mxu0
        %3311 = vmatprep.mubr.bf16.mxu0 0
        %3312 = vmatmul.mubr.bf16.gmra.mxu0 %v3120
        %v3313 = vpop.f32.mrf.mxu0
        %v3314 = vadd.f32 0.0, %v3313
        %v3315 = vpop.f32.mrf.mxu0
        %v3316 = vpop.f32.mrf.mxu0
        %v3317 = vadd.f32 0.0, %v3316
        %v3318 = vpop.f32.mrf.mxu0
        %3319 = vmatprep.mubr.bf16.mxu0 0
        %3320 = vmatmul.mubr.bf16.gmra.mxu0 %v3123
        %v3321 = vpop.f32.mrf.mxu0
        %v3322 = vadd.f32 0.0, %v3321
        %v3323 = vpop.f32.mrf.mxu0
        %v3324 = vpop.f32.mrf.mxu0
        %v3325 = vadd.f32 0.0, %v3324
        %v3326 = vpop.f32.mrf.mxu0
        %3327 = vmatprep.mubr.bf16.mxu0 0
        %3328 = vmatmul.mubr.bf16.gmra.mxu0 %v3126
        %v3329 = vpop.f32.mrf.mxu0
        %v3330 = vadd.f32 0.0, %v3329
        %v3331 = vpop.f32.mrf.mxu0
        %v3332 = vpop.f32.mrf.mxu0
        %v3333 = vadd.f32 0.0, %v3332
        %v3334 = vpop.f32.mrf.mxu0
        %3335 = vmatprep.mubr.bf16.mxu0 0
        %3336 = vmatmul.mubr.bf16.gmra.mxu0 %v3129
        %v3337 = vpop.f32.mrf.mxu0
        %v3338 = vadd.f32 0.0, %v3337
        %v3339 = vpop.f32.mrf.mxu0
        %v3340 = vpop.f32.mrf.mxu0
        %v3341 = vadd.f32 0.0, %v3340
        %v3342 = vpop.f32.mrf.mxu0
        %3343 = vmatprep.mubr.bf16.mxu0 0
        %3344 = vmatmul.mubr.bf16.gmra.mxu0 %v3132
        %v3345 = vpop.f32.mrf.mxu0
        %v3346 = vadd.f32 0.0, %v3345
        %v3347 = vpop.f32.mrf.mxu0
        %v3348 = vpop.f32.mrf.mxu0
        %v3349 = vadd.f32 0.0, %v3348
        %v3350 = vpop.f32.mrf.mxu0
        %3351 = vmatprep.mubr.bf16.mxu0 0
        %3352 = vmatmul.mubr.bf16.gmra.mxu0 %v3135
        %v3353 = vpop.f32.mrf.mxu0
        %v3354 = vadd.f32 0.0, %v3353
        %v3355 = vpop.f32.mrf.mxu0
        %v3356 = vpop.f32.mrf.mxu0
        %v3357 = vadd.f32 0.0, %v3356
        %v3358 = vpop.f32.mrf.mxu0
        %3359 = vmatprep.mubr.bf16.mxu0 0
        %3360 = vmatmul.mubr.bf16.gmra.mxu0 %v3138
        %v3361 = vpop.f32.mrf.mxu0
        %v3362 = vadd.f32 0.0, %v3361
        %v3363 = vpop.f32.mrf.mxu0
        %v3364 = vpop.f32.mrf.mxu0
        %v3365 = vadd.f32 0.0, %v3364
        %v3366 = vpop.f32.mrf.mxu0
        %3367 = vdwg.mxu0
        %v3368 = vadd.f32 %v2965, %v3178
        %v3369 = vadd.f32 %v2966, %v3181
        %v3370 = vadd.f32 %v2967, %v3186
        %v3371 = vadd.f32 %v2968, %v3189
        %v3372 = vadd.f32 %v2969, %v3194
        %v3373 = vadd.f32 %v2970, %v3197
        %v3374 = vadd.f32 %v2971, %v3202
        %v3375 = vadd.f32 %v2972, %v3205
        %v3376 = vadd.f32 %v2973, %v3210
        %v3377 = vadd.f32 %v2974, %v3213
        %v3378 = vadd.f32 %v2975, %v3218
        %v3379 = vadd.f32 %v2976, %v3221
        %v3380 = vadd.f32 %v2977, %v3226
        %v3381 = vadd.f32 %v2978, %v3229
        %v3382 = vadd.f32 %v2979, %v3234
        %v3383 = vadd.f32 %v2980, %v3237
        %v3384 = vadd.f32 %v2981, %v3242
        %v3385 = vadd.f32 %v2982, %v3245
        %v3386 = vadd.f32 %v2983, %v3250
        %v3387 = vadd.f32 %v2984, %v3253
        %v3388 = vadd.f32 %v2985, %v3258
        %v3389 = vadd.f32 %v2986, %v3261
        %v3390 = vadd.f32 %v2987, %v3266
        %v3391 = vadd.f32 %v2988, %v3269
        %v3392 = vadd.f32 %v2989, %v3274
        %v3393 = vadd.f32 %v2990, %v3277
        %v3394 = vadd.f32 %v2991, %v3282
        %v3395 = vadd.f32 %v2992, %v3285
        %v3396 = vadd.f32 %v2993, %v3290
        %v3397 = vadd.f32 %v2994, %v3293
        %v3398 = vadd.f32 %v2995, %v3298
        %v3399 = vadd.f32 %v2996, %v3301
        %v3400 = vadd.f32 %v2997, %v3306
        %v3401 = vadd.f32 %v2998, %v3309
        %v3402 = vadd.f32 %v2999, %v3314
        %v3403 = vadd.f32 %v3000, %v3317
        %v3404 = vadd.f32 %v3001, %v3322
        %v3405 = vadd.f32 %v3002, %v3325
        %v3406 = vadd.f32 %v3003, %v3330
        %v3407 = vadd.f32 %v3004, %v3333
        %v3408 = vadd.f32 %v3005, %v3338
        %v3409 = vadd.f32 %v3006, %v3341
        %v3410 = vadd.f32 %v3007, %v3346
        %v3411 = vadd.f32 %v3008, %v3349
        %v3412 = vadd.f32 %v3009, %v3354
        %v3413 = vadd.f32 %v3010, %v3357
        %v3414 = vadd.f32 %v3011, %v3362
        %v3415 = vadd.f32 %v3012, %v3365
        %v3416 = vld [vmem:[%s344 + $0x18] sm:$0xf]
        %v3417 = vld [vmem:[%s344 + $0x1c] sm:$0xf]
        %v3418 = vld [vmem:[%s344 + $0x20] sm:$0xf]
        %v3419 = vld [vmem:[%s344 + $0x24] sm:$0xf]
        %v3420 = vld [vmem:[%s344 + $0x28] sm:$0xf]
        %v3421 = vld [vmem:[%s344 + $0x2c] sm:$0xf]
        %v3422 = vld [vmem:[%s344 + $0x30] sm:$0xf]
        %v3423 = vld [vmem:[%s344 + $0x34] sm:$0xf]
        %v3424 = vld [vmem:[%s344 + $0x38] sm:$0xf]
        %v3425 = vld [vmem:[%s344 + $0x3c] sm:$0xf]
        %v3426 = vld [vmem:[%s344 + $0x40] sm:$0xf]
        %v3427 = vld [vmem:[%s344 + $0x44] sm:$0xf]
        %v3428 = vld [vmem:[%s344 + $0x48] sm:$0xf]
        %v3429 = vld [vmem:[%s344 + $0x4c] sm:$0xf]
        %v3430 = vld [vmem:[%s344 + $0x50] sm:$0xf]
        %v3431 = vld [vmem:[%s344 + $0x54] sm:$0xf]
        %v3432 = vld [vmem:[%s344 + $0x58] sm:$0xf]
        %v3433 = vld [vmem:[%s344 + $0x5c] sm:$0xf]
        %v3434 = vld [vmem:[%s344 + $0x60] sm:$0xf]
        %v3435 = vld [vmem:[%s344 + $0x64] sm:$0xf]
        %v3436 = vld [vmem:[%s344 + $0x68] sm:$0xf]
        %v3437 = vld [vmem:[%s344 + $0x6c] sm:$0xf]
        %v3438 = vld [vmem:[%s344 + $0x70] sm:$0xf]
        %v3439 = vld [vmem:[%s344 + $0x74] sm:$0xf]
        %v3440 = vld [vmem:[%s344 + $0x78] sm:$0xf]
        %v3441 = vld [vmem:[%s344 + $0x7c] sm:$0xf]
        %v3442 = vld [vmem:[%s344 + $0x80] sm:$0xf]
        %v3443 = vld [vmem:[%s344 + $0x84] sm:$0xf]
        %v3444 = vld [vmem:[%s344 + $0x88] sm:$0xf]
        %v3445 = vld [vmem:[%s344 + $0x8c] sm:$0xf]
        %v3446 = vld [vmem:[%s344 + $0x90] sm:$0xf]
        %v3447 = vld [vmem:[%s344 + $0x94] sm:$0xf]
        %v3448 = vld [vmem:[%s344 + $0x98] sm:$0xf]
        %v3449 = vld [vmem:[%s344 + $0x9c] sm:$0xf]
        %v3450 = vld [vmem:[%s344 + $0xa0] sm:$0xf]
        %v3451 = vld [vmem:[%s344 + $0xa4] sm:$0xf]
        %v3452 = vld [vmem:[%s344 + $0xa8] sm:$0xf]
        %v3453 = vld [vmem:[%s344 + $0xac] sm:$0xf]
        %v3454 = vld [vmem:[%s344 + $0xb0] sm:$0xf]
        %v3455 = vld [vmem:[%s344 + $0xb4] sm:$0xf]
        %v3456 = vld [vmem:[%s344 + $0xb8] sm:$0xf]
        %v3457 = vld [vmem:[%s344 + $0xbc] sm:$0xf]
        %v3458 = vld [vmem:[%s344 + $0xc0] sm:$0xf]
        %v3459 = vld [vmem:[%s344 + $0xc4] sm:$0xf]
        %v3460 = vld [vmem:[%s344 + $0xc8] sm:$0xf]
        %v3461 = vld [vmem:[%s344 + $0xcc] sm:$0xf]
        %v3462 = vld [vmem:[%s344 + $0xd0] sm:$0xf]
        %v3463 = vld [vmem:[%s344 + $0xd4] sm:$0xf]
        %s3464 = scalar_lea.vmem %s351, 24
        %v3465 = vld [vmem:[%s3464] sm:$0xf]
        %v3514 = vunpack.c.l.b16 %v3416
        %v3515 = vunpack.c.l.b16 %v3417
        %v3516 = vunpack.c.l.b16 %v3418
        %v3517 = vunpack.c.l.b16 %v3419
        %v3518 = vunpack.c.l.b16 %v3420
        %v3519 = vunpack.c.l.b16 %v3421
        %v3520 = vunpack.c.l.b16 %v3422
        %v3521 = vunpack.c.l.b16 %v3423
        %v3522 = vunpack.c.l.b16 %v3424
        %v3523 = vunpack.c.l.b16 %v3425
        %v3524 = vunpack.c.l.b16 %v3426
        %v3525 = vunpack.c.l.b16 %v3427
        %v3526 = vunpack.c.l.b16 %v3428
        %v3527 = vunpack.c.l.b16 %v3429
        %v3528 = vunpack.c.l.b16 %v3430
        %v3529 = vunpack.c.l.b16 %v3431
        %v3530 = vunpack.c.l.b16 %v3432
        %v3531 = vunpack.c.l.b16 %v3433
        %v3532 = vunpack.c.l.b16 %v3434
        %v3533 = vunpack.c.l.b16 %v3435
        %v3534 = vunpack.c.l.b16 %v3436
        %v3535 = vunpack.c.l.b16 %v3437
        %v3536 = vunpack.c.l.b16 %v3438
        %v3537 = vunpack.c.l.b16 %v3439
        %v3538 = vunpack.c.l.b16 %v3440
        %v3539 = vunpack.c.l.b16 %v3441
        %v3540 = vunpack.c.l.b16 %v3442
        %v3541 = vunpack.c.l.b16 %v3443
        %v3542 = vunpack.c.l.b16 %v3444
        %v3543 = vunpack.c.l.b16 %v3445
        %v3544 = vunpack.c.l.b16 %v3446
        %v3545 = vunpack.c.l.b16 %v3447
        %v3546 = vunpack.c.l.b16 %v3448
        %v3547 = vunpack.c.l.b16 %v3449
        %v3548 = vunpack.c.l.b16 %v3450
        %v3549 = vunpack.c.l.b16 %v3451
        %v3550 = vunpack.c.l.b16 %v3452
        %v3551 = vunpack.c.l.b16 %v3453
        %v3552 = vunpack.c.l.b16 %v3454
        %v3553 = vunpack.c.l.b16 %v3455
        %v3554 = vunpack.c.l.b16 %v3456
        %v3555 = vunpack.c.l.b16 %v3457
        %v3556 = vunpack.c.l.b16 %v3458
        %v3557 = vunpack.c.l.b16 %v3459
        %v3558 = vunpack.c.l.b16 %v3460
        %v3559 = vunpack.c.l.b16 %v3461
        %v3560 = vunpack.c.l.b16 %v3462
        %v3561 = vunpack.c.l.b16 %v3463
        %v3562 = vpack.c.b16 %v3515, %v3514
        %v3563 = vpack.c.b16 %v3517, %v3516
        %v3564 = vpack.c.b16 %v3519, %v3518
        %v3565 = vpack.c.b16 %v3521, %v3520
        %v3566 = vpack.c.b16 %v3523, %v3522
        %v3567 = vpack.c.b16 %v3525, %v3524
        %v3568 = vpack.c.b16 %v3527, %v3526
        %v3569 = vpack.c.b16 %v3529, %v3528
        %v3570 = vpack.c.b16 %v3531, %v3530
        %v3571 = vpack.c.b16 %v3533, %v3532
        %v3572 = vpack.c.b16 %v3535, %v3534
        %v3573 = vpack.c.b16 %v3537, %v3536
        %v3574 = vpack.c.b16 %v3539, %v3538
        %v3575 = vpack.c.b16 %v3541, %v3540
        %v3576 = vpack.c.b16 %v3543, %v3542
        %v3577 = vpack.c.b16 %v3545, %v3544
        %v3578 = vpack.c.b16 %v3547, %v3546
        %v3579 = vpack.c.b16 %v3549, %v3548
        %v3580 = vpack.c.b16 %v3551, %v3550
        %v3581 = vpack.c.b16 %v3553, %v3552
        %v3582 = vpack.c.b16 %v3555, %v3554
        %v3583 = vpack.c.b16 %v3557, %v3556
        %v3584 = vpack.c.b16 %v3559, %v3558
        %v3585 = vpack.c.b16 %v3561, %v3560
        %v3587 = vsel %vm795, %v3562, 0
        %v3590 = vsel %vm795, %v3563, 0
        %v3593 = vsel %vm795, %v3564, 0
        %v3596 = vsel %vm795, %v3565, 0
        %v3599 = vsel %vm795, %v3566, 0
        %v3602 = vsel %vm795, %v3567, 0
        %v3605 = vsel %vm795, %v3568, 0
        %v3608 = vsel %vm795, %v3569, 0
        %v3611 = vsel %vm795, %v3570, 0
        %v3614 = vsel %vm795, %v3571, 0
        %v3617 = vsel %vm795, %v3572, 0
        %v3620 = vsel %vm795, %v3573, 0
        %v3623 = vsel %vm795, %v3574, 0
        %v3626 = vsel %vm795, %v3575, 0
        %v3629 = vsel %vm795, %v3576, 0
        %v3632 = vsel %vm795, %v3577, 0
        %v3635 = vsel %vm795, %v3578, 0
        %v3638 = vsel %vm795, %v3579, 0
        %v3641 = vsel %vm795, %v3580, 0
        %v3644 = vsel %vm795, %v3581, 0
        %v3647 = vsel %vm795, %v3582, 0
        %v3650 = vsel %vm795, %v3583, 0
        %v3653 = vsel %vm795, %v3584, 0
        %v3656 = vsel %vm795, %v3585, 0
        %v3659 = vsel %vm868, %v3465, 0
        %3661 = vmatprep.subr.bf16.mxu0 0
        %3662 = vmatpush1.bf16.msra.mxu0 0
        %3663 = vmatprep.subr.bf16.mxu0 0
        %3664 = vmatpush1.bf16.msra.mxu0 0
        %3665 = vmatprep.subr.bf16.mxu0 0
        %3666 = vmatpush1.bf16.msra.mxu0 0
        %3667 = vmatprep.subr.bf16.mxu0 0
        %3668 = vmatpush1.bf16.msra.mxu0 0
        %3669 = vmatprep.subr.bf16.mxu0 0
        %3670 = vmatpush1.bf16.msra.mxu0 0
        %3671 = vmatprep.subr.bf16.mxu0 0
        %3672 = vmatpush1.bf16.msra.mxu0 0
        %3673 = vmatprep.subr.bf16.mxu0 0
        %3674 = vmatpush1.bf16.msra.mxu0 0
        %3675 = vmatprep.subr.bf16.mxu0 0
        %3676 = vmatpush1.bf16.msra.mxu0 %v3659
        %3677 = vmatprep.subr.bf16.mxu0 0
        %3678 = vmatpush2.bf16.msra.mxu0 0
        %3679 = vmatprep.subr.bf16.mxu0 0
        %3680 = vmatpush2.bf16.msra.mxu0 0
        %3681 = vmatprep.subr.bf16.mxu0 0
        %3682 = vmatpush2.bf16.msra.mxu0 0
        %3683 = vmatprep.subr.bf16.mxu0 0
        %3684 = vmatpush2.bf16.msra.mxu0 0
        %3685 = vmatprep.subr.bf16.mxu0 0
        %3686 = vmatpush2.bf16.msra.mxu0 0
        %3687 = vmatprep.subr.bf16.mxu0 0
        %3688 = vmatpush2.bf16.msra.mxu0 0
        %3689 = vmatprep.subr.bf16.mxu0 0
        %3690 = vmatpush2.bf16.msra.mxu0 0
        %3691 = vmatprep.subr.bf16.mxu0 0
        %3692 = vmatpush2.bf16.msra.mxu0 0
        %3693 = vmatprep.mubr.bf16.mxu0 0
        %3694 = vmatmul.mubr.bf16.gmra.mxu0 %v3587
        %v3695 = vpop.f32.mrf.mxu0
        %v3696 = vadd.f32 0.0, %v3695
        %v3697 = vpop.f32.mrf.mxu0
        %v3698 = vpop.f32.mrf.mxu0
        %v3699 = vadd.f32 0.0, %v3698
        %v3700 = vpop.f32.mrf.mxu0
        %3701 = vmatprep.mubr.bf16.mxu0 0
        %3702 = vmatmul.mubr.bf16.gmra.mxu0 %v3590
        %v3703 = vpop.f32.mrf.mxu0
        %v3704 = vadd.f32 0.0, %v3703
        %v3705 = vpop.f32.mrf.mxu0
        %v3706 = vpop.f32.mrf.mxu0
        %v3707 = vadd.f32 0.0, %v3706
        %v3708 = vpop.f32.mrf.mxu0
        %3709 = vmatprep.mubr.bf16.mxu0 0
        %3710 = vmatmul.mubr.bf16.gmra.mxu0 %v3593
        %v3711 = vpop.f32.mrf.mxu0
        %v3712 = vadd.f32 0.0, %v3711
        %v3713 = vpop.f32.mrf.mxu0
        %v3714 = vpop.f32.mrf.mxu0
        %v3715 = vadd.f32 0.0, %v3714
        %v3716 = vpop.f32.mrf.mxu0
        %3717 = vmatprep.mubr.bf16.mxu0 0
        %3718 = vmatmul.mubr.bf16.gmra.mxu0 %v3596
        %v3719 = vpop.f32.mrf.mxu0
        %v3720 = vadd.f32 0.0, %v3719
        %v3721 = vpop.f32.mrf.mxu0
        %v3722 = vpop.f32.mrf.mxu0
        %v3723 = vadd.f32 0.0, %v3722
        %v3724 = vpop.f32.mrf.mxu0
        %3725 = vmatprep.mubr.bf16.mxu0 0
        %3726 = vmatmul.mubr.bf16.gmra.mxu0 %v3599
        %v3727 = vpop.f32.mrf.mxu0
        %v3728 = vadd.f32 0.0, %v3727
        %v3729 = vpop.f32.mrf.mxu0
        %v3730 = vpop.f32.mrf.mxu0
        %v3731 = vadd.f32 0.0, %v3730
        %v3732 = vpop.f32.mrf.mxu0
        %3733 = vmatprep.mubr.bf16.mxu0 0
        %3734 = vmatmul.mubr.bf16.gmra.mxu0 %v3602
        %v3735 = vpop.f32.mrf.mxu0
        %v3736 = vadd.f32 0.0, %v3735
        %v3737 = vpop.f32.mrf.mxu0
        %v3738 = vpop.f32.mrf.mxu0
        %v3739 = vadd.f32 0.0, %v3738
        %v3740 = vpop.f32.mrf.mxu0
        %3741 = vmatprep.mubr.bf16.mxu0 0
        %3742 = vmatmul.mubr.bf16.gmra.mxu0 %v3605
        %v3743 = vpop.f32.mrf.mxu0
        %v3744 = vadd.f32 0.0, %v3743
        %v3745 = vpop.f32.mrf.mxu0
        %v3746 = vpop.f32.mrf.mxu0
        %v3747 = vadd.f32 0.0, %v3746
        %v3748 = vpop.f32.mrf.mxu0
        %3749 = vmatprep.mubr.bf16.mxu0 0
        %3750 = vmatmul.mubr.bf16.gmra.mxu0 %v3608
        %v3751 = vpop.f32.mrf.mxu0
        %v3752 = vadd.f32 0.0, %v3751
        %v3753 = vpop.f32.mrf.mxu0
        %v3754 = vpop.f32.mrf.mxu0
        %v3755 = vadd.f32 0.0, %v3754
        %v3756 = vpop.f32.mrf.mxu0
        %3757 = vmatprep.mubr.bf16.mxu0 0
        %3758 = vmatmul.mubr.bf16.gmra.mxu0 %v3611
        %v3759 = vpop.f32.mrf.mxu0
        %v3760 = vadd.f32 0.0, %v3759
        %v3761 = vpop.f32.mrf.mxu0
        %v3762 = vpop.f32.mrf.mxu0
        %v3763 = vadd.f32 0.0, %v3762
        %v3764 = vpop.f32.mrf.mxu0
        %3765 = vmatprep.mubr.bf16.mxu0 0
        %3766 = vmatmul.mubr.bf16.gmra.mxu0 %v3614
        %v3767 = vpop.f32.mrf.mxu0
        %v3768 = vadd.f32 0.0, %v3767
        %v3769 = vpop.f32.mrf.mxu0
        %v3770 = vpop.f32.mrf.mxu0
        %v3771 = vadd.f32 0.0, %v3770
        %v3772 = vpop.f32.mrf.mxu0
        %3773 = vmatprep.mubr.bf16.mxu0 0
        %3774 = vmatmul.mubr.bf16.gmra.mxu0 %v3617
        %v3775 = vpop.f32.mrf.mxu0
        %v3776 = vadd.f32 0.0, %v3775
        %v3777 = vpop.f32.mrf.mxu0
        %v3778 = vpop.f32.mrf.mxu0
        %v3779 = vadd.f32 0.0, %v3778
        %v3780 = vpop.f32.mrf.mxu0
        %3781 = vmatprep.mubr.bf16.mxu0 0
        %3782 = vmatmul.mubr.bf16.gmra.mxu0 %v3620
        %v3783 = vpop.f32.mrf.mxu0
        %v3784 = vadd.f32 0.0, %v3783
        %v3785 = vpop.f32.mrf.mxu0
        %v3786 = vpop.f32.mrf.mxu0
        %v3787 = vadd.f32 0.0, %v3786
        %v3788 = vpop.f32.mrf.mxu0
        %3789 = vmatprep.mubr.bf16.mxu0 0
        %3790 = vmatmul.mubr.bf16.gmra.mxu0 %v3623
        %v3791 = vpop.f32.mrf.mxu0
        %v3792 = vadd.f32 0.0, %v3791
        %v3793 = vpop.f32.mrf.mxu0
        %v3794 = vpop.f32.mrf.mxu0
        %v3795 = vadd.f32 0.0, %v3794
        %v3796 = vpop.f32.mrf.mxu0
        %3797 = vmatprep.mubr.bf16.mxu0 0
        %3798 = vmatmul.mubr.bf16.gmra.mxu0 %v3626
        %v3799 = vpop.f32.mrf.mxu0
        %v3800 = vadd.f32 0.0, %v3799
        %v3801 = vpop.f32.mrf.mxu0
        %v3802 = vpop.f32.mrf.mxu0
        %v3803 = vadd.f32 0.0, %v3802
        %v3804 = vpop.f32.mrf.mxu0
        %3805 = vmatprep.mubr.bf16.mxu0 0
        %3806 = vmatmul.mubr.bf16.gmra.mxu0 %v3629
        %v3807 = vpop.f32.mrf.mxu0
        %v3808 = vadd.f32 0.0, %v3807
        %v3809 = vpop.f32.mrf.mxu0
        %v3810 = vpop.f32.mrf.mxu0
        %v3811 = vadd.f32 0.0, %v3810
        %v3812 = vpop.f32.mrf.mxu0
        %3813 = vmatprep.mubr.bf16.mxu0 0
        %3814 = vmatmul.mubr.bf16.gmra.mxu0 %v3632
        %v3815 = vpop.f32.mrf.mxu0
        %v3816 = vadd.f32 0.0, %v3815
        %v3817 = vpop.f32.mrf.mxu0
        %v3818 = vpop.f32.mrf.mxu0
        %v3819 = vadd.f32 0.0, %v3818
        %v3820 = vpop.f32.mrf.mxu0
        %3821 = vmatprep.mubr.bf16.mxu0 0
        %3822 = vmatmul.mubr.bf16.gmra.mxu0 %v3635
        %v3823 = vpop.f32.mrf.mxu0
        %v3824 = vadd.f32 0.0, %v3823
        %v3825 = vpop.f32.mrf.mxu0
        %v3826 = vpop.f32.mrf.mxu0
        %v3827 = vadd.f32 0.0, %v3826
        %v3828 = vpop.f32.mrf.mxu0
        %3829 = vmatprep.mubr.bf16.mxu0 0
        %3830 = vmatmul.mubr.bf16.gmra.mxu0 %v3638
        %v3831 = vpop.f32.mrf.mxu0
        %v3832 = vadd.f32 0.0, %v3831
        %v3833 = vpop.f32.mrf.mxu0
        %v3834 = vpop.f32.mrf.mxu0
        %v3835 = vadd.f32 0.0, %v3834
        %v3836 = vpop.f32.mrf.mxu0
        %3837 = vmatprep.mubr.bf16.mxu0 0
        %3838 = vmatmul.mubr.bf16.gmra.mxu0 %v3641
        %v3839 = vpop.f32.mrf.mxu0
        %v3840 = vadd.f32 0.0, %v3839
        %v3841 = vpop.f32.mrf.mxu0
        %v3842 = vpop.f32.mrf.mxu0
        %v3843 = vadd.f32 0.0, %v3842
        %v3844 = vpop.f32.mrf.mxu0
        %3845 = vmatprep.mubr.bf16.mxu0 0
        %3846 = vmatmul.mubr.bf16.gmra.mxu0 %v3644
        %v3847 = vpop.f32.mrf.mxu0
        %v3848 = vadd.f32 0.0, %v3847
        %v3849 = vpop.f32.mrf.mxu0
        %v3850 = vpop.f32.mrf.mxu0
        %v3851 = vadd.f32 0.0, %v3850
        %v3852 = vpop.f32.mrf.mxu0
        %3853 = vmatprep.mubr.bf16.mxu0 0
        %3854 = vmatmul.mubr.bf16.gmra.mxu0 %v3647
        %v3855 = vpop.f32.mrf.mxu0
        %v3856 = vadd.f32 0.0, %v3855
        %v3857 = vpop.f32.mrf.mxu0
        %v3858 = vpop.f32.mrf.mxu0
        %v3859 = vadd.f32 0.0, %v3858
        %v3860 = vpop.f32.mrf.mxu0
        %3861 = vmatprep.mubr.bf16.mxu0 0
        %3862 = vmatmul.mubr.bf16.gmra.mxu0 %v3650
        %v3863 = vpop.f32.mrf.mxu0
        %v3864 = vadd.f32 0.0, %v3863
        %v3865 = vpop.f32.mrf.mxu0
        %v3866 = vpop.f32.mrf.mxu0
        %v3867 = vadd.f32 0.0, %v3866
        %v3868 = vpop.f32.mrf.mxu0
        %3869 = vmatprep.mubr.bf16.mxu0 0
        %3870 = vmatmul.mubr.bf16.gmra.mxu0 %v3653
        %v3871 = vpop.f32.mrf.mxu0
        %v3872 = vadd.f32 0.0, %v3871
        %v3873 = vpop.f32.mrf.mxu0
        %v3874 = vpop.f32.mrf.mxu0
        %v3875 = vadd.f32 0.0, %v3874
        %v3876 = vpop.f32.mrf.mxu0
        %3877 = vmatprep.mubr.bf16.mxu0 0
        %3878 = vmatmul.mubr.bf16.gmra.mxu0 %v3656
        %v3879 = vpop.f32.mrf.mxu0
        %v3880 = vadd.f32 0.0, %v3879
        %v3881 = vpop.f32.mrf.mxu0
        %v3882 = vpop.f32.mrf.mxu0
        %v3883 = vadd.f32 0.0, %v3882
        %v3884 = vpop.f32.mrf.mxu0
        %3885 = vdwg.mxu0
        %v3886 = vadd.f32 %v3368, %v3696
        %v3887 = vadd.f32 %v3369, %v3699
        %v3888 = vadd.f32 %v3370, %v3704
        %v3889 = vadd.f32 %v3371, %v3707
        %v3890 = vadd.f32 %v3372, %v3712
        %v3891 = vadd.f32 %v3373, %v3715
        %v3892 = vadd.f32 %v3374, %v3720
        %v3893 = vadd.f32 %v3375, %v3723
        %v3894 = vadd.f32 %v3376, %v3728
        %v3895 = vadd.f32 %v3377, %v3731
        %v3896 = vadd.f32 %v3378, %v3736
        %v3897 = vadd.f32 %v3379, %v3739
        %v3898 = vadd.f32 %v3380, %v3744
        %v3899 = vadd.f32 %v3381, %v3747
        %v3900 = vadd.f32 %v3382, %v3752
        %v3901 = vadd.f32 %v3383, %v3755
        %v3902 = vadd.f32 %v3384, %v3760
        %v3903 = vadd.f32 %v3385, %v3763
        %v3904 = vadd.f32 %v3386, %v3768
        %v3905 = vadd.f32 %v3387, %v3771
        %v3906 = vadd.f32 %v3388, %v3776
        %v3907 = vadd.f32 %v3389, %v3779
        %v3908 = vadd.f32 %v3390, %v3784
        %v3909 = vadd.f32 %v3391, %v3787
        %v3910 = vadd.f32 %v3392, %v3792
        %v3911 = vadd.f32 %v3393, %v3795
        %v3912 = vadd.f32 %v3394, %v3800
        %v3913 = vadd.f32 %v3395, %v3803
        %v3914 = vadd.f32 %v3396, %v3808
        %v3915 = vadd.f32 %v3397, %v3811
        %v3916 = vadd.f32 %v3398, %v3816
        %v3917 = vadd.f32 %v3399, %v3819
        %v3918 = vadd.f32 %v3400, %v3824
        %v3919 = vadd.f32 %v3401, %v3827
        %v3920 = vadd.f32 %v3402, %v3832
        %v3921 = vadd.f32 %v3403, %v3835
        %v3922 = vadd.f32 %v3404, %v3840
        %v3923 = vadd.f32 %v3405, %v3843
        %v3924 = vadd.f32 %v3406, %v3848
        %v3925 = vadd.f32 %v3407, %v3851
        %v3926 = vadd.f32 %v3408, %v3856
        %v3927 = vadd.f32 %v3409, %v3859
        %v3928 = vadd.f32 %v3410, %v3864
        %v3929 = vadd.f32 %v3411, %v3867
        %v3930 = vadd.f32 %v3412, %v3872
        %v3931 = vadd.f32 %v3413, %v3875
        %v3932 = vadd.f32 %v3414, %v3880
        %v3933 = vadd.f32 %v3415, %v3883
        %v3934 = vld [vmem:[%s344 + $0x18] sm:$0xf]
        %v3935 = vld [vmem:[%s344 + $0x1c] sm:$0xf]
        %v3936 = vld [vmem:[%s344 + $0x20] sm:$0xf]
        %v3937 = vld [vmem:[%s344 + $0x24] sm:$0xf]
        %v3938 = vld [vmem:[%s344 + $0x28] sm:$0xf]
        %v3939 = vld [vmem:[%s344 + $0x2c] sm:$0xf]
        %v3940 = vld [vmem:[%s344 + $0x30] sm:$0xf]
        %v3941 = vld [vmem:[%s344 + $0x34] sm:$0xf]
        %v3942 = vld [vmem:[%s344 + $0x38] sm:$0xf]
        %v3943 = vld [vmem:[%s344 + $0x3c] sm:$0xf]
        %v3944 = vld [vmem:[%s344 + $0x40] sm:$0xf]
        %v3945 = vld [vmem:[%s344 + $0x44] sm:$0xf]
        %v3946 = vld [vmem:[%s344 + $0x48] sm:$0xf]
        %v3947 = vld [vmem:[%s344 + $0x4c] sm:$0xf]
        %v3948 = vld [vmem:[%s344 + $0x50] sm:$0xf]
        %v3949 = vld [vmem:[%s344 + $0x54] sm:$0xf]
        %v3950 = vld [vmem:[%s344 + $0x58] sm:$0xf]
        %v3951 = vld [vmem:[%s344 + $0x5c] sm:$0xf]
        %v3952 = vld [vmem:[%s344 + $0x60] sm:$0xf]
        %v3953 = vld [vmem:[%s344 + $0x64] sm:$0xf]
        %v3954 = vld [vmem:[%s344 + $0x68] sm:$0xf]
        %v3955 = vld [vmem:[%s344 + $0x6c] sm:$0xf]
        %v3956 = vld [vmem:[%s344 + $0x70] sm:$0xf]
        %v3957 = vld [vmem:[%s344 + $0x74] sm:$0xf]
        %v3958 = vld [vmem:[%s344 + $0x78] sm:$0xf]
        %v3959 = vld [vmem:[%s344 + $0x7c] sm:$0xf]
        %v3960 = vld [vmem:[%s344 + $0x80] sm:$0xf]
        %v3961 = vld [vmem:[%s344 + $0x84] sm:$0xf]
        %v3962 = vld [vmem:[%s344 + $0x88] sm:$0xf]
        %v3963 = vld [vmem:[%s344 + $0x8c] sm:$0xf]
        %v3964 = vld [vmem:[%s344 + $0x90] sm:$0xf]
        %v3965 = vld [vmem:[%s344 + $0x94] sm:$0xf]
        %v3966 = vld [vmem:[%s344 + $0x98] sm:$0xf]
        %v3967 = vld [vmem:[%s344 + $0x9c] sm:$0xf]
        %v3968 = vld [vmem:[%s344 + $0xa0] sm:$0xf]
        %v3969 = vld [vmem:[%s344 + $0xa4] sm:$0xf]
        %v3970 = vld [vmem:[%s344 + $0xa8] sm:$0xf]
        %v3971 = vld [vmem:[%s344 + $0xac] sm:$0xf]
        %v3972 = vld [vmem:[%s344 + $0xb0] sm:$0xf]
        %v3973 = vld [vmem:[%s344 + $0xb4] sm:$0xf]
        %v3974 = vld [vmem:[%s344 + $0xb8] sm:$0xf]
        %v3975 = vld [vmem:[%s344 + $0xbc] sm:$0xf]
        %v3976 = vld [vmem:[%s344 + $0xc0] sm:$0xf]
        %v3977 = vld [vmem:[%s344 + $0xc4] sm:$0xf]
        %v3978 = vld [vmem:[%s344 + $0xc8] sm:$0xf]
        %v3979 = vld [vmem:[%s344 + $0xcc] sm:$0xf]
        %v3980 = vld [vmem:[%s344 + $0xd0] sm:$0xf]
        %v3981 = vld [vmem:[%s344 + $0xd4] sm:$0xf]
        %v3982 = vld [vmem:[%s344 + $0xd8] sm:$0x1]
        %s3983 = scalar_lea.vmem %s351, 28
        %v3984 = vld [vmem:[%s3983] sm:$0xf]
        %v4034 = vunpack.c.l.b16 %v3934
        %v4035 = vunpack.c.l.b16 %v3935
        %v4036 = vunpack.c.l.b16 %v3936
        %v4037 = vunpack.c.l.b16 %v3937
        %v4038 = vunpack.c.l.b16 %v3938
        %v4039 = vunpack.c.l.b16 %v3939
        %v4040 = vunpack.c.l.b16 %v3940
        %v4041 = vunpack.c.l.b16 %v3941
        %v4042 = vunpack.c.l.b16 %v3942
        %v4043 = vunpack.c.l.b16 %v3943
        %v4044 = vunpack.c.l.b16 %v3944
        %v4045 = vunpack.c.l.b16 %v3945
        %v4046 = vunpack.c.l.b16 %v3946
        %v4047 = vunpack.c.l.b16 %v3947
        %v4048 = vunpack.c.l.b16 %v3948
        %v4049 = vunpack.c.l.b16 %v3949
        %v4050 = vunpack.c.l.b16 %v3950
        %v4051 = vunpack.c.l.b16 %v3951
        %v4052 = vunpack.c.l.b16 %v3952
        %v4053 = vunpack.c.l.b16 %v3953
        %v4054 = vunpack.c.l.b16 %v3954
        %v4055 = vunpack.c.l.b16 %v3955
        %v4056 = vunpack.c.l.b16 %v3956
        %v4057 = vunpack.c.l.b16 %v3957
        %v4058 = vunpack.c.l.b16 %v3958
        %v4059 = vunpack.c.l.b16 %v3959
        %v4060 = vunpack.c.l.b16 %v3960
        %v4061 = vunpack.c.l.b16 %v3961
        %v4062 = vunpack.c.l.b16 %v3962
        %v4063 = vunpack.c.l.b16 %v3963
        %v4064 = vunpack.c.l.b16 %v3964
        %v4065 = vunpack.c.l.b16 %v3965
        %v4066 = vunpack.c.l.b16 %v3966
        %v4067 = vunpack.c.l.b16 %v3967
        %v4068 = vunpack.c.l.b16 %v3968
        %v4069 = vunpack.c.l.b16 %v3969
        %v4070 = vunpack.c.l.b16 %v3970
        %v4071 = vunpack.c.l.b16 %v3971
        %v4072 = vunpack.c.l.b16 %v3972
        %v4073 = vunpack.c.l.b16 %v3973
        %v4074 = vunpack.c.l.b16 %v3974
        %v4075 = vunpack.c.l.b16 %v3975
        %v4076 = vunpack.c.l.b16 %v3976
        %v4077 = vunpack.c.l.b16 %v3977
        %v4078 = vunpack.c.l.b16 %v3978
        %v4079 = vunpack.c.l.b16 %v3979
        %v4080 = vunpack.c.l.b16 %v3980
        %v4081 = vunpack.c.l.b16 %v3981
        %v4082 = vunpack.c.l.b16 %v3982
        %v4083 = vpack.c.b16 %v4035, %v4034
        %v4084 = vpack.c.b16 %v4037, %v4036
        %v4085 = vpack.c.b16 %v4039, %v4038
        %v4086 = vpack.c.b16 %v4041, %v4040
        %v4087 = vpack.c.b16 %v4043, %v4042
        %v4088 = vpack.c.b16 %v4045, %v4044
        %v4089 = vpack.c.b16 %v4047, %v4046
        %v4090 = vpack.c.b16 %v4049, %v4048
        %v4091 = vpack.c.b16 %v4051, %v4050
        %v4092 = vpack.c.b16 %v4053, %v4052
        %v4093 = vpack.c.b16 %v4055, %v4054
        %v4094 = vpack.c.b16 %v4057, %v4056
        %v4095 = vpack.c.b16 %v4059, %v4058
        %v4096 = vpack.c.b16 %v4061, %v4060
        %v4097 = vpack.c.b16 %v4063, %v4062
        %v4098 = vpack.c.b16 %v4065, %v4064
        %v4099 = vpack.c.b16 %v4067, %v4066
        %v4100 = vpack.c.b16 %v4069, %v4068
        %v4101 = vpack.c.b16 %v4071, %v4070
        %v4102 = vpack.c.b16 %v4073, %v4072
        %v4103 = vpack.c.b16 %v4075, %v4074
        %v4104 = vpack.c.b16 %v4077, %v4076
        %v4105 = vpack.c.b16 %v4079, %v4078
        %v4106 = vpack.c.b16 %v4081, %v4080
        %v4107 = vpack.c.b16 %v4082, %v4082
        %v4109 = vshrl.u32 %v4083, 16
        %v4111 = vshll.u32 %v4083, 16
        %v4113 = vrot.slane %v4111, 1
        %v4114 = vor.u32 %v4109, %v4113
        %v4116 = vshll.u32 %v4084, 16
        %v4118 = vrot.slane %v4116, 1
        %v4119 = vsel %vm598, %v4114, %v4118
        %v4120 = vshrl.u32 %v4084, 16
        %v4122 = vor.u32 %v4120, %v4118
        %v4124 = vshll.u32 %v4085, 16
        %v4126 = vrot.slane %v4124, 1
        %v4127 = vsel %vm598, %v4122, %v4126
        %v4128 = vshrl.u32 %v4085, 16
        %v4130 = vor.u32 %v4128, %v4126
        %v4132 = vshll.u32 %v4086, 16
        %v4134 = vrot.slane %v4132, 1
        %v4135 = vsel %vm598, %v4130, %v4134
        %v4136 = vshrl.u32 %v4086, 16
        %v4138 = vor.u32 %v4136, %v4134
        %v4140 = vshll.u32 %v4087, 16
        %v4142 = vrot.slane %v4140, 1
        %v4143 = vsel %vm598, %v4138, %v4142
        %v4144 = vshrl.u32 %v4087, 16
        %v4146 = vor.u32 %v4144, %v4142
        %v4148 = vshll.u32 %v4088, 16
        %v4150 = vrot.slane %v4148, 1
        %v4151 = vsel %vm598, %v4146, %v4150
        %v4152 = vshrl.u32 %v4088, 16
        %v4154 = vor.u32 %v4152, %v4150
        %v4156 = vshll.u32 %v4089, 16
        %v4158 = vrot.slane %v4156, 1
        %v4159 = vsel %vm598, %v4154, %v4158
        %v4160 = vshrl.u32 %v4089, 16
        %v4162 = vor.u32 %v4160, %v4158
        %v4164 = vshll.u32 %v4090, 16
        %v4166 = vrot.slane %v4164, 1
        %v4167 = vsel %vm598, %v4162, %v4166
        %v4168 = vshrl.u32 %v4090, 16
        %v4170 = vor.u32 %v4168, %v4166
        %v4172 = vshll.u32 %v4091, 16
        %v4174 = vrot.slane %v4172, 1
        %v4175 = vsel %vm598, %v4170, %v4174
        %v4176 = vshrl.u32 %v4091, 16
        %v4178 = vor.u32 %v4176, %v4174
        %v4180 = vshll.u32 %v4092, 16
        %v4182 = vrot.slane %v4180, 1
        %v4183 = vsel %vm598, %v4178, %v4182
        %v4184 = vshrl.u32 %v4092, 16
        %v4186 = vor.u32 %v4184, %v4182
        %v4188 = vshll.u32 %v4093, 16
        %v4190 = vrot.slane %v4188, 1
        %v4191 = vsel %vm598, %v4186, %v4190
        %v4192 = vshrl.u32 %v4093, 16
        %v4194 = vor.u32 %v4192, %v4190
        %v4196 = vshll.u32 %v4094, 16
        %v4198 = vrot.slane %v4196, 1
        %v4199 = vsel %vm598, %v4194, %v4198
        %v4200 = vshrl.u32 %v4094, 16
        %v4202 = vor.u32 %v4200, %v4198
        %v4204 = vshll.u32 %v4095, 16
        %v4206 = vrot.slane %v4204, 1
        %v4207 = vsel %vm598, %v4202, %v4206
        %v4208 = vshrl.u32 %v4095, 16
        %v4210 = vor.u32 %v4208, %v4206
        %v4212 = vshll.u32 %v4096, 16
        %v4214 = vrot.slane %v4212, 1
        %v4215 = vsel %vm598, %v4210, %v4214
        %v4216 = vshrl.u32 %v4096, 16
        %v4218 = vor.u32 %v4216, %v4214
        %v4220 = vshll.u32 %v4097, 16
        %v4222 = vrot.slane %v4220, 1
        %v4223 = vsel %vm598, %v4218, %v4222
        %v4224 = vshrl.u32 %v4097, 16
        %v4226 = vor.u32 %v4224, %v4222
        %v4228 = vshll.u32 %v4098, 16
        %v4230 = vrot.slane %v4228, 1
        %v4231 = vsel %vm598, %v4226, %v4230
        %v4232 = vshrl.u32 %v4098, 16
        %v4234 = vor.u32 %v4232, %v4230
        %v4236 = vshll.u32 %v4099, 16
        %v4238 = vrot.slane %v4236, 1
        %v4239 = vsel %vm598, %v4234, %v4238
        %v4240 = vshrl.u32 %v4099, 16
        %v4242 = vor.u32 %v4240, %v4238
        %v4244 = vshll.u32 %v4100, 16
        %v4246 = vrot.slane %v4244, 1
        %v4247 = vsel %vm598, %v4242, %v4246
        %v4248 = vshrl.u32 %v4100, 16
        %v4250 = vor.u32 %v4248, %v4246
        %v4252 = vshll.u32 %v4101, 16
        %v4254 = vrot.slane %v4252, 1
        %v4255 = vsel %vm598, %v4250, %v4254
        %v4256 = vshrl.u32 %v4101, 16
        %v4258 = vor.u32 %v4256, %v4254
        %v4260 = vshll.u32 %v4102, 16
        %v4262 = vrot.slane %v4260, 1
        %v4263 = vsel %vm598, %v4258, %v4262
        %v4264 = vshrl.u32 %v4102, 16
        %v4266 = vor.u32 %v4264, %v4262
        %v4268 = vshll.u32 %v4103, 16
        %v4270 = vrot.slane %v4268, 1
        %v4271 = vsel %vm598, %v4266, %v4270
        %v4272 = vshrl.u32 %v4103, 16
        %v4274 = vor.u32 %v4272, %v4270
        %v4276 = vshll.u32 %v4104, 16
        %v4278 = vrot.slane %v4276, 1
        %v4279 = vsel %vm598, %v4274, %v4278
        %v4280 = vshrl.u32 %v4104, 16
        %v4282 = vor.u32 %v4280, %v4278
        %v4284 = vshll.u32 %v4105, 16
        %v4286 = vrot.slane %v4284, 1
        %v4287 = vsel %vm598, %v4282, %v4286
        %v4288 = vshrl.u32 %v4105, 16
        %v4290 = vor.u32 %v4288, %v4286
        %v4292 = vshll.u32 %v4106, 16
        %v4294 = vrot.slane %v4292, 1
        %v4295 = vsel %vm598, %v4290, %v4294
        %v4296 = vshrl.u32 %v4106, 16
        %v4298 = vor.u32 %v4296, %v4294
        %v4300 = vshll.u32 %v4107, 16
        %v4302 = vrot.slane %v4300, 1
        %v4303 = vsel %vm598, %v4298, %v4302
        %v4305 = vsel %vm795, %v4119, 0
        %v4308 = vsel %vm795, %v4127, 0
        %v4311 = vsel %vm795, %v4135, 0
        %v4314 = vsel %vm795, %v4143, 0
        %v4317 = vsel %vm795, %v4151, 0
        %v4320 = vsel %vm795, %v4159, 0
        %v4323 = vsel %vm795, %v4167, 0
        %v4326 = vsel %vm795, %v4175, 0
        %v4329 = vsel %vm795, %v4183, 0
        %v4332 = vsel %vm795, %v4191, 0
        %v4335 = vsel %vm795, %v4199, 0
        %v4338 = vsel %vm795, %v4207, 0
        %v4341 = vsel %vm795, %v4215, 0
        %v4344 = vsel %vm795, %v4223, 0
        %v4347 = vsel %vm795, %v4231, 0
        %v4350 = vsel %vm795, %v4239, 0
        %v4353 = vsel %vm795, %v4247, 0
        %v4356 = vsel %vm795, %v4255, 0
        %v4359 = vsel %vm795, %v4263, 0
        %v4362 = vsel %vm795, %v4271, 0
        %v4365 = vsel %vm795, %v4279, 0
        %v4368 = vsel %vm795, %v4287, 0
        %v4371 = vsel %vm795, %v4295, 0
        %v4374 = vsel %vm795, %v4303, 0
        %v4377 = vsel %vm868, %v3984, 0
        %4379 = vmatprep.subr.bf16.mxu0 0
        %4380 = vmatpush1.bf16.msra.mxu0 0
        %4381 = vmatprep.subr.bf16.mxu0 0
        %4382 = vmatpush1.bf16.msra.mxu0 0
        %4383 = vmatprep.subr.bf16.mxu0 0
        %4384 = vmatpush1.bf16.msra.mxu0 0
        %4385 = vmatprep.subr.bf16.mxu0 0
        %4386 = vmatpush1.bf16.msra.mxu0 0
        %4387 = vmatprep.subr.bf16.mxu0 0
        %4388 = vmatpush1.bf16.msra.mxu0 0
        %4389 = vmatprep.subr.bf16.mxu0 0
        %4390 = vmatpush1.bf16.msra.mxu0 0
        %4391 = vmatprep.subr.bf16.mxu0 0
        %4392 = vmatpush1.bf16.msra.mxu0 0
        %4393 = vmatprep.subr.bf16.mxu0 0
        %4394 = vmatpush1.bf16.msra.mxu0 %v4377
        %4395 = vmatprep.subr.bf16.mxu0 0
        %4396 = vmatpush2.bf16.msra.mxu0 0
        %4397 = vmatprep.subr.bf16.mxu0 0
        %4398 = vmatpush2.bf16.msra.mxu0 0
        %4399 = vmatprep.subr.bf16.mxu0 0
        %4400 = vmatpush2.bf16.msra.mxu0 0
        %4401 = vmatprep.subr.bf16.mxu0 0
        %4402 = vmatpush2.bf16.msra.mxu0 0
        %4403 = vmatprep.subr.bf16.mxu0 0
        %4404 = vmatpush2.bf16.msra.mxu0 0
        %4405 = vmatprep.subr.bf16.mxu0 0
        %4406 = vmatpush2.bf16.msra.mxu0 0
        %4407 = vmatprep.subr.bf16.mxu0 0
        %4408 = vmatpush2.bf16.msra.mxu0 0
        %4409 = vmatprep.subr.bf16.mxu0 0
        %4410 = vmatpush2.bf16.msra.mxu0 0
        %4411 = vmatprep.mubr.bf16.mxu0 0
        %4412 = vmatmul.mubr.bf16.gmra.mxu0 %v4305
        %v4413 = vpop.f32.mrf.mxu0
        %v4414 = vadd.f32 0.0, %v4413
        %v4415 = vpop.f32.mrf.mxu0
        %v4416 = vpop.f32.mrf.mxu0
        %v4417 = vadd.f32 0.0, %v4416
        %v4418 = vpop.f32.mrf.mxu0
        %4419 = vmatprep.mubr.bf16.mxu0 0
        %4420 = vmatmul.mubr.bf16.gmra.mxu0 %v4308
        %v4421 = vpop.f32.mrf.mxu0
        %v4422 = vadd.f32 0.0, %v4421
        %v4423 = vpop.f32.mrf.mxu0
        %v4424 = vpop.f32.mrf.mxu0
        %v4425 = vadd.f32 0.0, %v4424
        %v4426 = vpop.f32.mrf.mxu0
        %4427 = vmatprep.mubr.bf16.mxu0 0
        %4428 = vmatmul.mubr.bf16.gmra.mxu0 %v4311
        %v4429 = vpop.f32.mrf.mxu0
        %v4430 = vadd.f32 0.0, %v4429
        %v4431 = vpop.f32.mrf.mxu0
        %v4432 = vpop.f32.mrf.mxu0
        %v4433 = vadd.f32 0.0, %v4432
        %v4434 = vpop.f32.mrf.mxu0
        %4435 = vmatprep.mubr.bf16.mxu0 0
        %4436 = vmatmul.mubr.bf16.gmra.mxu0 %v4314
        %v4437 = vpop.f32.mrf.mxu0
        %v4438 = vadd.f32 0.0, %v4437
        %v4439 = vpop.f32.mrf.mxu0
        %v4440 = vpop.f32.mrf.mxu0
        %v4441 = vadd.f32 0.0, %v4440
        %v4442 = vpop.f32.mrf.mxu0
        %4443 = vmatprep.mubr.bf16.mxu0 0
        %4444 = vmatmul.mubr.bf16.gmra.mxu0 %v4317
        %v4445 = vpop.f32.mrf.mxu0
        %v4446 = vadd.f32 0.0, %v4445
        %v4447 = vpop.f32.mrf.mxu0
        %v4448 = vpop.f32.mrf.mxu0
        %v4449 = vadd.f32 0.0, %v4448
        %v4450 = vpop.f32.mrf.mxu0
        %4451 = vmatprep.mubr.bf16.mxu0 0
        %4452 = vmatmul.mubr.bf16.gmra.mxu0 %v4320
        %v4453 = vpop.f32.mrf.mxu0
        %v4454 = vadd.f32 0.0, %v4453
        %v4455 = vpop.f32.mrf.mxu0
        %v4456 = vpop.f32.mrf.mxu0
        %v4457 = vadd.f32 0.0, %v4456
        %v4458 = vpop.f32.mrf.mxu0
        %4459 = vmatprep.mubr.bf16.mxu0 0
        %4460 = vmatmul.mubr.bf16.gmra.mxu0 %v4323
        %v4461 = vpop.f32.mrf.mxu0
        %v4462 = vadd.f32 0.0, %v4461
        %v4463 = vpop.f32.mrf.mxu0
        %v4464 = vpop.f32.mrf.mxu0
        %v4465 = vadd.f32 0.0, %v4464
        %v4466 = vpop.f32.mrf.mxu0
        %4467 = vmatprep.mubr.bf16.mxu0 0
        %4468 = vmatmul.mubr.bf16.gmra.mxu0 %v4326
        %v4469 = vpop.f32.mrf.mxu0
        %v4470 = vadd.f32 0.0, %v4469
        %v4471 = vpop.f32.mrf.mxu0
        %v4472 = vpop.f32.mrf.mxu0
        %v4473 = vadd.f32 0.0, %v4472
        %v4474 = vpop.f32.mrf.mxu0
        %4475 = vmatprep.mubr.bf16.mxu0 0
        %4476 = vmatmul.mubr.bf16.gmra.mxu0 %v4329
        %v4477 = vpop.f32.mrf.mxu0
        %v4478 = vadd.f32 0.0, %v4477
        %v4479 = vpop.f32.mrf.mxu0
        %v4480 = vpop.f32.mrf.mxu0
        %v4481 = vadd.f32 0.0, %v4480
        %v4482 = vpop.f32.mrf.mxu0
        %4483 = vmatprep.mubr.bf16.mxu0 0
        %4484 = vmatmul.mubr.bf16.gmra.mxu0 %v4332
        %v4485 = vpop.f32.mrf.mxu0
        %v4486 = vadd.f32 0.0, %v4485
        %v4487 = vpop.f32.mrf.mxu0
        %v4488 = vpop.f32.mrf.mxu0
        %v4489 = vadd.f32 0.0, %v4488
        %v4490 = vpop.f32.mrf.mxu0
        %4491 = vmatprep.mubr.bf16.mxu0 0
        %4492 = vmatmul.mubr.bf16.gmra.mxu0 %v4335
        %v4493 = vpop.f32.mrf.mxu0
        %v4494 = vadd.f32 0.0, %v4493
        %v4495 = vpop.f32.mrf.mxu0
        %v4496 = vpop.f32.mrf.mxu0
        %v4497 = vadd.f32 0.0, %v4496
        %v4498 = vpop.f32.mrf.mxu0
        %4499 = vmatprep.mubr.bf16.mxu0 0
        %4500 = vmatmul.mubr.bf16.gmra.mxu0 %v4338
        %v4501 = vpop.f32.mrf.mxu0
        %v4502 = vadd.f32 0.0, %v4501
        %v4503 = vpop.f32.mrf.mxu0
        %v4504 = vpop.f32.mrf.mxu0
        %v4505 = vadd.f32 0.0, %v4504
        %v4506 = vpop.f32.mrf.mxu0
        %4507 = vmatprep.mubr.bf16.mxu0 0
        %4508 = vmatmul.mubr.bf16.gmra.mxu0 %v4341
        %v4509 = vpop.f32.mrf.mxu0
        %v4510 = vadd.f32 0.0, %v4509
        %v4511 = vpop.f32.mrf.mxu0
        %v4512 = vpop.f32.mrf.mxu0
        %v4513 = vadd.f32 0.0, %v4512
        %v4514 = vpop.f32.mrf.mxu0
        %4515 = vmatprep.mubr.bf16.mxu0 0
        %4516 = vmatmul.mubr.bf16.gmra.mxu0 %v4344
        %v4517 = vpop.f32.mrf.mxu0
        %v4518 = vadd.f32 0.0, %v4517
        %v4519 = vpop.f32.mrf.mxu0
        %v4520 = vpop.f32.mrf.mxu0
        %v4521 = vadd.f32 0.0, %v4520
        %v4522 = vpop.f32.mrf.mxu0
        %4523 = vmatprep.mubr.bf16.mxu0 0
        %4524 = vmatmul.mubr.bf16.gmra.mxu0 %v4347
        %v4525 = vpop.f32.mrf.mxu0
        %v4526 = vadd.f32 0.0, %v4525
        %v4527 = vpop.f32.mrf.mxu0
        %v4528 = vpop.f32.mrf.mxu0
        %v4529 = vadd.f32 0.0, %v4528
        %v4530 = vpop.f32.mrf.mxu0
        %4531 = vmatprep.mubr.bf16.mxu0 0
        %4532 = vmatmul.mubr.bf16.gmra.mxu0 %v4350
        %v4533 = vpop.f32.mrf.mxu0
        %v4534 = vadd.f32 0.0, %v4533
        %v4535 = vpop.f32.mrf.mxu0
        %v4536 = vpop.f32.mrf.mxu0
        %v4537 = vadd.f32 0.0, %v4536
        %v4538 = vpop.f32.mrf.mxu0
        %4539 = vmatprep.mubr.bf16.mxu0 0
        %4540 = vmatmul.mubr.bf16.gmra.mxu0 %v4353
        %v4541 = vpop.f32.mrf.mxu0
        %v4542 = vadd.f32 0.0, %v4541
        %v4543 = vpop.f32.mrf.mxu0
        %v4544 = vpop.f32.mrf.mxu0
        %v4545 = vadd.f32 0.0, %v4544
        %v4546 = vpop.f32.mrf.mxu0
        %4547 = vmatprep.mubr.bf16.mxu0 0
        %4548 = vmatmul.mubr.bf16.gmra.mxu0 %v4356
        %v4549 = vpop.f32.mrf.mxu0
        %v4550 = vadd.f32 0.0, %v4549
        %v4551 = vpop.f32.mrf.mxu0
        %v4552 = vpop.f32.mrf.mxu0
        %v4553 = vadd.f32 0.0, %v4552
        %v4554 = vpop.f32.mrf.mxu0
        %4555 = vmatprep.mubr.bf16.mxu0 0
        %4556 = vmatmul.mubr.bf16.gmra.mxu0 %v4359
        %v4557 = vpop.f32.mrf.mxu0
        %v4558 = vadd.f32 0.0, %v4557
        %v4559 = vpop.f32.mrf.mxu0
        %v4560 = vpop.f32.mrf.mxu0
        %v4561 = vadd.f32 0.0, %v4560
        %v4562 = vpop.f32.mrf.mxu0
        %4563 = vmatprep.mubr.bf16.mxu0 0
        %4564 = vmatmul.mubr.bf16.gmra.mxu0 %v4362
        %v4565 = vpop.f32.mrf.mxu0
        %v4566 = vadd.f32 0.0, %v4565
        %v4567 = vpop.f32.mrf.mxu0
        %v4568 = vpop.f32.mrf.mxu0
        %v4569 = vadd.f32 0.0, %v4568
        %v4570 = vpop.f32.mrf.mxu0
        %4571 = vmatprep.mubr.bf16.mxu0 0
        %4572 = vmatmul.mubr.bf16.gmra.mxu0 %v4365
        %v4573 = vpop.f32.mrf.mxu0
        %v4574 = vadd.f32 0.0, %v4573
        %v4575 = vpop.f32.mrf.mxu0
        %v4576 = vpop.f32.mrf.mxu0
        %v4577 = vadd.f32 0.0, %v4576
        %v4578 = vpop.f32.mrf.mxu0
        %4579 = vmatprep.mubr.bf16.mxu0 0
        %4580 = vmatmul.mubr.bf16.gmra.mxu0 %v4368
        %v4581 = vpop.f32.mrf.mxu0
        %v4582 = vadd.f32 0.0, %v4581
        %v4583 = vpop.f32.mrf.mxu0
        %v4584 = vpop.f32.mrf.mxu0
        %v4585 = vadd.f32 0.0, %v4584
        %v4586 = vpop.f32.mrf.mxu0
        %4587 = vmatprep.mubr.bf16.mxu0 0
        %4588 = vmatmul.mubr.bf16.gmra.mxu0 %v4371
        %v4589 = vpop.f32.mrf.mxu0
        %v4590 = vadd.f32 0.0, %v4589
        %v4591 = vpop.f32.mrf.mxu0
        %v4592 = vpop.f32.mrf.mxu0
        %v4593 = vadd.f32 0.0, %v4592
        %v4594 = vpop.f32.mrf.mxu0
        %4595 = vmatprep.mubr.bf16.mxu0 0
        %4596 = vmatmul.mubr.bf16.gmra.mxu0 %v4374
        %v4597 = vpop.f32.mrf.mxu0
        %v4598 = vadd.f32 0.0, %v4597
        %v4599 = vpop.f32.mrf.mxu0
        %v4600 = vpop.f32.mrf.mxu0
        %v4601 = vadd.f32 0.0, %v4600
        %v4602 = vpop.f32.mrf.mxu0
        %4603 = vdwg.mxu0
        %v4604 = vadd.f32 %v3886, %v4414
        %v4605 = vadd.f32 %v3887, %v4417
        %v4606 = vadd.f32 %v3888, %v4422
        %v4607 = vadd.f32 %v3889, %v4425
        %v4608 = vadd.f32 %v3890, %v4430
        %v4609 = vadd.f32 %v3891, %v4433
        %v4610 = vadd.f32 %v3892, %v4438
        %v4611 = vadd.f32 %v3893, %v4441
        %v4612 = vadd.f32 %v3894, %v4446
        %v4613 = vadd.f32 %v3895, %v4449
        %v4614 = vadd.f32 %v3896, %v4454
        %v4615 = vadd.f32 %v3897, %v4457
        %v4616 = vadd.f32 %v3898, %v4462
        %v4617 = vadd.f32 %v3899, %v4465
        %v4618 = vadd.f32 %v3900, %v4470
        %v4619 = vadd.f32 %v3901, %v4473
        %v4620 = vadd.f32 %v3902, %v4478
        %v4621 = vadd.f32 %v3903, %v4481
        %v4622 = vadd.f32 %v3904, %v4486
        %v4623 = vadd.f32 %v3905, %v4489
        %v4624 = vadd.f32 %v3906, %v4494
        %v4625 = vadd.f32 %v3907, %v4497
        %v4626 = vadd.f32 %v3908, %v4502
        %v4627 = vadd.f32 %v3909, %v4505
        %v4628 = vadd.f32 %v3910, %v4510
        %v4629 = vadd.f32 %v3911, %v4513
        %v4630 = vadd.f32 %v3912, %v4518
        %v4631 = vadd.f32 %v3913, %v4521
        %v4632 = vadd.f32 %v3914, %v4526
        %v4633 = vadd.f32 %v3915, %v4529
        %v4634 = vadd.f32 %v3916, %v4534
        %v4635 = vadd.f32 %v3917, %v4537
        %v4636 = vadd.f32 %v3918, %v4542
        %v4637 = vadd.f32 %v3919, %v4545
        %v4638 = vadd.f32 %v3920, %v4550
        %v4639 = vadd.f32 %v3921, %v4553
        %v4640 = vadd.f32 %v3922, %v4558
        %v4641 = vadd.f32 %v3923, %v4561
        %v4642 = vadd.f32 %v3924, %v4566
        %v4643 = vadd.f32 %v3925, %v4569
        %v4644 = vadd.f32 %v3926, %v4574
        %v4645 = vadd.f32 %v3927, %v4577
        %v4646 = vadd.f32 %v3928, %v4582
        %v4647 = vadd.f32 %v3929, %v4585
        %v4648 = vadd.f32 %v3930, %v4590
        %v4649 = vadd.f32 %v3931, %v4593
        %v4650 = vadd.f32 %v3932, %v4598
        %v4651 = vadd.f32 %v3933, %v4601
        %v4652 = vld [vmem:[%s344 + $0x18] sm:$0xe]
        %s4653 = scalar_lea.vmem %s351, 32
        %v4654 = vld [vmem:[%s4653] sm:$0xf]
        %v4656 = vunpack.c.l.b16 %v4652
        %v4657 = vpack.c.b16 %v4035, %v4656
        %v4658 = vrot.slane %v4657, 1
        %v4659 = vrot.slane %v4084, 1
        %v4660 = vsel %vm1379, %v4658, %v4659
        %v4661 = vrot.slane %v4085, 1
        %v4662 = vsel %vm1379, %v4659, %v4661
        %v4663 = vrot.slane %v4086, 1
        %v4664 = vsel %vm1379, %v4661, %v4663
        %v4665 = vrot.slane %v4087, 1
        %v4666 = vsel %vm1379, %v4663, %v4665
        %v4667 = vrot.slane %v4088, 1
        %v4668 = vsel %vm1379, %v4665, %v4667
        %v4669 = vrot.slane %v4089, 1
        %v4670 = vsel %vm1379, %v4667, %v4669
        %v4671 = vrot.slane %v4090, 1
        %v4672 = vsel %vm1379, %v4669, %v4671
        %v4673 = vrot.slane %v4091, 1
        %v4674 = vsel %vm1379, %v4671, %v4673
        %v4675 = vrot.slane %v4092, 1
        %v4676 = vsel %vm1379, %v4673, %v4675
        %v4677 = vrot.slane %v4093, 1
        %v4678 = vsel %vm1379, %v4675, %v4677
        %v4679 = vrot.slane %v4094, 1
        %v4680 = vsel %vm1379, %v4677, %v4679
        %v4681 = vrot.slane %v4095, 1
        %v4682 = vsel %vm1379, %v4679, %v4681
        %v4683 = vrot.slane %v4096, 1
        %v4684 = vsel %vm1379, %v4681, %v4683
        %v4685 = vrot.slane %v4097, 1
        %v4686 = vsel %vm1379, %v4683, %v4685
        %v4687 = vrot.slane %v4098, 1
        %v4688 = vsel %vm1379, %v4685, %v4687
        %v4689 = vrot.slane %v4099, 1
        %v4690 = vsel %vm1379, %v4687, %v4689
        %v4691 = vrot.slane %v4100, 1
        %v4692 = vsel %vm1379, %v4689, %v4691
        %v4693 = vrot.slane %v4101, 1
        %v4694 = vsel %vm1379, %v4691, %v4693
        %v4695 = vrot.slane %v4102, 1
        %v4696 = vsel %vm1379, %v4693, %v4695
        %v4697 = vrot.slane %v4103, 1
        %v4698 = vsel %vm1379, %v4695, %v4697
        %v4699 = vrot.slane %v4104, 1
        %v4700 = vsel %vm1379, %v4697, %v4699
        %v4701 = vrot.slane %v4105, 1
        %v4702 = vsel %vm1379, %v4699, %v4701
        %v4703 = vrot.slane %v4106, 1
        %v4704 = vsel %vm1379, %v4701, %v4703
        %v4705 = vrot.slane %v4107, 1
        %v4706 = vsel %vm1379, %v4703, %v4705
        %v4708 = vsel %vm795, %v4660, 0
        %v4711 = vsel %vm795, %v4662, 0
        %v4714 = vsel %vm795, %v4664, 0
        %v4717 = vsel %vm795, %v4666, 0
        %v4720 = vsel %vm795, %v4668, 0
        %v4723 = vsel %vm795, %v4670, 0
        %v4726 = vsel %vm795, %v4672, 0
        %v4729 = vsel %vm795, %v4674, 0
        %v4732 = vsel %vm795, %v4676, 0
        %v4735 = vsel %vm795, %v4678, 0
        %v4738 = vsel %vm795, %v4680, 0
        %v4741 = vsel %vm795, %v4682, 0
        %v4744 = vsel %vm795, %v4684, 0
        %v4747 = vsel %vm795, %v4686, 0
        %v4750 = vsel %vm795, %v4688, 0
        %v4753 = vsel %vm795, %v4690, 0
        %v4756 = vsel %vm795, %v4692, 0
        %v4759 = vsel %vm795, %v4694, 0
        %v4762 = vsel %vm795, %v4696, 0
        %v4765 = vsel %vm795, %v4698, 0
        %v4768 = vsel %vm795, %v4700, 0
        %v4771 = vsel %vm795, %v4702, 0
        %v4774 = vsel %vm795, %v4704, 0
        %v4777 = vsel %vm795, %v4706, 0
        %v4780 = vsel %vm868, %v4654, 0
        %4782 = vmatprep.subr.bf16.mxu0 0
        %4783 = vmatpush1.bf16.msra.mxu0 0
        %4784 = vmatprep.subr.bf16.mxu0 0
        %4785 = vmatpush1.bf16.msra.mxu0 0
        %4786 = vmatprep.subr.bf16.mxu0 0
        %4787 = vmatpush1.bf16.msra.mxu0 0
        %4788 = vmatprep.subr.bf16.mxu0 0
        %4789 = vmatpush1.bf16.msra.mxu0 0
        %4790 = vmatprep.subr.bf16.mxu0 0
        %4791 = vmatpush1.bf16.msra.mxu0 0
        %4792 = vmatprep.subr.bf16.mxu0 0
        %4793 = vmatpush1.bf16.msra.mxu0 0
        %4794 = vmatprep.subr.bf16.mxu0 0
        %4795 = vmatpush1.bf16.msra.mxu0 0
        %4796 = vmatprep.subr.bf16.mxu0 0
        %4797 = vmatpush1.bf16.msra.mxu0 %v4780
        %4798 = vmatprep.subr.bf16.mxu0 0
        %4799 = vmatpush2.bf16.msra.mxu0 0
        %4800 = vmatprep.subr.bf16.mxu0 0
        %4801 = vmatpush2.bf16.msra.mxu0 0
        %4802 = vmatprep.subr.bf16.mxu0 0
        %4803 = vmatpush2.bf16.msra.mxu0 0
        %4804 = vmatprep.subr.bf16.mxu0 0
        %4805 = vmatpush2.bf16.msra.mxu0 0
        %4806 = vmatprep.subr.bf16.mxu0 0
        %4807 = vmatpush2.bf16.msra.mxu0 0
        %4808 = vmatprep.subr.bf16.mxu0 0
        %4809 = vmatpush2.bf16.msra.mxu0 0
        %4810 = vmatprep.subr.bf16.mxu0 0
        %4811 = vmatpush2.bf16.msra.mxu0 0
        %4812 = vmatprep.subr.bf16.mxu0 0
        %4813 = vmatpush2.bf16.msra.mxu0 0
        %4814 = vmatprep.mubr.bf16.mxu0 0
        %4815 = vmatmul.mubr.bf16.gmra.mxu0 %v4708
        %v4816 = vpop.f32.mrf.mxu0
        %v4817 = vadd.f32 0.0, %v4816
        %v4818 = vpop.f32.mrf.mxu0
        %v4819 = vpop.f32.mrf.mxu0
        %v4820 = vadd.f32 0.0, %v4819
        %v4821 = vpop.f32.mrf.mxu0
        %4822 = vmatprep.mubr.bf16.mxu0 0
        %4823 = vmatmul.mubr.bf16.gmra.mxu0 %v4711
        %v4824 = vpop.f32.mrf.mxu0
        %v4825 = vadd.f32 0.0, %v4824
        %v4826 = vpop.f32.mrf.mxu0
        %v4827 = vpop.f32.mrf.mxu0
        %v4828 = vadd.f32 0.0, %v4827
        %v4829 = vpop.f32.mrf.mxu0
        %4830 = vmatprep.mubr.bf16.mxu0 0
        %4831 = vmatmul.mubr.bf16.gmra.mxu0 %v4714
        %v4832 = vpop.f32.mrf.mxu0
        %v4833 = vadd.f32 0.0, %v4832
        %v4834 = vpop.f32.mrf.mxu0
        %v4835 = vpop.f32.mrf.mxu0
        %v4836 = vadd.f32 0.0, %v4835
        %v4837 = vpop.f32.mrf.mxu0
        %4838 = vmatprep.mubr.bf16.mxu0 0
        %4839 = vmatmul.mubr.bf16.gmra.mxu0 %v4717
        %v4840 = vpop.f32.mrf.mxu0
        %v4841 = vadd.f32 0.0, %v4840
        %v4842 = vpop.f32.mrf.mxu0
        %v4843 = vpop.f32.mrf.mxu0
        %v4844 = vadd.f32 0.0, %v4843
        %v4845 = vpop.f32.mrf.mxu0
        %4846 = vmatprep.mubr.bf16.mxu0 0
        %4847 = vmatmul.mubr.bf16.gmra.mxu0 %v4720
        %v4848 = vpop.f32.mrf.mxu0
        %v4849 = vadd.f32 0.0, %v4848
        %v4850 = vpop.f32.mrf.mxu0
        %v4851 = vpop.f32.mrf.mxu0
        %v4852 = vadd.f32 0.0, %v4851
        %v4853 = vpop.f32.mrf.mxu0
        %4854 = vmatprep.mubr.bf16.mxu0 0
        %4855 = vmatmul.mubr.bf16.gmra.mxu0 %v4723
        %v4856 = vpop.f32.mrf.mxu0
        %v4857 = vadd.f32 0.0, %v4856
        %v4858 = vpop.f32.mrf.mxu0
        %v4859 = vpop.f32.mrf.mxu0
        %v4860 = vadd.f32 0.0, %v4859
        %v4861 = vpop.f32.mrf.mxu0
        %4862 = vmatprep.mubr.bf16.mxu0 0
        %4863 = vmatmul.mubr.bf16.gmra.mxu0 %v4726
        %v4864 = vpop.f32.mrf.mxu0
        %v4865 = vadd.f32 0.0, %v4864
        %v4866 = vpop.f32.mrf.mxu0
        %v4867 = vpop.f32.mrf.mxu0
        %v4868 = vadd.f32 0.0, %v4867
        %v4869 = vpop.f32.mrf.mxu0
        %4870 = vmatprep.mubr.bf16.mxu0 0
        %4871 = vmatmul.mubr.bf16.gmra.mxu0 %v4729
        %v4872 = vpop.f32.mrf.mxu0
        %v4873 = vadd.f32 0.0, %v4872
        %v4874 = vpop.f32.mrf.mxu0
        %v4875 = vpop.f32.mrf.mxu0
        %v4876 = vadd.f32 0.0, %v4875
        %v4877 = vpop.f32.mrf.mxu0
        %4878 = vmatprep.mubr.bf16.mxu0 0
        %4879 = vmatmul.mubr.bf16.gmra.mxu0 %v4732
        %v4880 = vpop.f32.mrf.mxu0
        %v4881 = vadd.f32 0.0, %v4880
        %v4882 = vpop.f32.mrf.mxu0
        %v4883 = vpop.f32.mrf.mxu0
        %v4884 = vadd.f32 0.0, %v4883
        %v4885 = vpop.f32.mrf.mxu0
        %4886 = vmatprep.mubr.bf16.mxu0 0
        %4887 = vmatmul.mubr.bf16.gmra.mxu0 %v4735
        %v4888 = vpop.f32.mrf.mxu0
        %v4889 = vadd.f32 0.0, %v4888
        %v4890 = vpop.f32.mrf.mxu0
        %v4891 = vpop.f32.mrf.mxu0
        %v4892 = vadd.f32 0.0, %v4891
        %v4893 = vpop.f32.mrf.mxu0
        %4894 = vmatprep.mubr.bf16.mxu0 0
        %4895 = vmatmul.mubr.bf16.gmra.mxu0 %v4738
        %v4896 = vpop.f32.mrf.mxu0
        %v4897 = vadd.f32 0.0, %v4896
        %v4898 = vpop.f32.mrf.mxu0
        %v4899 = vpop.f32.mrf.mxu0
        %v4900 = vadd.f32 0.0, %v4899
        %v4901 = vpop.f32.mrf.mxu0
        %4902 = vmatprep.mubr.bf16.mxu0 0
        %4903 = vmatmul.mubr.bf16.gmra.mxu0 %v4741
        %v4904 = vpop.f32.mrf.mxu0
        %v4905 = vadd.f32 0.0, %v4904
        %v4906 = vpop.f32.mrf.mxu0
        %v4907 = vpop.f32.mrf.mxu0
        %v4908 = vadd.f32 0.0, %v4907
        %v4909 = vpop.f32.mrf.mxu0
        %4910 = vmatprep.mubr.bf16.mxu0 0
        %4911 = vmatmul.mubr.bf16.gmra.mxu0 %v4744
        %v4912 = vpop.f32.mrf.mxu0
        %v4913 = vadd.f32 0.0, %v4912
        %v4914 = vpop.f32.mrf.mxu0
        %v4915 = vpop.f32.mrf.mxu0
        %v4916 = vadd.f32 0.0, %v4915
        %v4917 = vpop.f32.mrf.mxu0
        %4918 = vmatprep.mubr.bf16.mxu0 0
        %4919 = vmatmul.mubr.bf16.gmra.mxu0 %v4747
        %v4920 = vpop.f32.mrf.mxu0
        %v4921 = vadd.f32 0.0, %v4920
        %v4922 = vpop.f32.mrf.mxu0
        %v4923 = vpop.f32.mrf.mxu0
        %v4924 = vadd.f32 0.0, %v4923
        %v4925 = vpop.f32.mrf.mxu0
        %4926 = vmatprep.mubr.bf16.mxu0 0
        %4927 = vmatmul.mubr.bf16.gmra.mxu0 %v4750
        %v4928 = vpop.f32.mrf.mxu0
        %v4929 = vadd.f32 0.0, %v4928
        %v4930 = vpop.f32.mrf.mxu0
        %v4931 = vpop.f32.mrf.mxu0
        %v4932 = vadd.f32 0.0, %v4931
        %v4933 = vpop.f32.mrf.mxu0
        %4934 = vmatprep.mubr.bf16.mxu0 0
        %4935 = vmatmul.mubr.bf16.gmra.mxu0 %v4753
        %v4936 = vpop.f32.mrf.mxu0
        %v4937 = vadd.f32 0.0, %v4936
        %v4938 = vpop.f32.mrf.mxu0
        %v4939 = vpop.f32.mrf.mxu0
        %v4940 = vadd.f32 0.0, %v4939
        %v4941 = vpop.f32.mrf.mxu0
        %4942 = vmatprep.mubr.bf16.mxu0 0
        %4943 = vmatmul.mubr.bf16.gmra.mxu0 %v4756
        %v4944 = vpop.f32.mrf.mxu0
        %v4945 = vadd.f32 0.0, %v4944
        %v4946 = vpop.f32.mrf.mxu0
        %v4947 = vpop.f32.mrf.mxu0
        %v4948 = vadd.f32 0.0, %v4947
        %v4949 = vpop.f32.mrf.mxu0
        %4950 = vmatprep.mubr.bf16.mxu0 0
        %4951 = vmatmul.mubr.bf16.gmra.mxu0 %v4759
        %v4952 = vpop.f32.mrf.mxu0
        %v4953 = vadd.f32 0.0, %v4952
        %v4954 = vpop.f32.mrf.mxu0
        %v4955 = vpop.f32.mrf.mxu0
        %v4956 = vadd.f32 0.0, %v4955
        %v4957 = vpop.f32.mrf.mxu0
        %4958 = vmatprep.mubr.bf16.mxu0 0
        %4959 = vmatmul.mubr.bf16.gmra.mxu0 %v4762
        %v4960 = vpop.f32.mrf.mxu0
        %v4961 = vadd.f32 0.0, %v4960
        %v4962 = vpop.f32.mrf.mxu0
        %v4963 = vpop.f32.mrf.mxu0
        %v4964 = vadd.f32 0.0, %v4963
        %v4965 = vpop.f32.mrf.mxu0
        %4966 = vmatprep.mubr.bf16.mxu0 0
        %4967 = vmatmul.mubr.bf16.gmra.mxu0 %v4765
        %v4968 = vpop.f32.mrf.mxu0
        %v4969 = vadd.f32 0.0, %v4968
        %v4970 = vpop.f32.mrf.mxu0
        %v4971 = vpop.f32.mrf.mxu0
        %v4972 = vadd.f32 0.0, %v4971
        %v4973 = vpop.f32.mrf.mxu0
        %4974 = vmatprep.mubr.bf16.mxu0 0
        %4975 = vmatmul.mubr.bf16.gmra.mxu0 %v4768
        %v4976 = vpop.f32.mrf.mxu0
        %v4977 = vadd.f32 0.0, %v4976
        %v4978 = vpop.f32.mrf.mxu0
        %v4979 = vpop.f32.mrf.mxu0
        %v4980 = vadd.f32 0.0, %v4979
        %v4981 = vpop.f32.mrf.mxu0
        %4982 = vmatprep.mubr.bf16.mxu0 0
        %4983 = vmatmul.mubr.bf16.gmra.mxu0 %v4771
        %v4984 = vpop.f32.mrf.mxu0
        %v4985 = vadd.f32 0.0, %v4984
        %v4986 = vpop.f32.mrf.mxu0
        %v4987 = vpop.f32.mrf.mxu0
        %v4988 = vadd.f32 0.0, %v4987
        %v4989 = vpop.f32.mrf.mxu0
        %4990 = vmatprep.mubr.bf16.mxu0 0
        %4991 = vmatmul.mubr.bf16.gmra.mxu0 %v4774
        %v4992 = vpop.f32.mrf.mxu0
        %v4993 = vadd.f32 0.0, %v4992
        %v4994 = vpop.f32.mrf.mxu0
        %v4995 = vpop.f32.mrf.mxu0
        %v4996 = vadd.f32 0.0, %v4995
        %v4997 = vpop.f32.mrf.mxu0
        %4998 = vmatprep.mubr.bf16.mxu0 0
        %4999 = vmatmul.mubr.bf16.gmra.mxu0 %v4777
        %v5000 = vpop.f32.mrf.mxu0
        %v5001 = vadd.f32 0.0, %v5000
        %v5002 = vpop.f32.mrf.mxu0
        %v5003 = vpop.f32.mrf.mxu0
        %v5004 = vadd.f32 0.0, %v5003
        %v5005 = vpop.f32.mrf.mxu0
        %5006 = vdwg.mxu0
        %v5007 = vadd.f32 %v4604, %v4817
        %v5008 = vadd.f32 %v4605, %v4820
        %v5009 = vadd.f32 %v4606, %v4825
        %v5010 = vadd.f32 %v4607, %v4828
        %v5011 = vadd.f32 %v4608, %v4833
        %v5012 = vadd.f32 %v4609, %v4836
        %v5013 = vadd.f32 %v4610, %v4841
        %v5014 = vadd.f32 %v4611, %v4844
        %v5015 = vadd.f32 %v4612, %v4849
        %v5016 = vadd.f32 %v4613, %v4852
        %v5017 = vadd.f32 %v4614, %v4857
        %v5018 = vadd.f32 %v4615, %v4860
        %v5019 = vadd.f32 %v4616, %v4865
        %v5020 = vadd.f32 %v4617, %v4868
        %v5021 = vadd.f32 %v4618, %v4873
        %v5022 = vadd.f32 %v4619, %v4876
        %v5023 = vadd.f32 %v4620, %v4881
        %v5024 = vadd.f32 %v4621, %v4884
        %v5025 = vadd.f32 %v4622, %v4889
        %v5026 = vadd.f32 %v4623, %v4892
        %v5027 = vadd.f32 %v4624, %v4897
        %v5028 = vadd.f32 %v4625, %v4900
        %v5029 = vadd.f32 %v4626, %v4905
        %v5030 = vadd.f32 %v4627, %v4908
        %v5031 = vadd.f32 %v4628, %v4913
        %v5032 = vadd.f32 %v4629, %v4916
        %v5033 = vadd.f32 %v4630, %v4921
        %v5034 = vadd.f32 %v4631, %v4924
        %v5035 = vadd.f32 %v4632, %v4929
        %v5036 = vadd.f32 %v4633, %v4932
        %v5037 = vadd.f32 %v4634, %v4937
        %v5038 = vadd.f32 %v4635, %v4940
        %v5039 = vadd.f32 %v4636, %v4945
        %v5040 = vadd.f32 %v4637, %v4948
        %v5041 = vadd.f32 %v4638, %v4953
        %v5042 = vadd.f32 %v4639, %v4956
        %v5043 = vadd.f32 %v4640, %v4961
        %v5044 = vadd.f32 %v4641, %v4964
        %v5045 = vadd.f32 %v4642, %v4969
        %v5046 = vadd.f32 %v4643, %v4972
        %v5047 = vadd.f32 %v4644, %v4977
        %v5048 = vadd.f32 %v4645, %v4980
        %v5049 = vadd.f32 %v4646, %v4985
        %v5050 = vadd.f32 %v4647, %v4988
        %v5051 = vadd.f32 %v4648, %v4993
        %v5052 = vadd.f32 %v4649, %v4996
        %v5053 = vadd.f32 %v4650, %v5001
        %v5054 = vadd.f32 %v4651, %v5004
        %v5055 = vld [vmem:[#allocation2] sm:$0xff]
        %v5056 = vld [vmem:[#allocation2 + $0x8] sm:$0xff]
        %v5057 = vld [vmem:[#allocation2 + $0x10] sm:$0xff]
        %v5058 = vld [vmem:[#allocation2 + $0x18] sm:$0xff]
        %v5059 = vld [vmem:[#allocation2 + $0x20] sm:$0xff]
        %v5060 = vld [vmem:[#allocation2 + $0x28] sm:$0xff]
        %v5061 = vld [vmem:[#allocation2 + $0x30] sm:$0xff]
        %v5062 = vld [vmem:[#allocation2 + $0x38] sm:$0xff]
        %v5063 = vld [vmem:[#allocation2 + $0x40] sm:$0xff]
        %v5064 = vld [vmem:[#allocation2 + $0x48] sm:$0xff]
        %v5065 = vld [vmem:[#allocation2 + $0x50] sm:$0xff]
        %v5066 = vld [vmem:[#allocation2 + $0x58] sm:$0xff]
        %v5067 = vld [vmem:[#allocation2 + $0x60] sm:$0xff]
        %v5068 = vld [vmem:[#allocation2 + $0x68] sm:$0xff]
        %v5069 = vld [vmem:[#allocation2 + $0x70] sm:$0xff]
        %v5070 = vld [vmem:[#allocation2 + $0x78] sm:$0xff]
        %v5071 = vld [vmem:[#allocation2 + $0x80] sm:$0xff]
        %v5072 = vld [vmem:[#allocation2 + $0x88] sm:$0xff]
        %v5073 = vld [vmem:[#allocation2 + $0x90] sm:$0xff]
        %v5074 = vld [vmem:[#allocation2 + $0x98] sm:$0xff]
        %v5075 = vld [vmem:[#allocation2 + $0xa0] sm:$0xff]
        %v5076 = vld [vmem:[#allocation2 + $0xa8] sm:$0xff]
        %v5077 = vld [vmem:[#allocation2 + $0xb0] sm:$0xff]
        %v5078 = vld [vmem:[#allocation2 + $0xb8] sm:$0xff]
        %v5079 = vld [vmem:[#allocation2 + $0xc0] sm:$0xff]
        %v5080 = vld [vmem:[#allocation2 + $0xc8] sm:$0xff]
        %v5081 = vld [vmem:[#allocation2 + $0xd0] sm:$0xff]
        %v5082 = vld [vmem:[#allocation2 + $0xd8] sm:$0xff]
        %v5083 = vld [vmem:[#allocation2 + $0xe0] sm:$0xff]
        %v5084 = vld [vmem:[#allocation2 + $0xe8] sm:$0xff]
        %v5085 = vld [vmem:[#allocation2 + $0xf0] sm:$0xff]
        %v5086 = vld [vmem:[#allocation2 + $0xf8] sm:$0xff]
        %v5087 = vld [vmem:[#allocation2 + $0x100] sm:$0xff]
        %v5088 = vld [vmem:[#allocation2 + $0x108] sm:$0xff]
        %v5089 = vld [vmem:[#allocation2 + $0x110] sm:$0xff]
        %v5090 = vld [vmem:[#allocation2 + $0x118] sm:$0xff]
        %v5091 = vld [vmem:[#allocation2 + $0x120] sm:$0xff]
        %v5092 = vld [vmem:[#allocation2 + $0x128] sm:$0xff]
        %v5093 = vld [vmem:[#allocation2 + $0x130] sm:$0xff]
        %v5094 = vld [vmem:[#allocation2 + $0x138] sm:$0xff]
        %v5095 = vld [vmem:[#allocation2 + $0x140] sm:$0xff]
        %v5096 = vld [vmem:[#allocation2 + $0x148] sm:$0xff]
        %v5097 = vld [vmem:[#allocation2 + $0x150] sm:$0xff]
        %v5098 = vld [vmem:[#allocation2 + $0x158] sm:$0xff]
        %v5099 = vld [vmem:[#allocation2 + $0x160] sm:$0xff]
        %v5100 = vld [vmem:[#allocation2 + $0x168] sm:$0xff]
        %v5101 = vld [vmem:[#allocation2 + $0x170] sm:$0xff]
        %v5102 = vld [vmem:[#allocation2 + $0x178] sm:$0xff]
        %v5103 = vadd.f32 %v5055, %v5007
        %v5104 = vadd.f32 %v5056, %v5008
        %v5105 = vadd.f32 %v5057, %v5009
        %v5106 = vadd.f32 %v5058, %v5010
        %v5107 = vadd.f32 %v5059, %v5011
        %v5108 = vadd.f32 %v5060, %v5012
        %v5109 = vadd.f32 %v5061, %v5013
        %v5110 = vadd.f32 %v5062, %v5014
        %v5111 = vadd.f32 %v5063, %v5015
        %v5112 = vadd.f32 %v5064, %v5016
        %v5113 = vadd.f32 %v5065, %v5017
        %v5114 = vadd.f32 %v5066, %v5018
        %v5115 = vadd.f32 %v5067, %v5019
        %v5116 = vadd.f32 %v5068, %v5020
        %v5117 = vadd.f32 %v5069, %v5021
        %v5118 = vadd.f32 %v5070, %v5022
        %v5119 = vadd.f32 %v5071, %v5023
        %v5120 = vadd.f32 %v5072, %v5024
        %v5121 = vadd.f32 %v5073, %v5025
        %v5122 = vadd.f32 %v5074, %v5026
        %v5123 = vadd.f32 %v5075, %v5027
        %v5124 = vadd.f32 %v5076, %v5028
        %v5125 = vadd.f32 %v5077, %v5029
        %v5126 = vadd.f32 %v5078, %v5030
        %v5127 = vadd.f32 %v5079, %v5031
        %v5128 = vadd.f32 %v5080, %v5032
        %v5129 = vadd.f32 %v5081, %v5033
        %v5130 = vadd.f32 %v5082, %v5034
        %v5131 = vadd.f32 %v5083, %v5035
        %v5132 = vadd.f32 %v5084, %v5036
        %v5133 = vadd.f32 %v5085, %v5037
        %v5134 = vadd.f32 %v5086, %v5038
        %v5135 = vadd.f32 %v5087, %v5039
        %v5136 = vadd.f32 %v5088, %v5040
        %v5137 = vadd.f32 %v5089, %v5041
        %v5138 = vadd.f32 %v5090, %v5042
        %v5139 = vadd.f32 %v5091, %v5043
        %v5140 = vadd.f32 %v5092, %v5044
        %v5141 = vadd.f32 %v5093, %v5045
        %v5142 = vadd.f32 %v5094, %v5046
        %v5143 = vadd.f32 %v5095, %v5047
        %v5144 = vadd.f32 %v5096, %v5048
        %v5145 = vadd.f32 %v5097, %v5049
        %v5146 = vadd.f32 %v5098, %v5050
        %v5147 = vadd.f32 %v5099, %v5051
        %v5148 = vadd.f32 %v5100, %v5052
        %v5149 = vadd.f32 %v5101, %v5053
        %v5150 = vadd.f32 %v5102, %v5054
        %vm5151 = vcmask 130048
        %5152 = vst.msk [vmem:[#allocation2] sm:$0xff] %vm5151, %v5103
        %5153 = vst.msk [vmem:[#allocation2 + $0x8] sm:$0xff] %vm5151, %v5104
        %5154 = vst.msk [vmem:[#allocation2 + $0x10] sm:$0xff] %vm5151, %v5105
        %5155 = vst.msk [vmem:[#allocation2 + $0x18] sm:$0xff] %vm5151, %v5106
        %5156 = vst.msk [vmem:[#allocation2 + $0x20] sm:$0xff] %vm5151, %v5107
        %5157 = vst.msk [vmem:[#allocation2 + $0x28] sm:$0xff] %vm5151, %v5108
        %5158 = vst.msk [vmem:[#allocation2 + $0x30] sm:$0xff] %vm5151, %v5109
        %5159 = vst.msk [vmem:[#allocation2 + $0x38] sm:$0xff] %vm5151, %v5110
        %5160 = vst.msk [vmem:[#allocation2 + $0x40] sm:$0xff] %vm5151, %v5111
        %5161 = vst.msk [vmem:[#allocation2 + $0x48] sm:$0xff] %vm5151, %v5112
        %5162 = vst.msk [vmem:[#allocation2 + $0x50] sm:$0xff] %vm5151, %v5113
        %5163 = vst.msk [vmem:[#allocation2 + $0x58] sm:$0xff] %vm5151, %v5114
        %5164 = vst.msk [vmem:[#allocation2 + $0x60] sm:$0xff] %vm5151, %v5115
        %5165 = vst.msk [vmem:[#allocation2 + $0x68] sm:$0xff] %vm5151, %v5116
        %5166 = vst.msk [vmem:[#allocation2 + $0x70] sm:$0xff] %vm5151, %v5117
        %5167 = vst.msk [vmem:[#allocation2 + $0x78] sm:$0xff] %vm5151, %v5118
        %5168 = vst.msk [vmem:[#allocation2 + $0x80] sm:$0xff] %vm5151, %v5119
        %5169 = vst.msk [vmem:[#allocation2 + $0x88] sm:$0xff] %vm5151, %v5120
        %5170 = vst.msk [vmem:[#allocation2 + $0x90] sm:$0xff] %vm5151, %v5121
        %5171 = vst.msk [vmem:[#allocation2 + $0x98] sm:$0xff] %vm5151, %v5122
        %5172 = vst.msk [vmem:[#allocation2 + $0xa0] sm:$0xff] %vm5151, %v5123
        %5173 = vst.msk [vmem:[#allocation2 + $0xa8] sm:$0xff] %vm5151, %v5124
        %5174 = vst.msk [vmem:[#allocation2 + $0xb0] sm:$0xff] %vm5151, %v5125
        %5175 = vst.msk [vmem:[#allocation2 + $0xb8] sm:$0xff] %vm5151, %v5126
        %5176 = vst.msk [vmem:[#allocation2 + $0xc0] sm:$0xff] %vm5151, %v5127
        %5177 = vst.msk [vmem:[#allocation2 + $0xc8] sm:$0xff] %vm5151, %v5128
        %5178 = vst.msk [vmem:[#allocation2 + $0xd0] sm:$0xff] %vm5151, %v5129
        %5179 = vst.msk [vmem:[#allocation2 + $0xd8] sm:$0xff] %vm5151, %v5130
        %5180 = vst.msk [vmem:[#allocation2 + $0xe0] sm:$0xff] %vm5151, %v5131
        %5181 = vst.msk [vmem:[#allocation2 + $0xe8] sm:$0xff] %vm5151, %v5132
        %5182 = vst.msk [vmem:[#allocation2 + $0xf0] sm:$0xff] %vm5151, %v5133
        %5183 = vst.msk [vmem:[#allocation2 + $0xf8] sm:$0xff] %vm5151, %v5134
        %5184 = vst.msk [vmem:[#allocation2 + $0x100] sm:$0xff] %vm5151, %v5135
        %5185 = vst.msk [vmem:[#allocation2 + $0x108] sm:$0xff] %vm5151, %v5136
        %5186 = vst.msk [vmem:[#allocation2 + $0x110] sm:$0xff] %vm5151, %v5137
        %5187 = vst.msk [vmem:[#allocation2 + $0x118] sm:$0xff] %vm5151, %v5138
        %5188 = vst.msk [vmem:[#allocation2 + $0x120] sm:$0xff] %vm5151, %v5139
        %5189 = vst.msk [vmem:[#allocation2 + $0x128] sm:$0xff] %vm5151, %v5140
        %5190 = vst.msk [vmem:[#allocation2 + $0x130] sm:$0xff] %vm5151, %v5141
        %5191 = vst.msk [vmem:[#allocation2 + $0x138] sm:$0xff] %vm5151, %v5142
        %5192 = vst.msk [vmem:[#allocation2 + $0x140] sm:$0xff] %vm5151, %v5143
        %5193 = vst.msk [vmem:[#allocation2 + $0x148] sm:$0xff] %vm5151, %v5144
        %5194 = vst.msk [vmem:[#allocation2 + $0x150] sm:$0xff] %vm5151, %v5145
        %5195 = vst.msk [vmem:[#allocation2 + $0x158] sm:$0xff] %vm5151, %v5146
        %5196 = vst.msk [vmem:[#allocation2 + $0x160] sm:$0xff] %vm5151, %v5147
        %5197 = vst.msk [vmem:[#allocation2 + $0x168] sm:$0xff] %vm5151, %v5148
        %5198 = vst.msk [vmem:[#allocation2 + $0x170] sm:$0xff] %vm5151, %v5149
        %5199 = vst.msk [vmem:[#allocation2 + $0x178] sm:$0xff] %vm5151, %v5150
        // Predicated region
        $region37: #{tpu_custom_call.1} parent=31 // pred_check
          %p5200 = pneg %p370
        $region38: #{tpu_custom_call.1} parent=31 // pred_check_branch
          %5202 = sbr.rel (%p5200) target = $region40
        $region39: #{tpu_custom_call.1} parent=31 // pred_region
          %v5203 = vld [vmem:[#allocation2] sm:$0xff]
          %v5204 = vld [vmem:[#allocation2 + $0x8] sm:$0xff]
          %v5205 = vld [vmem:[#allocation2 + $0x10] sm:$0xff]
          %v5206 = vld [vmem:[#allocation2 + $0x18] sm:$0xff]
          %v5207 = vld [vmem:[#allocation2 + $0x20] sm:$0xff]
          %v5208 = vld [vmem:[#allocation2 + $0x28] sm:$0xff]
          %v5209 = vld [vmem:[#allocation2 + $0x30] sm:$0xff]
          %v5210 = vld [vmem:[#allocation2 + $0x38] sm:$0xff]
          %v5211 = vld [vmem:[#allocation2 + $0x40] sm:$0xff]
          %v5212 = vld [vmem:[#allocation2 + $0x48] sm:$0xff]
          %v5213 = vld [vmem:[#allocation2 + $0x50] sm:$0xff]
          %v5214 = vld [vmem:[#allocation2 + $0x58] sm:$0xff]
          %v5215 = vld [vmem:[#allocation2 + $0x60] sm:$0xff]
          %v5216 = vld [vmem:[#allocation2 + $0x68] sm:$0xff]
          %v5217 = vld [vmem:[#allocation2 + $0x70] sm:$0xff]
          %v5218 = vld [vmem:[#allocation2 + $0x78] sm:$0xff]
          %v5219 = vld [vmem:[#allocation2 + $0x80] sm:$0xff]
          %v5220 = vld [vmem:[#allocation2 + $0x88] sm:$0xff]
          %v5221 = vld [vmem:[#allocation2 + $0x90] sm:$0xff]
          %v5222 = vld [vmem:[#allocation2 + $0x98] sm:$0xff]
          %v5223 = vld [vmem:[#allocation2 + $0xa0] sm:$0xff]
          %v5224 = vld [vmem:[#allocation2 + $0xa8] sm:$0xff]
          %v5225 = vld [vmem:[#allocation2 + $0xb0] sm:$0xff]
          %v5226 = vld [vmem:[#allocation2 + $0xb8] sm:$0xff]
          %v5227 = vld [vmem:[#allocation2 + $0xc0] sm:$0xff]
          %v5228 = vld [vmem:[#allocation2 + $0xc8] sm:$0xff]
          %v5229 = vld [vmem:[#allocation2 + $0xd0] sm:$0xff]
          %v5230 = vld [vmem:[#allocation2 + $0xd8] sm:$0xff]
          %v5231 = vld [vmem:[#allocation2 + $0xe0] sm:$0xff]
          %v5232 = vld [vmem:[#allocation2 + $0xe8] sm:$0xff]
          %v5233 = vld [vmem:[#allocation2 + $0xf0] sm:$0xff]
          %v5234 = vld [vmem:[#allocation2 + $0xf8] sm:$0xff]
          %v5235 = vld [vmem:[#allocation2 + $0x100] sm:$0xff]
          %v5236 = vld [vmem:[#allocation2 + $0x108] sm:$0xff]
          %v5237 = vld [vmem:[#allocation2 + $0x110] sm:$0xff]
          %v5238 = vld [vmem:[#allocation2 + $0x118] sm:$0xff]
          %v5239 = vld [vmem:[#allocation2 + $0x120] sm:$0xff]
          %v5240 = vld [vmem:[#allocation2 + $0x128] sm:$0xff]
          %v5241 = vld [vmem:[#allocation2 + $0x130] sm:$0xff]
          %v5242 = vld [vmem:[#allocation2 + $0x138] sm:$0xff]
          %v5243 = vld [vmem:[#allocation2 + $0x140] sm:$0xff]
          %v5244 = vld [vmem:[#allocation2 + $0x148] sm:$0xff]
          %v5245 = vld [vmem:[#allocation2 + $0x150] sm:$0xff]
          %v5246 = vld [vmem:[#allocation2 + $0x158] sm:$0xff]
          %v5247 = vld [vmem:[#allocation2 + $0x160] sm:$0xff]
          %v5248 = vld [vmem:[#allocation2 + $0x168] sm:$0xff]
          %v5249 = vld [vmem:[#allocation2 + $0x170] sm:$0xff]
          %v5250 = vld [vmem:[#allocation2 + $0x178] sm:$0xff]
          %v5251 = vld [vmem:[%s356] sm:$0xff]
          %v5252 = vld [vmem:[%s356 + $0x8] sm:$0xff]
          %v5253 = vld [vmem:[%s356 + $0x10] sm:$0xff]
          %v5254 = vld [vmem:[%s356 + $0x18] sm:$0xff]
          %v5255 = vld [vmem:[%s356 + $0x20] sm:$0xff]
          %v5256 = vld [vmem:[%s356 + $0x28] sm:$0xff]
          %v5257 = vld [vmem:[%s356 + $0x30] sm:$0xff]
          %v5258 = vld [vmem:[%s356 + $0x38] sm:$0xff]
          %v5259 = vld [vmem:[%s356 + $0x40] sm:$0xff]
          %v5260 = vld [vmem:[%s356 + $0x48] sm:$0xff]
          %v5261 = vld [vmem:[%s356 + $0x50] sm:$0xff]
          %v5262 = vld [vmem:[%s356 + $0x58] sm:$0xff]
          %v5263 = vld [vmem:[%s356 + $0x60] sm:$0xff]
          %v5264 = vld [vmem:[%s356 + $0x68] sm:$0xff]
          %v5265 = vld [vmem:[%s356 + $0x70] sm:$0xff]
          %v5266 = vld [vmem:[%s356 + $0x78] sm:$0xff]
          %v5267 = vld [vmem:[%s356 + $0x80] sm:$0xff]
          %v5268 = vld [vmem:[%s356 + $0x88] sm:$0xff]
          %v5269 = vld [vmem:[%s356 + $0x90] sm:$0xff]
          %v5270 = vld [vmem:[%s356 + $0x98] sm:$0xff]
          %v5271 = vld [vmem:[%s356 + $0xa0] sm:$0xff]
          %v5272 = vld [vmem:[%s356 + $0xa8] sm:$0xff]
          %v5273 = vld [vmem:[%s356 + $0xb0] sm:$0xff]
          %v5274 = vld [vmem:[%s356 + $0xb8] sm:$0xff]
          %v5275 = vld [vmem:[%s356 + $0xc0] sm:$0xff]
          %v5276 = vld [vmem:[%s356 + $0xc8] sm:$0xff]
          %v5277 = vld [vmem:[%s356 + $0xd0] sm:$0xff]
          %v5278 = vld [vmem:[%s356 + $0xd8] sm:$0xff]
          %v5279 = vld [vmem:[%s356 + $0xe0] sm:$0xff]
          %v5280 = vld [vmem:[%s356 + $0xe8] sm:$0xff]
          %v5281 = vld [vmem:[%s356 + $0xf0] sm:$0xff]
          %v5282 = vld [vmem:[%s356 + $0xf8] sm:$0xff]
          %v5283 = vld [vmem:[%s356 + $0x100] sm:$0xff]
          %v5284 = vld [vmem:[%s356 + $0x108] sm:$0xff]
          %v5285 = vld [vmem:[%s356 + $0x110] sm:$0xff]
          %v5286 = vld [vmem:[%s356 + $0x118] sm:$0xff]
          %v5287 = vld [vmem:[%s356 + $0x120] sm:$0xff]
          %v5288 = vld [vmem:[%s356 + $0x128] sm:$0xff]
          %v5289 = vld [vmem:[%s356 + $0x130] sm:$0xff]
          %v5290 = vld [vmem:[%s356 + $0x138] sm:$0xff]
          %v5291 = vld [vmem:[%s356 + $0x140] sm:$0xff]
          %v5292 = vld [vmem:[%s356 + $0x148] sm:$0xff]
          %v5293 = vld [vmem:[%s356 + $0x150] sm:$0xff]
          %v5294 = vld [vmem:[%s356 + $0x158] sm:$0xff]
          %v5295 = vld [vmem:[%s356 + $0x160] sm:$0xff]
          %v5296 = vld [vmem:[%s356 + $0x168] sm:$0xff]
          %v5297 = vld [vmem:[%s356 + $0x170] sm:$0xff]
          %v5298 = vld [vmem:[%s356 + $0x178] sm:$0xff]
          %5300 = vset.pattern.permute.xlu0 0
          %5301 = vperm.xlu0 %5300, %v5251
          %v5302 = vpop.permute.xlu0 %5301
          %5305 = vset.pattern.permute.xlu0 0
          %5306 = vperm.xlu0 %5305, %v5252
          %v5307 = vpop.permute.xlu0 %5306
          %5310 = vset.pattern.permute.xlu0 0
          %5311 = vperm.xlu0 %5310, %v5253
          %v5312 = vpop.permute.xlu0 %5311
          %5315 = vset.pattern.permute.xlu0 0
          %5316 = vperm.xlu0 %5315, %v5254
          %v5317 = vpop.permute.xlu0 %5316
          %5320 = vset.pattern.permute.xlu0 0
          %5321 = vperm.xlu0 %5320, %v5255
          %v5322 = vpop.permute.xlu0 %5321
          %5325 = vset.pattern.permute.xlu0 0
          %5326 = vperm.xlu0 %5325, %v5256
          %v5327 = vpop.permute.xlu0 %5326
          %5330 = vset.pattern.permute.xlu0 0
          %5331 = vperm.xlu0 %5330, %v5257
          %v5332 = vpop.permute.xlu0 %5331
          %5335 = vset.pattern.permute.xlu0 0
          %5336 = vperm.xlu0 %5335, %v5258
          %v5337 = vpop.permute.xlu0 %5336
          %5340 = vset.pattern.permute.xlu0 0
          %5341 = vperm.xlu0 %5340, %v5259
          %v5342 = vpop.permute.xlu0 %5341
          %5345 = vset.pattern.permute.xlu0 0
          %5346 = vperm.xlu0 %5345, %v5260
          %v5347 = vpop.permute.xlu0 %5346
          %5350 = vset.pattern.permute.xlu0 0
          %5351 = vperm.xlu0 %5350, %v5261
          %v5352 = vpop.permute.xlu0 %5351
          %5355 = vset.pattern.permute.xlu0 0
          %5356 = vperm.xlu0 %5355, %v5262
          %v5357 = vpop.permute.xlu0 %5356
          %5360 = vset.pattern.permute.xlu0 0
          %5361 = vperm.xlu0 %5360, %v5263
          %v5362 = vpop.permute.xlu0 %5361
          %5365 = vset.pattern.permute.xlu0 0
          %5366 = vperm.xlu0 %5365, %v5264
          %v5367 = vpop.permute.xlu0 %5366
          %5370 = vset.pattern.permute.xlu0 0
          %5371 = vperm.xlu0 %5370, %v5265
          %v5372 = vpop.permute.xlu0 %5371
          %5375 = vset.pattern.permute.xlu0 0
          %5376 = vperm.xlu0 %5375, %v5266
          %v5377 = vpop.permute.xlu0 %5376
          %5380 = vset.pattern.permute.xlu0 0
          %5381 = vperm.xlu0 %5380, %v5267
          %v5382 = vpop.permute.xlu0 %5381
          %5385 = vset.pattern.permute.xlu0 0
          %5386 = vperm.xlu0 %5385, %v5268
          %v5387 = vpop.permute.xlu0 %5386
          %5390 = vset.pattern.permute.xlu0 0
          %5391 = vperm.xlu0 %5390, %v5269
          %v5392 = vpop.permute.xlu0 %5391
          %5395 = vset.pattern.permute.xlu0 0
          %5396 = vperm.xlu0 %5395, %v5270
          %v5397 = vpop.permute.xlu0 %5396
          %5400 = vset.pattern.permute.xlu0 0
          %5401 = vperm.xlu0 %5400, %v5271
          %v5402 = vpop.permute.xlu0 %5401
          %5405 = vset.pattern.permute.xlu0 0
          %5406 = vperm.xlu0 %5405, %v5272
          %v5407 = vpop.permute.xlu0 %5406
          %5410 = vset.pattern.permute.xlu0 0
          %5411 = vperm.xlu0 %5410, %v5273
          %v5412 = vpop.permute.xlu0 %5411
          %5415 = vset.pattern.permute.xlu0 0
          %5416 = vperm.xlu0 %5415, %v5274
          %v5417 = vpop.permute.xlu0 %5416
          %5420 = vset.pattern.permute.xlu0 0
          %5421 = vperm.xlu0 %5420, %v5275
          %v5422 = vpop.permute.xlu0 %5421
          %5425 = vset.pattern.permute.xlu0 0
          %5426 = vperm.xlu0 %5425, %v5276
          %v5427 = vpop.permute.xlu0 %5426
          %5430 = vset.pattern.permute.xlu0 0
          %5431 = vperm.xlu0 %5430, %v5277
          %v5432 = vpop.permute.xlu0 %5431
          %5435 = vset.pattern.permute.xlu0 0
          %5436 = vperm.xlu0 %5435, %v5278
          %v5437 = vpop.permute.xlu0 %5436
          %5440 = vset.pattern.permute.xlu0 0
          %5441 = vperm.xlu0 %5440, %v5279
          %v5442 = vpop.permute.xlu0 %5441
          %5445 = vset.pattern.permute.xlu0 0
          %5446 = vperm.xlu0 %5445, %v5280
          %v5447 = vpop.permute.xlu0 %5446
          %5450 = vset.pattern.permute.xlu0 0
          %5451 = vperm.xlu0 %5450, %v5281
          %v5452 = vpop.permute.xlu0 %5451
          %5455 = vset.pattern.permute.xlu0 0
          %5456 = vperm.xlu0 %5455, %v5282
          %v5457 = vpop.permute.xlu0 %5456
          %5460 = vset.pattern.permute.xlu0 0
          %5461 = vperm.xlu0 %5460, %v5283
          %v5462 = vpop.permute.xlu0 %5461
          %5465 = vset.pattern.permute.xlu0 0
          %5466 = vperm.xlu0 %5465, %v5284
          %v5467 = vpop.permute.xlu0 %5466
          %5470 = vset.pattern.permute.xlu0 0
          %5471 = vperm.xlu0 %5470, %v5285
          %v5472 = vpop.permute.xlu0 %5471
          %5475 = vset.pattern.permute.xlu0 0
          %5476 = vperm.xlu0 %5475, %v5286
          %v5477 = vpop.permute.xlu0 %5476
          %5480 = vset.pattern.permute.xlu0 0
          %5481 = vperm.xlu0 %5480, %v5287
          %v5482 = vpop.permute.xlu0 %5481
          %5485 = vset.pattern.permute.xlu0 0
          %5486 = vperm.xlu0 %5485, %v5288
          %v5487 = vpop.permute.xlu0 %5486
          %5490 = vset.pattern.permute.xlu0 0
          %5491 = vperm.xlu0 %5490, %v5289
          %v5492 = vpop.permute.xlu0 %5491
          %5495 = vset.pattern.permute.xlu0 0
          %5496 = vperm.xlu0 %5495, %v5290
          %v5497 = vpop.permute.xlu0 %5496
          %5500 = vset.pattern.permute.xlu0 0
          %5501 = vperm.xlu0 %5500, %v5291
          %v5502 = vpop.permute.xlu0 %5501
          %5505 = vset.pattern.permute.xlu0 0
          %5506 = vperm.xlu0 %5505, %v5292
          %v5507 = vpop.permute.xlu0 %5506
          %5510 = vset.pattern.permute.xlu0 0
          %5511 = vperm.xlu0 %5510, %v5293
          %v5512 = vpop.permute.xlu0 %5511
          %5515 = vset.pattern.permute.xlu0 0
          %5516 = vperm.xlu0 %5515, %v5294
          %v5517 = vpop.permute.xlu0 %5516
          %5520 = vset.pattern.permute.xlu0 0
          %5521 = vperm.xlu0 %5520, %v5295
          %v5522 = vpop.permute.xlu0 %5521
          %5525 = vset.pattern.permute.xlu0 0
          %5526 = vperm.xlu0 %5525, %v5296
          %v5527 = vpop.permute.xlu0 %5526
          %5530 = vset.pattern.permute.xlu0 0
          %5531 = vperm.xlu0 %5530, %v5297
          %v5532 = vpop.permute.xlu0 %5531
          %5535 = vset.pattern.permute.xlu0 0
          %5536 = vperm.xlu0 %5535, %v5298
          %v5537 = vpop.permute.xlu0 %5536
          %v5539 = vmul.f32 %v5203, %v5302
          %v5540 = vmul.f32 %v5204, %v5307
          %v5541 = vmul.f32 %v5205, %v5312
          %v5542 = vmul.f32 %v5206, %v5317
          %v5543 = vmul.f32 %v5207, %v5322
          %v5544 = vmul.f32 %v5208, %v5327
          %v5545 = vmul.f32 %v5209, %v5332
          %v5546 = vmul.f32 %v5210, %v5337
          %v5547 = vmul.f32 %v5211, %v5342
          %v5548 = vmul.f32 %v5212, %v5347
          %v5549 = vmul.f32 %v5213, %v5352
          %v5550 = vmul.f32 %v5214, %v5357
          %v5551 = vmul.f32 %v5215, %v5362
          %v5552 = vmul.f32 %v5216, %v5367
          %v5553 = vmul.f32 %v5217, %v5372
          %v5554 = vmul.f32 %v5218, %v5377
          %v5555 = vmul.f32 %v5219, %v5382
          %v5556 = vmul.f32 %v5220, %v5387
          %v5557 = vmul.f32 %v5221, %v5392
          %v5558 = vmul.f32 %v5222, %v5397
          %v5559 = vmul.f32 %v5223, %v5402
          %v5560 = vmul.f32 %v5224, %v5407
          %v5561 = vmul.f32 %v5225, %v5412
          %v5562 = vmul.f32 %v5226, %v5417
          %v5563 = vmul.f32 %v5227, %v5422
          %v5564 = vmul.f32 %v5228, %v5427
          %v5565 = vmul.f32 %v5229, %v5432
          %v5566 = vmul.f32 %v5230, %v5437
          %v5567 = vmul.f32 %v5231, %v5442
          %v5568 = vmul.f32 %v5232, %v5447
          %v5569 = vmul.f32 %v5233, %v5452
          %v5570 = vmul.f32 %v5234, %v5457
          %v5571 = vmul.f32 %v5235, %v5462
          %v5572 = vmul.f32 %v5236, %v5467
          %v5573 = vmul.f32 %v5237, %v5472
          %v5574 = vmul.f32 %v5238, %v5477
          %v5575 = vmul.f32 %v5239, %v5482
          %v5576 = vmul.f32 %v5240, %v5487
          %v5577 = vmul.f32 %v5241, %v5492
          %v5578 = vmul.f32 %v5242, %v5497
          %v5579 = vmul.f32 %v5243, %v5502
          %v5580 = vmul.f32 %v5244, %v5507
          %v5581 = vmul.f32 %v5245, %v5512
          %v5582 = vmul.f32 %v5246, %v5517
          %v5583 = vmul.f32 %v5247, %v5522
          %v5584 = vmul.f32 %v5248, %v5527
          %v5585 = vmul.f32 %v5249, %v5532
          %v5586 = vmul.f32 %v5250, %v5537
          %v5587 = vsel %vm5151, %v5539, 0.0
          %v5588 = vsel %vm5151, %v5540, 0.0
          %v5589 = vadd.f32 %v5587, %v5588
          %v5590 = vsel %vm5151, %v5541, 0.0
          %v5591 = vadd.f32 %v5589, %v5590
          %v5592 = vsel %vm5151, %v5542, 0.0
          %v5593 = vadd.f32 %v5591, %v5592
          %v5594 = vsel %vm5151, %v5543, 0.0
          %v5595 = vadd.f32 %v5593, %v5594
          %v5596 = vsel %vm5151, %v5544, 0.0
          %v5597 = vadd.f32 %v5595, %v5596
          %v5598 = vsel %vm5151, %v5545, 0.0
          %v5599 = vadd.f32 %v5597, %v5598
          %v5600 = vsel %vm5151, %v5546, 0.0
          %v5601 = vadd.f32 %v5599, %v5600
          %v5602 = vsel %vm5151, %v5547, 0.0
          %v5603 = vadd.f32 %v5601, %v5602
          %v5604 = vsel %vm5151, %v5548, 0.0
          %v5605 = vadd.f32 %v5603, %v5604
          %v5606 = vsel %vm5151, %v5549, 0.0
          %v5607 = vadd.f32 %v5605, %v5606
          %v5608 = vsel %vm5151, %v5550, 0.0
          %v5609 = vadd.f32 %v5607, %v5608
          %v5610 = vsel %vm5151, %v5551, 0.0
          %v5611 = vadd.f32 %v5609, %v5610
          %v5612 = vsel %vm5151, %v5552, 0.0
          %v5613 = vadd.f32 %v5611, %v5612
          %v5614 = vsel %vm5151, %v5553, 0.0
          %v5615 = vadd.f32 %v5613, %v5614
          %v5616 = vsel %vm5151, %v5554, 0.0
          %v5617 = vadd.f32 %v5615, %v5616
          %v5618 = vsel %vm5151, %v5555, 0.0
          %v5619 = vadd.f32 %v5617, %v5618
          %v5620 = vsel %vm5151, %v5556, 0.0
          %v5621 = vadd.f32 %v5619, %v5620
          %v5622 = vsel %vm5151, %v5557, 0.0
          %v5623 = vadd.f32 %v5621, %v5622
          %v5624 = vsel %vm5151, %v5558, 0.0
          %v5625 = vadd.f32 %v5623, %v5624
          %v5626 = vsel %vm5151, %v5559, 0.0
          %v5627 = vadd.f32 %v5625, %v5626
          %v5628 = vsel %vm5151, %v5560, 0.0
          %v5629 = vadd.f32 %v5627, %v5628
          %v5630 = vsel %vm5151, %v5561, 0.0
          %v5631 = vadd.f32 %v5629, %v5630
          %v5632 = vsel %vm5151, %v5562, 0.0
          %v5633 = vadd.f32 %v5631, %v5632
          %v5634 = vsel %vm5151, %v5563, 0.0
          %v5635 = vadd.f32 %v5633, %v5634
          %v5636 = vsel %vm5151, %v5564, 0.0
          %v5637 = vadd.f32 %v5635, %v5636
          %v5638 = vsel %vm5151, %v5565, 0.0
          %v5639 = vadd.f32 %v5637, %v5638
          %v5640 = vsel %vm5151, %v5566, 0.0
          %v5641 = vadd.f32 %v5639, %v5640
          %v5642 = vsel %vm5151, %v5567, 0.0
          %v5643 = vadd.f32 %v5641, %v5642
          %v5644 = vsel %vm5151, %v5568, 0.0
          %v5645 = vadd.f32 %v5643, %v5644
          %v5646 = vsel %vm5151, %v5569, 0.0
          %v5647 = vadd.f32 %v5645, %v5646
          %v5648 = vsel %vm5151, %v5570, 0.0
          %v5649 = vadd.f32 %v5647, %v5648
          %v5650 = vsel %vm5151, %v5571, 0.0
          %v5651 = vadd.f32 %v5649, %v5650
          %v5652 = vsel %vm5151, %v5572, 0.0
          %v5653 = vadd.f32 %v5651, %v5652
          %v5654 = vsel %vm5151, %v5573, 0.0
          %v5655 = vadd.f32 %v5653, %v5654
          %v5656 = vsel %vm5151, %v5574, 0.0
          %v5657 = vadd.f32 %v5655, %v5656
          %v5658 = vsel %vm5151, %v5575, 0.0
          %v5659 = vadd.f32 %v5657, %v5658
          %v5660 = vsel %vm5151, %v5576, 0.0
          %v5661 = vadd.f32 %v5659, %v5660
          %v5662 = vsel %vm5151, %v5577, 0.0
          %v5663 = vadd.f32 %v5661, %v5662
          %v5664 = vsel %vm5151, %v5578, 0.0
          %v5665 = vadd.f32 %v5663, %v5664
          %v5666 = vsel %vm5151, %v5579, 0.0
          %v5667 = vadd.f32 %v5665, %v5666
          %v5668 = vsel %vm5151, %v5580, 0.0
          %v5669 = vadd.f32 %v5667, %v5668
          %v5670 = vsel %vm5151, %v5581, 0.0
          %v5671 = vadd.f32 %v5669, %v5670
          %v5672 = vsel %vm5151, %v5582, 0.0
          %v5673 = vadd.f32 %v5671, %v5672
          %v5674 = vsel %vm5151, %v5583, 0.0
          %v5675 = vadd.f32 %v5673, %v5674
          %v5676 = vsel %vm5151, %v5584, 0.0
          %v5677 = vadd.f32 %v5675, %v5676
          %v5678 = vsel %vm5151, %v5585, 0.0
          %v5679 = vadd.f32 %v5677, %v5678
          %v5680 = vsel %vm5151, %v5586, 0.0
          %v5681 = vadd.f32 %v5679, %v5680
          %v5682 = vrot.slane %v5681, 4
          %v5683 = vadd.f32 %v5681, %v5682
          %v5684 = vrot.slane %v5683, 2
          %v5685 = vadd.f32 %v5683, %v5684
          %v5686 = vrot.slane %v5685, 1
          %v5687 = vadd.f32 %v5685, %v5686
          %v5688 = vmul.f32 %v5539, %v5203
          %v5689 = vmul.f32 %v5540, %v5204
          %v5690 = vmul.f32 %v5541, %v5205
          %v5691 = vmul.f32 %v5542, %v5206
          %v5692 = vmul.f32 %v5543, %v5207
          %v5693 = vmul.f32 %v5544, %v5208
          %v5694 = vmul.f32 %v5545, %v5209
          %v5695 = vmul.f32 %v5546, %v5210
          %v5696 = vmul.f32 %v5547, %v5211
          %v5697 = vmul.f32 %v5548, %v5212
          %v5698 = vmul.f32 %v5549, %v5213
          %v5699 = vmul.f32 %v5550, %v5214
          %v5700 = vmul.f32 %v5551, %v5215
          %v5701 = vmul.f32 %v5552, %v5216
          %v5702 = vmul.f32 %v5553, %v5217
          %v5703 = vmul.f32 %v5554, %v5218
          %v5704 = vmul.f32 %v5555, %v5219
          %v5705 = vmul.f32 %v5556, %v5220
          %v5706 = vmul.f32 %v5557, %v5221
          %v5707 = vmul.f32 %v5558, %v5222
          %v5708 = vmul.f32 %v5559, %v5223
          %v5709 = vmul.f32 %v5560, %v5224
          %v5710 = vmul.f32 %v5561, %v5225
          %v5711 = vmul.f32 %v5562, %v5226
          %v5712 = vmul.f32 %v5563, %v5227
          %v5713 = vmul.f32 %v5564, %v5228
          %v5714 = vmul.f32 %v5565, %v5229
          %v5715 = vmul.f32 %v5566, %v5230
          %v5716 = vmul.f32 %v5567, %v5231
          %v5717 = vmul.f32 %v5568, %v5232
          %v5718 = vmul.f32 %v5569, %v5233
          %v5719 = vmul.f32 %v5570, %v5234
          %v5720 = vmul.f32 %v5571, %v5235
          %v5721 = vmul.f32 %v5572, %v5236
          %v5722 = vmul.f32 %v5573, %v5237
          %v5723 = vmul.f32 %v5574, %v5238
          %v5724 = vmul.f32 %v5575, %v5239
          %v5725 = vmul.f32 %v5576, %v5240
          %v5726 = vmul.f32 %v5577, %v5241
          %v5727 = vmul.f32 %v5578, %v5242
          %v5728 = vmul.f32 %v5579, %v5243
          %v5729 = vmul.f32 %v5580, %v5244
          %v5730 = vmul.f32 %v5581, %v5245
          %v5731 = vmul.f32 %v5582, %v5246
          %v5732 = vmul.f32 %v5583, %v5247
          %v5733 = vmul.f32 %v5584, %v5248
          %v5734 = vmul.f32 %v5585, %v5249
          %v5735 = vmul.f32 %v5586, %v5250
          %v5736 = vsel %vm5151, %v5688, 0.0
          %v5737 = vsel %vm5151, %v5689, 0.0
          %v5738 = vadd.f32 %v5736, %v5737
          %v5739 = vsel %vm5151, %v5690, 0.0
          %v5740 = vadd.f32 %v5738, %v5739
          %v5741 = vsel %vm5151, %v5691, 0.0
          %v5742 = vadd.f32 %v5740, %v5741
          %v5743 = vsel %vm5151, %v5692, 0.0
          %v5744 = vadd.f32 %v5742, %v5743
          %v5745 = vsel %vm5151, %v5693, 0.0
          %v5746 = vadd.f32 %v5744, %v5745
          %v5747 = vsel %vm5151, %v5694, 0.0
          %v5748 = vadd.f32 %v5746, %v5747
          %v5749 = vsel %vm5151, %v5695, 0.0
          %v5750 = vadd.f32 %v5748, %v5749
          %v5751 = vsel %vm5151, %v5696, 0.0
          %v5752 = vadd.f32 %v5750, %v5751
          %v5753 = vsel %vm5151, %v5697, 0.0
          %v5754 = vadd.f32 %v5752, %v5753
          %v5755 = vsel %vm5151, %v5698, 0.0
          %v5756 = vadd.f32 %v5754, %v5755
          %v5757 = vsel %vm5151, %v5699, 0.0
          %v5758 = vadd.f32 %v5756, %v5757
          %v5759 = vsel %vm5151, %v5700, 0.0
          %v5760 = vadd.f32 %v5758, %v5759
          %v5761 = vsel %vm5151, %v5701, 0.0
          %v5762 = vadd.f32 %v5760, %v5761
          %v5763 = vsel %vm5151, %v5702, 0.0
          %v5764 = vadd.f32 %v5762, %v5763
          %v5765 = vsel %vm5151, %v5703, 0.0
          %v5766 = vadd.f32 %v5764, %v5765
          %v5767 = vsel %vm5151, %v5704, 0.0
          %v5768 = vadd.f32 %v5766, %v5767
          %v5769 = vsel %vm5151, %v5705, 0.0
          %v5770 = vadd.f32 %v5768, %v5769
          %v5771 = vsel %vm5151, %v5706, 0.0
          %v5772 = vadd.f32 %v5770, %v5771
          %v5773 = vsel %vm5151, %v5707, 0.0
          %v5774 = vadd.f32 %v5772, %v5773
          %v5775 = vsel %vm5151, %v5708, 0.0
          %v5776 = vadd.f32 %v5774, %v5775
          %v5777 = vsel %vm5151, %v5709, 0.0
          %v5778 = vadd.f32 %v5776, %v5777
          %v5779 = vsel %vm5151, %v5710, 0.0
          %v5780 = vadd.f32 %v5778, %v5779
          %v5781 = vsel %vm5151, %v5711, 0.0
          %v5782 = vadd.f32 %v5780, %v5781
          %v5783 = vsel %vm5151, %v5712, 0.0
          %v5784 = vadd.f32 %v5782, %v5783
          %v5785 = vsel %vm5151, %v5713, 0.0
          %v5786 = vadd.f32 %v5784, %v5785
          %v5787 = vsel %vm5151, %v5714, 0.0
          %v5788 = vadd.f32 %v5786, %v5787
          %v5789 = vsel %vm5151, %v5715, 0.0
          %v5790 = vadd.f32 %v5788, %v5789
          %v5791 = vsel %vm5151, %v5716, 0.0
          %v5792 = vadd.f32 %v5790, %v5791
          %v5793 = vsel %vm5151, %v5717, 0.0
          %v5794 = vadd.f32 %v5792, %v5793
          %v5795 = vsel %vm5151, %v5718, 0.0
          %v5796 = vadd.f32 %v5794, %v5795
          %v5797 = vsel %vm5151, %v5719, 0.0
          %v5798 = vadd.f32 %v5796, %v5797
          %v5799 = vsel %vm5151, %v5720, 0.0
          %v5800 = vadd.f32 %v5798, %v5799
          %v5801 = vsel %vm5151, %v5721, 0.0
          %v5802 = vadd.f32 %v5800, %v5801
          %v5803 = vsel %vm5151, %v5722, 0.0
          %v5804 = vadd.f32 %v5802, %v5803
          %v5805 = vsel %vm5151, %v5723, 0.0
          %v5806 = vadd.f32 %v5804, %v5805
          %v5807 = vsel %vm5151, %v5724, 0.0
          %v5808 = vadd.f32 %v5806, %v5807
          %v5809 = vsel %vm5151, %v5725, 0.0
          %v5810 = vadd.f32 %v5808, %v5809
          %v5811 = vsel %vm5151, %v5726, 0.0
          %v5812 = vadd.f32 %v5810, %v5811
          %v5813 = vsel %vm5151, %v5727, 0.0
          %v5814 = vadd.f32 %v5812, %v5813
          %v5815 = vsel %vm5151, %v5728, 0.0
          %v5816 = vadd.f32 %v5814, %v5815
          %v5817 = vsel %vm5151, %v5729, 0.0
          %v5818 = vadd.f32 %v5816, %v5817
          %v5819 = vsel %vm5151, %v5730, 0.0
          %v5820 = vadd.f32 %v5818, %v5819
          %v5821 = vsel %vm5151, %v5731, 0.0
          %v5822 = vadd.f32 %v5820, %v5821
          %v5823 = vsel %vm5151, %v5732, 0.0
          %v5824 = vadd.f32 %v5822, %v5823
          %v5825 = vsel %vm5151, %v5733, 0.0
          %v5826 = vadd.f32 %v5824, %v5825
          %v5827 = vsel %vm5151, %v5734, 0.0
          %v5828 = vadd.f32 %v5826, %v5827
          %v5829 = vsel %vm5151, %v5735, 0.0
          %v5830 = vadd.f32 %v5828, %v5829
          %v5831 = vrot.slane %v5830, 4
          %v5832 = vadd.f32 %v5830, %v5831
          %v5833 = vrot.slane %v5832, 2
          %v5834 = vadd.f32 %v5832, %v5833
          %v5835 = vrot.slane %v5834, 1
          %v5836 = vadd.f32 %v5834, %v5835
          %v5837 = vpack.c.bf16 %v5204, %v5203
          %v5838 = vpack.c.bf16 %v5206, %v5205
          %v5839 = vpack.c.bf16 %v5208, %v5207
          %v5840 = vpack.c.bf16 %v5210, %v5209
          %v5841 = vpack.c.bf16 %v5212, %v5211
          %v5842 = vpack.c.bf16 %v5214, %v5213
          %v5843 = vpack.c.bf16 %v5216, %v5215
          %v5844 = vpack.c.bf16 %v5218, %v5217
          %v5845 = vpack.c.bf16 %v5220, %v5219
          %v5846 = vpack.c.bf16 %v5222, %v5221
          %v5847 = vpack.c.bf16 %v5224, %v5223
          %v5848 = vpack.c.bf16 %v5226, %v5225
          %v5849 = vpack.c.bf16 %v5228, %v5227
          %v5850 = vpack.c.bf16 %v5230, %v5229
          %v5851 = vpack.c.bf16 %v5232, %v5231
          %v5852 = vpack.c.bf16 %v5234, %v5233
          %v5853 = vpack.c.bf16 %v5236, %v5235
          %v5854 = vpack.c.bf16 %v5238, %v5237
          %v5855 = vpack.c.bf16 %v5240, %v5239
          %v5856 = vpack.c.bf16 %v5242, %v5241
          %v5857 = vpack.c.bf16 %v5244, %v5243
          %v5858 = vpack.c.bf16 %v5246, %v5245
          %v5859 = vpack.c.bf16 %v5248, %v5247
          %v5860 = vpack.c.bf16 %v5250, %v5249
          %v5885 = vunpack.c.l.b16 %v5837
          %v5886 = vunpack.c.h.b16 %v5837
          %v5887 = vunpack.c.l.b16 %v5838
          %v5888 = vunpack.c.h.b16 %v5838
          %v5889 = vunpack.c.l.b16 %v5839
          %v5890 = vunpack.c.h.b16 %v5839
          %v5891 = vunpack.c.l.b16 %v5840
          %v5892 = vunpack.c.h.b16 %v5840
          %v5893 = vunpack.c.l.b16 %v5841
          %v5894 = vunpack.c.h.b16 %v5841
          %v5895 = vunpack.c.l.b16 %v5842
          %v5896 = vunpack.c.h.b16 %v5842
          %v5897 = vunpack.c.l.b16 %v5843
          %v5898 = vunpack.c.h.b16 %v5843
          %v5899 = vunpack.c.l.b16 %v5844
          %v5900 = vunpack.c.h.b16 %v5844
          %v5901 = vunpack.c.l.b16 %v5845
          %v5902 = vunpack.c.h.b16 %v5845
          %v5903 = vunpack.c.l.b16 %v5846
          %v5904 = vunpack.c.h.b16 %v5846
          %v5905 = vunpack.c.l.b16 %v5847
          %v5906 = vunpack.c.h.b16 %v5847
          %v5907 = vunpack.c.l.b16 %v5848
          %v5908 = vunpack.c.h.b16 %v5848
          %v5909 = vunpack.c.l.b16 %v5849
          %v5910 = vunpack.c.h.b16 %v5849
          %v5911 = vunpack.c.l.b16 %v5850
          %v5912 = vunpack.c.h.b16 %v5850
          %v5913 = vunpack.c.l.b16 %v5851
          %v5914 = vunpack.c.h.b16 %v5851
          %v5915 = vunpack.c.l.b16 %v5852
          %v5916 = vunpack.c.h.b16 %v5852
          %v5917 = vunpack.c.l.b16 %v5853
          %v5918 = vunpack.c.h.b16 %v5853
          %v5919 = vunpack.c.l.b16 %v5854
          %v5920 = vunpack.c.h.b16 %v5854
          %v5921 = vunpack.c.l.b16 %v5855
          %v5922 = vunpack.c.h.b16 %v5855
          %v5923 = vunpack.c.l.b16 %v5856
          %v5924 = vunpack.c.h.b16 %v5856
          %v5925 = vunpack.c.l.b16 %v5857
          %v5926 = vunpack.c.h.b16 %v5857
          %v5927 = vunpack.c.l.b16 %v5858
          %v5928 = vunpack.c.h.b16 %v5858
          %v5929 = vunpack.c.l.b16 %v5859
          %v5930 = vunpack.c.h.b16 %v5859
          %v5931 = vunpack.c.l.b16 %v5860
          %v5932 = vunpack.c.h.b16 %v5860
          %v5933 = vpack.c.b16 %v5885, %v5885
          %v5934 = vpack.c.b16 %v5886, %v5886
          %v5935 = vpack.c.b16 %v5887, %v5887
          %v5936 = vpack.c.b16 %v5888, %v5888
          %v5937 = vpack.c.b16 %v5889, %v5889
          %v5938 = vpack.c.b16 %v5890, %v5890
          %v5939 = vpack.c.b16 %v5891, %v5891
          %v5940 = vpack.c.b16 %v5892, %v5892
          %v5941 = vpack.c.b16 %v5893, %v5893
          %v5942 = vpack.c.b16 %v5894, %v5894
          %v5943 = vpack.c.b16 %v5895, %v5895
          %v5944 = vpack.c.b16 %v5896, %v5896
          %v5945 = vpack.c.b16 %v5897, %v5897
          %v5946 = vpack.c.b16 %v5898, %v5898
          %v5947 = vpack.c.b16 %v5899, %v5899
          %v5948 = vpack.c.b16 %v5900, %v5900
          %v5949 = vpack.c.b16 %v5901, %v5901
          %v5950 = vpack.c.b16 %v5902, %v5902
          %v5951 = vpack.c.b16 %v5903, %v5903
          %v5952 = vpack.c.b16 %v5904, %v5904
          %v5953 = vpack.c.b16 %v5905, %v5905
          %v5954 = vpack.c.b16 %v5906, %v5906
          %v5955 = vpack.c.b16 %v5907, %v5907
          %v5956 = vpack.c.b16 %v5908, %v5908
          %v5957 = vpack.c.b16 %v5909, %v5909
          %v5958 = vpack.c.b16 %v5910, %v5910
          %v5959 = vpack.c.b16 %v5911, %v5911
          %v5960 = vpack.c.b16 %v5912, %v5912
          %v5961 = vpack.c.b16 %v5913, %v5913
          %v5962 = vpack.c.b16 %v5914, %v5914
          %v5963 = vpack.c.b16 %v5915, %v5915
          %v5964 = vpack.c.b16 %v5916, %v5916
          %v5965 = vpack.c.b16 %v5917, %v5917
          %v5966 = vpack.c.b16 %v5918, %v5918
          %v5967 = vpack.c.b16 %v5919, %v5919
          %v5968 = vpack.c.b16 %v5920, %v5920
          %v5969 = vpack.c.b16 %v5921, %v5921
          %v5970 = vpack.c.b16 %v5922, %v5922
          %v5971 = vpack.c.b16 %v5923, %v5923
          %v5972 = vpack.c.b16 %v5924, %v5924
          %v5973 = vpack.c.b16 %v5925, %v5925
          %v5974 = vpack.c.b16 %v5926, %v5926
          %v5975 = vpack.c.b16 %v5927, %v5927
          %v5976 = vpack.c.b16 %v5928, %v5928
          %v5977 = vpack.c.b16 %v5929, %v5929
          %v5978 = vpack.c.b16 %v5930, %v5930
          %v5979 = vpack.c.b16 %v5931, %v5931
          %v5980 = vpack.c.b16 %v5932, %v5932
          %vm6029 = vcmask 125952
          %6030 = vst.msk [vmem:[%s368] sm:$0xf] %vm6029, %v5933
          %6031 = vst.msk [vmem:[%s368 + $0x4] sm:$0xf] %vm6029, %v5934
          %6032 = vst.msk [vmem:[%s368 + $0x8] sm:$0xf] %vm6029, %v5935
          %6033 = vst.msk [vmem:[%s368 + $0xc] sm:$0xf] %vm6029, %v5936
          %6034 = vst.msk [vmem:[%s368 + $0x10] sm:$0xf] %vm6029, %v5937
          %6035 = vst.msk [vmem:[%s368 + $0x14] sm:$0xf] %vm6029, %v5938
          %6036 = vst.msk [vmem:[%s368 + $0x18] sm:$0xf] %vm6029, %v5939
          %6037 = vst.msk [vmem:[%s368 + $0x1c] sm:$0xf] %vm6029, %v5940
          %6038 = vst.msk [vmem:[%s368 + $0x20] sm:$0xf] %vm6029, %v5941
          %6039 = vst.msk [vmem:[%s368 + $0x24] sm:$0xf] %vm6029, %v5942
          %6040 = vst.msk [vmem:[%s368 + $0x28] sm:$0xf] %vm6029, %v5943
          %6041 = vst.msk [vmem:[%s368 + $0x2c] sm:$0xf] %vm6029, %v5944
          %6042 = vst.msk [vmem:[%s368 + $0x30] sm:$0xf] %vm6029, %v5945
          %6043 = vst.msk [vmem:[%s368 + $0x34] sm:$0xf] %vm6029, %v5946
          %6044 = vst.msk [vmem:[%s368 + $0x38] sm:$0xf] %vm6029, %v5947
          %6045 = vst.msk [vmem:[%s368 + $0x3c] sm:$0xf] %vm6029, %v5948
          %6046 = vst.msk [vmem:[%s368 + $0x40] sm:$0xf] %vm6029, %v5949
          %6047 = vst.msk [vmem:[%s368 + $0x44] sm:$0xf] %vm6029, %v5950
          %6048 = vst.msk [vmem:[%s368 + $0x48] sm:$0xf] %vm6029, %v5951
          %6049 = vst.msk [vmem:[%s368 + $0x4c] sm:$0xf] %vm6029, %v5952
          %6050 = vst.msk [vmem:[%s368 + $0x50] sm:$0xf] %vm6029, %v5953
          %6051 = vst.msk [vmem:[%s368 + $0x54] sm:$0xf] %vm6029, %v5954
          %6052 = vst.msk [vmem:[%s368 + $0x58] sm:$0xf] %vm6029, %v5955
          %6053 = vst.msk [vmem:[%s368 + $0x5c] sm:$0xf] %vm6029, %v5956
          %6054 = vst.msk [vmem:[%s368 + $0x60] sm:$0xf] %vm6029, %v5957
          %6055 = vst.msk [vmem:[%s368 + $0x64] sm:$0xf] %vm6029, %v5958
          %6056 = vst.msk [vmem:[%s368 + $0x68] sm:$0xf] %vm6029, %v5959
          %6057 = vst.msk [vmem:[%s368 + $0x6c] sm:$0xf] %vm6029, %v5960
          %6058 = vst.msk [vmem:[%s368 + $0x70] sm:$0xf] %vm6029, %v5961
          %6059 = vst.msk [vmem:[%s368 + $0x74] sm:$0xf] %vm6029, %v5962
          %6060 = vst.msk [vmem:[%s368 + $0x78] sm:$0xf] %vm6029, %v5963
          %6061 = vst.msk [vmem:[%s368 + $0x7c] sm:$0xf] %vm6029, %v5964
          %6062 = vst.msk [vmem:[%s368 + $0x80] sm:$0xf] %vm6029, %v5965
          %6063 = vst.msk [vmem:[%s368 + $0x84] sm:$0xf] %vm6029, %v5966
          %6064 = vst.msk [vmem:[%s368 + $0x88] sm:$0xf] %vm6029, %v5967
          %6065 = vst.msk [vmem:[%s368 + $0x8c] sm:$0xf] %vm6029, %v5968
          %6066 = vst.msk [vmem:[%s368 + $0x90] sm:$0xf] %vm6029, %v5969
          %6067 = vst.msk [vmem:[%s368 + $0x94] sm:$0xf] %vm6029, %v5970
          %6068 = vst.msk [vmem:[%s368 + $0x98] sm:$0xf] %vm6029, %v5971
          %6069 = vst.msk [vmem:[%s368 + $0x9c] sm:$0xf] %vm6029, %v5972
          %6070 = vst.msk [vmem:[%s368 + $0xa0] sm:$0xf] %vm6029, %v5973
          %6071 = vst.msk [vmem:[%s368 + $0xa4] sm:$0xf] %vm6029, %v5974
          %6072 = vst.msk [vmem:[%s368 + $0xa8] sm:$0xf] %vm6029, %v5975
          %6073 = vst.msk [vmem:[%s368 + $0xac] sm:$0xf] %vm6029, %v5976
          %6074 = vst.msk [vmem:[%s368 + $0xb0] sm:$0xf] %vm6029, %v5977
          %6075 = vst.msk [vmem:[%s368 + $0xb4] sm:$0xf] %vm6029, %v5978
          %6076 = vst.msk [vmem:[%s368 + $0xb8] sm:$0xf] %vm6029, %v5979
          %6077 = vst.msk [vmem:[%s368 + $0xbc] sm:$0xf] %vm6029, %v5980
          %vm6078 = vcmask 122880
          %6079 = vst.msk [vmem:[%s326] sm:$0x1] %vm6078, %v5687
          %6080 = vst.msk [vmem:[%s332] sm:$0x1] %vm6078, %v5836
        $region40: #{tpu_custom_call.1} parent=31 // pred_fallthru
          _
        %p6081 = scmp.lt.s32.totalorder %s29, 1
        %s6082 = scalar_select %p6081, %s29, 1
        %p6083 = scmp.lt.s32.totalorder %s30, 0
        %s6084 = scalar_select %p6083, %s30, 0
        %p6085 = scmp.lt.s32.totalorder %s31, 0
        %s6086 = scalar_select %p6085, %s31, 0
        %s6087 = smul.addr %s6084, 48
        %s6088 = sadd.s32 %s6086, %s6087
        %s6089 = smul.addr %s6082, 48
        %s6090 = sadd.s32 %s6088, %s6089
        %s6091 = smul.addr %s6090, 4
        %s6092 = scalar_lea.vmem %s3, %s6091
        %s6093 = sand.u32 %s175, 1
        %s6094 = scalar_lea.sflag [#allocation4], %s6093
        %s6095 = sand.u32 %s175, 1
        %s6096 = scalar_lea.vmem [#allocation3], %s6095
        %s6097 = sand.u32 %s205, 1
        %s6098 = scalar_lea.sflag [#allocation6], %s6097
        %s6099 = sand.u32 %s205, 1
        %s6100 = scalar_lea.vmem [#allocation5], %s6099
        // Predicated region
        $region41: #{tpu_custom_call.1} parent=31 // pred_check
          %p6101 = pneg %p155
        $region42: #{tpu_custom_call.1} parent=31 // pred_check_branch
          %6103 = sbr.rel (%p6101) target = $region44
        $region43: #{tpu_custom_call.1} parent=31 // pred_region
          _
        $region44: #{tpu_custom_call.1} parent=31 // pred_fallthru
          _
        // Predicated region
        $region45: #{tpu_custom_call.1} parent=31 // pred_check
          %p6104 = pneg %p185
        $region46: #{tpu_custom_call.1} parent=31 // pred_check_branch
          %6106 = sbr.rel (%p6104) target = $region48
        $region47: #{tpu_custom_call.1} parent=31 // pred_region
          %s6108 = ssub.s32 16, 16
          %6109 = vsyncadd %s6094, %s6108
          %s6110 = sadd.s32 %s31, %s30
          %s6111 = sadd.s32 %s6110, %s29
          %s6112 = smul.addr %s6111, 16
          %s6113 = scalar_lea.hbm %s4, %s6112
          %s6115 = sshll.u32 %s6096, 4
          %s6116 = int_to_ptr.vmem [resolvable:$true] %s6115
          %6118 = dma.vmem_to_hbm [thread:$0]  %s6116, 16, %s6113, %s6094
        $region48: #{tpu_custom_call.1} parent=31 // pred_fallthru
          _
        // Predicated region
        $region49: #{tpu_custom_call.1} parent=31 // pred_check
          %p6119 = pneg %p215
        $region50: #{tpu_custom_call.1} parent=31 // pred_check_branch
          %6121 = sbr.rel (%p6119) target = $region52
        $region51: #{tpu_custom_call.1} parent=31 // pred_region
          %s6123 = ssub.s32 16, 16
          %6124 = vsyncadd %s6098, %s6123
          %s6125 = sadd.s32 %s31, %s30
          %s6126 = sadd.s32 %s6125, %s29
          %s6127 = smul.addr %s6126, 16
          %s6128 = scalar_lea.hbm %s5, %s6127
          %s6130 = sshll.u32 %s6100, 4
          %s6131 = int_to_ptr.vmem [resolvable:$true] %s6130
          %6133 = dma.vmem_to_hbm [thread:$0]  %s6131, 16, %s6128, %s6098
        $region52: #{tpu_custom_call.1} parent=31 // pred_fallthru
          _
      $region32: #{tpu_custom_call.1} parent=5 // pred_fallthru
        _
      %p6134 = scmp.le.s32.totalorder 2, %s18
      // Predicated region
      $region53: #{tpu_custom_call.1} parent=5 // pred_check
        %p6135 = pneg %p6134
      $region54: #{tpu_custom_call.1} parent=5 // pred_check_branch
        %6137 = sbr.rel (%p6135) target = $region56
      $region55: #{tpu_custom_call.1} parent=5 // pred_region
        %s6138 = ssub.s32 %s18, 2
        // Predicated region
        $region57: #{tpu_custom_call.1} parent=55 // pred_check
          %p6139 = pneg %p161
        $region58: #{tpu_custom_call.1} parent=55 // pred_check_branch
          %6141 = sbr.rel (%p6139) target = $region60
        $region59: #{tpu_custom_call.1} parent=55 // pred_region
          %p6142 = scmp.lt.s32.totalorder %s33, 1
          %s6143 = scalar_select %p6142, %s33, 1
          %p6144 = scmp.lt.s32.totalorder %s34, 0
          %s6145 = scalar_select %p6144, %s34, 0
          %p6146 = scmp.lt.s32.totalorder %s35, 0
          %s6147 = scalar_select %p6146, %s35, 0
          %s6148 = smul.addr %s6145, 48
          %s6149 = sadd.s32 %s6147, %s6148
          %s6150 = smul.addr %s6143, 48
          %s6151 = sadd.s32 %s6149, %s6150
          %s6152 = smul.addr %s6151, 4
          %s6153 = scalar_lea.vmem %s3, %s6152
        $region60: #{tpu_custom_call.1} parent=55 // pred_fallthru
          _
        // Predicated region
        $region61: #{tpu_custom_call.1} parent=55 // pred_check
          %p6154 = pneg %p191
        $region62: #{tpu_custom_call.1} parent=55 // pred_check_branch
          %6156 = sbr.rel (%p6154) target = $region64
        $region63: #{tpu_custom_call.1} parent=55 // pred_region
          %s6157 = sand.u32 %s176, 1
          %s6158 = scalar_lea.sflag [#allocation4], %s6157
          %s6159 = sand.u32 %s176, 1
          %s6160 = scalar_lea.vmem [#allocation3], %s6159
          %6161 = dma.done %s6158, 16
        $region64: #{tpu_custom_call.1} parent=55 // pred_fallthru
          _
        // Predicated region
        $region65: #{tpu_custom_call.1} parent=55 // pred_check
          %p6162 = pneg %p221
        $region66: #{tpu_custom_call.1} parent=55 // pred_check_branch
          %6164 = sbr.rel (%p6162) target = $region68
        $region67: #{tpu_custom_call.1} parent=55 // pred_region
          %s6165 = sand.u32 %s206, 1
          %s6166 = scalar_lea.sflag [#allocation6], %s6165
          %s6167 = sand.u32 %s206, 1
          %s6168 = scalar_lea.vmem [#allocation5], %s6167
          %6169 = dma.done %s6166, 16
        $region68: #{tpu_custom_call.1} parent=55 // pred_fallthru
          _
      $region56: #{tpu_custom_call.1} parent=5 // pred_fallthru
        _
    $region6: #{tpu_custom_call.1} parent=1 // loop_footer
      %s22 = sadd.s32 1, %s18
    $region7: #{tpu_custom_call.1} parent=1 // loop_footer_branch
      %17 = sbr.rel target = $region3
    $region8: #{tpu_custom_call.1} parent=1 // loop_exit
      _
    %6170 = vsyncpa [#allocation4], 1
    %s6171 = scalar_lea.sflag [#allocation4], 1
    %6172 = vsyncpa %s6171, 1
    %6173 = vsyncpa [#allocation6], 1
    %s6174 = scalar_lea.sflag [#allocation6], 1
    %6175 = vsyncpa %s6174, 1

</llo_original>
